<compile_context>
chip_gen: v5e
topology: v5e:2x2
jax: 0.10.0
libtpu: 0.0.40
codegen_flags: <defaults>
</compile_context>

<pallas_src>
import jax
import jax.numpy as jnp
import numpy as np
from jax.experimental import pallas as pl
from jax.experimental.pallas import tpu as pltpu

# ---- model config (TransformerBlock(dim=32, num_heads=4, ffn_dim=64)) ----
DIM = 32
NUM_HEADS = 4
NUM_KV_HEADS = 2               # GroupedQueryAttention default
HEAD_DIM = 64                  # GroupedQueryAttention default
FFN_DIM = 64
EPS = 1e-6
SCALE = HEAD_DIM ** -0.5       # 0.125, exact power of two
B, L = 2, 8

Q_WIDTH = NUM_HEADS * HEAD_DIM          # 256
KV_WIDTH = NUM_KV_HEADS * HEAD_DIM      # 128
GROUP = NUM_HEADS // NUM_KV_HEADS       # 2
M = B * L                               # 16 rows after folding batch into M

# fused QKV(+rotated) column layout: [ q | q_rot | k | k_rot | v ]  (all 128-aligned)
QR_OFF = Q_WIDTH                        # 256
K_OFF = 2 * Q_WIDTH                     # 512
KR_OFF = K_OFF + KV_WIDTH               # 640
V_OFF = KR_OFF + KV_WIDTH               # 768
QKV_WIDTH = V_OFF + KV_WIDTH            # 896

MXU_PRECISION = jax.lax.Precision.HIGHEST   # explicit fp32-contract MXU passes


# ----------------------------- Pallas kernel -----------------------------
def transformer_block_kernel(x_ref, cos_ref, sin_ref, bias_ref,
                             wqkv_ref, wo_ref, w12_ref, w3_ref,
                             o_ref, attn_cols_ref):
    x = x_ref[...]                                              # (M, DIM) f32

    # ---------- RMSNorm 1 (rsqrt -> EUP; g1 folded into wqkv rows) ----------
    inv1 = jax.lax.rsqrt(jnp.mean(x * x, axis=-1, keepdims=True) + EPS)
    h1 = x * inv1

    # ---------- fused QKV + rotate-half projection: one (DIM, 896) MXU push ----------
    qkv = jnp.dot(h1, wqkv_ref[...], precision=MXU_PRECISION,
                  preferred_element_type=jnp.float32)           # (M, 896)

    # ---------- RoPE: two elementwise FMAs (signed half-swap already in weights) ----------
    cos_q = cos_ref[...]                                        # (M, 256)
    sin_q = sin_ref[...]
    cos_k = cos_q[:, :KV_WIDTH]                                 # (M, 128), 128-aligned slice
    sin_k = sin_q[:, :KV_WIDTH]
    q = qkv[:, 0:Q_WIDTH] * cos_q + qkv[:, QR_OFF:K_OFF] * sin_q        # (M, 256), SCALE folded in
    k = qkv[:, K_OFF:KR_OFF] * cos_k + qkv[:, KR_OFF:V_OFF] * sin_k     # (M, 128)
    v = qkv[:, V_OFF:QKV_WIDTH]                                         # (M, 128)

    # ---------- attention: all batches in one (M, M) score matrix ----------
    bias = bias_ref[...]                                        # (M, M) block-diagonal 0 / -1e30
    for g in range(NUM_KV_HEADS):                               # GQA: kv head g serves GROUP q heads
        kh = k[:, g * HEAD_DIM:(g + 1) * HEAD_DIM]              # (M, 64)
        vh = v[:, g * HEAD_DIM:(g + 1) * HEAD_DIM]              # (M, 64)
        for h in range(g * GROUP, (g + 1) * GROUP):
            qh = q[:, h * HEAD_DIM:(h + 1) * HEAD_DIM]          # (M, 64)
            s = jnp.dot(qh, kh.T, precision=MXU_PRECISION,
                        preferred_element_type=jnp.float32) + bias
            s = s - jnp.max(s, axis=-1, keepdims=True)
            e = jnp.exp(s)
            p = e / jnp.sum(e, axis=-1, keepdims=True)          # exact reciprocal (review)
            # stash this head's (M, 64) output in its column slice of the scratch
            attn_cols_ref[:, h * HEAD_DIM:(h + 1) * HEAD_DIM] = jnp.dot(
                p, vh, precision=MXU_PRECISION, preferred_element_type=jnp.float32)

    # single fused (M, 256) @ (256, DIM) output projection (replaces 4 pushes + 3 adds)
    attn_out = jnp.dot(attn_cols_ref[...], wo_ref[...], precision=MXU_PRECISION,
                       preferred_element_type=jnp.float32)      # (M, DIM)
    xr = x + attn_out                                           # residual 1

    # ---------- RMSNorm 2 + fused SwiGLU FFN (g2 folded into w12 rows) ----------
    inv2 = jax.lax.rsqrt(jnp.mean(xr * xr, axis=-1, keepdims=True) + EPS)
    h2 = xr * inv2
    ab = jnp.dot(h2, w12_ref[...], precision=MXU_PRECISION,
                 preferred_element_type=jnp.float32)            # (M, 2F)
    a = ab[:, :FFN_DIM]
    b = ab[:, FFN_DIM:]
    ffn = jnp.dot(a * jax.nn.sigmoid(a) * b, w3_ref[...], precision=MXU_PRECISION,
                  preferred_element_type=jnp.float32)           # (M, DIM)

    o_ref[...] = xr + ffn                                       # residual 2


# ----------------------------- wrapper -----------------------------
def transformer_block(x, params):
    bsz, seq, dim = x.shape
    assert (bsz, seq, dim) == (B, L, DIM)
    x2 = x.reshape(bsz * seq, dim)      # fold batch into the matmul M dimension
    out = pl.pallas_call(
        transformer_block_kernel,
        out_shape=jax.ShapeDtypeStruct((bsz * seq, dim), jnp.float32),
        # single grid-less invocation: the whole problem is one (B*L, DIM) tile.
        # Resident inputs ~200 KB f32 + 16 KB scratch: far under the 16 MiB limit
        # set below and under v7x's 64 MiB physical / 32 MiB scoped default.
        scratch_shapes=[pltpu.VMEM((M, Q_WIDTH), jnp.float32)],
        compiler_params=pltpu.CompilerParams(vmem_limit_bytes=16 * 1024 * 1024),
    )(x2, params["cos_q"], params["sin_q"], params["bias"],
      params["wqkv"], params["wo"], params["w12"], params["w3"])
    return out.reshape(bsz, seq, dim)


# ----------------------- parameter construction -----------------------
def make_rotary_tables(seq_len, head_dim):
    inv_freq = 1.0 / (10000.0 ** (jnp.arange(0, head_dim, 2, dtype=jnp.float32) / head_dim))
    t = jnp.arange(seq_len, dtype=jnp.float32)
    freqs = jnp.einsum("i,j->ij", t, inv_freq)          # (L, hd/2)
    emb = jnp.concatenate([freqs, freqs], axis=-1)      # (L, hd)
    return jnp.cos(emb), jnp.sin(emb)


def fold_rotate_half(w, head_dim):
    """Return w' with w' = w @ R (R = per-head rotate_half signed permutation).

    Exact: built by column indexing + sign flip (no matmul, no rounding).
    (x @ w') == rotate_half(x @ w) for any x.
    """
    half = head_dim // 2
    width = w.shape[1]
    j = np.arange(width)
    i = j % head_dim
    src = np.where(i < half, j + half, j - half)                       # column gather
    sign = np.where(i < half, -1.0, 1.0).astype(np.float32)            # sign per output column
    return w[:, src] * sign[None, :]


def init_params(key):
    ks = jax.random.split(key, 9)
    s = 0.05
    cos, sin = make_rotary_tables(L, HEAD_DIM)
    p = {
        # non-trivial RMSNorm gains so the wrapper-side g1/g2 fold is exercised
        "g1": 1.0 + 0.1 * jax.random.normal(ks[7], (DIM,), jnp.float32),
        "g2": 1.0 + 0.1 * jax.random.normal(ks[8], (DIM,), jnp.float32),
        "wq": s * jax.random.normal(ks[0], (DIM, Q_WIDTH), jnp.float32),
        "wk": s * jax.random.normal(ks[1], (DIM, KV_WIDTH), jnp.float32),
        "wv": s * jax.random.normal(ks[2], (DIM, KV_WIDTH), jnp.float32),
        "wo": s * jax.random.normal(ks[3], (Q_WIDTH, DIM), jnp.float32),
        "w1": s * jax.random.normal(ks[4], (DIM, FFN_DIM), jnp.float32),
        "w2": s * jax.random.normal(ks[5], (DIM, FFN_DIM), jnp.float32),
        "w3": s * jax.random.normal(ks[6], (FFN_DIM, DIM), jnp.float32),
        "cos": cos,
        "sin": sin,
    }

    # ---- kernel-side fused / pre-folded parameters (built once, wrapper-side) ----
    g1c = p["g1"][:, None]                               # row scaling for (DIM, out) weights
    g2c = p["g2"][:, None]
    wq_s = (p["wq"] * g1c) * SCALE                       # SCALE (2^-3, exact) + g1 folded
    wk_s = p["wk"] * g1c
    wv_s = p["wv"] * g1c
    wq_rot = fold_rotate_half(wq_s, HEAD_DIM)            # = wq_s @ R_q  (exact)
    wk_rot = fold_rotate_half(wk_s, HEAD_DIM)            # = wk_s @ R_k  (exact)
    # fused QKV(+rotated) weight: one (DIM, 896) matrix, all column groups 128-aligned
    p["wqkv"] = jnp.concatenate([wq_s, wq_rot, wk_s, wk_rot, wv_s], axis=1)
    # fused SwiGLU input weight with g2 folded into rows
    p["w12"] = jnp.concatenate([p["w1"] * g2c, p["w2"] * g2c], axis=1)   # (DIM, 128)
    # rotary tables tiled to the full q slab width and over the flattened batch rows
    p["cos_q"] = jnp.tile(cos, (B, NUM_HEADS))                           # (B*L, 256)
    p["sin_q"] = jnp.tile(sin, (B, NUM_HEADS))                           # (B*L, 256)
    # precomputed block-diagonal attention bias (batch b attends only within batch b)
    rows = np.arange(M) // L
    p["bias"] = jnp.asarray(
        np.where(rows[:, None] == rows[None, :], 0.0, -1e30).astype(np.float32))
    return p


# ---------------- pure-JAX reference (mirrors the PyTorch fp32 math) ----------------
def reference_forward(x, params):
    cos = params["cos"][None, :, None, :]   # (1, L, 1, hd)
    sin = params["sin"][None, :, None, :]

    def rmsnorm(v, g):
        rms = jnp.sqrt(jnp.mean(v * v, axis=-1, keepdims=True) + EPS)
        return (v / rms) * g

    def rot_half(v):
        h = v.shape[-1] // 2
        return jnp.concatenate([-v[..., h:], v[..., :h]], axis=-1)

    # true fp32 matmuls, same contract precision as the kernel's explicit HIGHEST
    with jax.default_matmul_precision("float32"):
        h1 = rmsnorm(x, params["g1"])
        q = (h1 @ params["wq"]).reshape(B, L, NUM_HEADS, HEAD_DIM)
        k = (h1 @ params["wk"]).reshape(B, L, NUM_KV_HEADS, HEAD_DIM)
        v = (h1 @ params["wv"]).reshape(B, L, NUM_KV_HEADS, HEAD_DIM)
        q = q * cos + rot_half(q) * sin
        k = k * cos + rot_half(k) * sin
        k = jnp.repeat(k, GROUP, axis=2)
        v = jnp.repeat(v, GROUP, axis=2)
        attn = jnp.einsum("blhd,bmhd->bhlm", q, k) * SCALE
        attn = jax.nn.softmax(attn, axis=-1)
        out = jnp.einsum("bhlm,bmhd->blhd", attn, v).reshape(B, L, Q_WIDTH)
        out = out @ params["wo"]
        x = x + out
        h2 = rmsnorm(x, params["g2"])
        swish = jax.nn.silu(h2 @ params["w1"])
        ffn = (swish * (h2 @ params["w2"])) @ params["w3"]
        return x + ffn


if __name__ == "__main__":
    key = jax.random.PRNGKey(0)
    kp, kx = jax.random.split(key)
    params = init_params(kp)
    x = jax.random.normal(kx, (B, L, DIM), jnp.float32)

    out = jax.block_until_ready(transformer_block(x, params))

    ref = reference_forward(x, params)
    assert out.shape == (B, L, DIM)
    # tight tolerance restored (exact softmax reciprocal, explicit fp32 MXU precision)
    assert jnp.allclose(out, ref, rtol=1e-4, atol=1e-4), "Pallas output mismatch vs reference"

    print("KERNEL_OK")
</pallas_src>

<mosaic_0001>
module attributes {stable_mosaic.version = 11 : i64} {
  func.func @transformer_block_kernel(%arg0: memref<16x32xf32, #tpu.memory_space<vmem>>, %arg1: memref<16x256xf32, #tpu.memory_space<vmem>>, %arg2: memref<16x256xf32, #tpu.memory_space<vmem>>, %arg3: memref<16x16xf32, #tpu.memory_space<vmem>>, %arg4: memref<32x896xf32, #tpu.memory_space<vmem>>, %arg5: memref<256x32xf32, #tpu.memory_space<vmem>>, %arg6: memref<32x128xf32, #tpu.memory_space<vmem>>, %arg7: memref<64x32xf32, #tpu.memory_space<vmem>>, %arg8: memref<16x32xf32, #tpu.memory_space<vmem>>, %arg9: memref<16x256xf32, #tpu.memory_space<vmem>>) attributes {dimension_semantics = [], scalar_prefetch = 0 : i64, scratch_operands = 1 : i64, tpu.core_type = #tpu.core_type<tc>} {
    %c0 = arith.constant 0 : index
    %c0_0 = arith.constant 0 : index
    %0 = vector.load %arg0[%c0, %c0_0] : memref<16x32xf32, #tpu.memory_space<vmem>>, vector<16x32xf32>
    %1 = arith.mulf %0, %0 : vector<16x32xf32>
    %cst = arith.constant dense<0.000000e+00> : vector<16xf32>
    %2 = vector.multi_reduction <add>, %1, %cst [1] : vector<16x32xf32> to vector<16xf32>
    %3 = vector.shape_cast %2 : vector<16xf32> to vector<16x1xf32>
    %cst_1 = arith.constant 3.200000e+01 : f32
    %4 = vector.broadcast %cst_1 : f32 to vector<16x1xf32>
    %5 = arith.divf %3, %4 : vector<16x1xf32>
    %cst_2 = arith.constant 9.99999997E-7 : f32
    %6 = vector.broadcast %cst_2 : f32 to vector<16x1xf32>
    %7 = arith.addf %5, %6 : vector<16x1xf32>
    %8 = math.rsqrt %7 : vector<16x1xf32>
    %9 = vector.broadcast %8 : vector<16x1xf32> to vector<16x32xf32>
    %10 = arith.mulf %0, %9 : vector<16x32xf32>
    %c0_3 = arith.constant 0 : index
    %c0_4 = arith.constant 0 : index
    %11 = vector.load %arg4[%c0_3, %c0_4] : memref<32x896xf32, #tpu.memory_space<vmem>>, vector<32x896xf32>
    %cst_5 = arith.constant dense<0.000000e+00> : vector<16x896xf32>
    %12 = tpu.matmul %10, %11, %cst_5 {dimension_numbers = #tpu.dot_dimension_numbers<[1], [0], [0], [1], [0, 0, 1, 1], [], []>, precision = #tpu.contract_precision<fp32>} : vector<16x32xf32>, vector<32x896xf32>, vector<16x896xf32> -> vector<16x896xf32>
    %c0_6 = arith.constant 0 : index
    %c0_7 = arith.constant 0 : index
    %13 = vector.load %arg1[%c0_6, %c0_7] : memref<16x256xf32, #tpu.memory_space<vmem>>, vector<16x256xf32>
    %c0_8 = arith.constant 0 : index
    %c0_9 = arith.constant 0 : index
    %14 = vector.load %arg2[%c0_8, %c0_9] : memref<16x256xf32, #tpu.memory_space<vmem>>, vector<16x256xf32>
    %15 = vector.extract_strided_slice %13 {offsets = [0, 0], sizes = [16, 128], strides = [1, 1]} : vector<16x256xf32> to vector<16x128xf32>
    %16 = vector.extract_strided_slice %14 {offsets = [0, 0], sizes = [16, 128], strides = [1, 1]} : vector<16x256xf32> to vector<16x128xf32>
    %17 = vector.extract_strided_slice %12 {offsets = [0, 0], sizes = [16, 256], strides = [1, 1]} : vector<16x896xf32> to vector<16x256xf32>
    %18 = arith.mulf %17, %13 : vector<16x256xf32>
    %19 = vector.extract_strided_slice %12 {offsets = [0, 256], sizes = [16, 256], strides = [1, 1]} : vector<16x896xf32> to vector<16x256xf32>
    %20 = arith.mulf %19, %14 : vector<16x256xf32>
    %21 = arith.addf %18, %20 : vector<16x256xf32>
    %22 = vector.extract_strided_slice %12 {offsets = [0, 512], sizes = [16, 128], strides = [1, 1]} : vector<16x896xf32> to vector<16x128xf32>
    %23 = arith.mulf %22, %15 : vector<16x128xf32>
    %24 = vector.extract_strided_slice %12 {offsets = [0, 640], sizes = [16, 128], strides = [1, 1]} : vector<16x896xf32> to vector<16x128xf32>
    %25 = arith.mulf %24, %16 : vector<16x128xf32>
    %26 = arith.addf %23, %25 : vector<16x128xf32>
    %27 = vector.extract_strided_slice %12 {offsets = [0, 768], sizes = [16, 128], strides = [1, 1]} : vector<16x896xf32> to vector<16x128xf32>
    %c0_10 = arith.constant 0 : index
    %c0_11 = arith.constant 0 : index
    %28 = vector.load %arg3[%c0_10, %c0_11] : memref<16x16xf32, #tpu.memory_space<vmem>>, vector<16x16xf32>
    %29 = vector.extract_strided_slice %26 {offsets = [0, 0], sizes = [16, 64], strides = [1, 1]} : vector<16x128xf32> to vector<16x64xf32>
    %30 = vector.extract_strided_slice %27 {offsets = [0, 0], sizes = [16, 64], strides = [1, 1]} : vector<16x128xf32> to vector<16x64xf32>
    %31 = vector.extract_strided_slice %21 {offsets = [0, 0], sizes = [16, 64], strides = [1, 1]} : vector<16x256xf32> to vector<16x64xf32>
    %32 = tpu.transpose %29, [1, 0] : vector<16x64xf32> -> vector<64x16xf32>
    %cst_12 = arith.constant dense<0.000000e+00> : vector<16x16xf32>
    %33 = tpu.matmul %31, %32, %cst_12 {dimension_numbers = #tpu.dot_dimension_numbers<[1], [0], [0], [1], [0, 0, 1, 1], [], []>, precision = #tpu.contract_precision<fp32>} : vector<16x64xf32>, vector<64x16xf32>, vector<16x16xf32> -> vector<16x16xf32>
    %34 = arith.addf %33, %28 : vector<16x16xf32>
    %cst_13 = arith.constant dense<0xFF800000> : vector<16xf32>
    %35 = vector.multi_reduction <maximumf>, %34, %cst_13 [1] : vector<16x16xf32> to vector<16xf32>
    %36 = vector.shape_cast %35 : vector<16xf32> to vector<16x1xf32>
    %37 = vector.broadcast %36 : vector<16x1xf32> to vector<16x16xf32>
    %38 = arith.subf %34, %37 : vector<16x16xf32>
    %39 = math.exp %38 : vector<16x16xf32>
    %cst_14 = arith.constant dense<0.000000e+00> : vector<16xf32>
    %40 = vector.multi_reduction <add>, %39, %cst_14 [1] : vector<16x16xf32> to vector<16xf32>
    %41 = vector.shape_cast %40 : vector<16xf32> to vector<16x1xf32>
    %42 = vector.broadcast %41 : vector<16x1xf32> to vector<16x16xf32>
    %43 = arith.divf %39, %42 : vector<16x16xf32>
    %cst_15 = arith.constant dense<0.000000e+00> : vector<16x64xf32>
    %44 = tpu.matmul %43, %30, %cst_15 {dimension_numbers = #tpu.dot_dimension_numbers<[1], [0], [0], [1], [0, 0, 1, 1], [], []>, precision = #tpu.contract_precision<fp32>} : vector<16x16xf32>, vector<16x64xf32>, vector<16x64xf32> -> vector<16x64xf32>
    %c0_16 = arith.constant 0 : index
    %c0_17 = arith.constant 0 : index
    %45 = vector.load %arg9[%c0_16, %c0_17] : memref<16x256xf32, #tpu.memory_space<vmem>>, vector<16x64xf32>
    tpu.vector_store %arg9[%c0_16, %c0_17], %44 {strides = array<i32>} : memref<16x256xf32, #tpu.memory_space<vmem>>, vector<16x64xf32>,
    %46 = vector.extract_strided_slice %21 {offsets = [0, 64], sizes = [16, 64], strides = [1, 1]} : vector<16x256xf32> to vector<16x64xf32>
    %47 = tpu.transpose %29, [1, 0] : vector<16x64xf32> -> vector<64x16xf32>
    %cst_18 = arith.constant dense<0.000000e+00> : vector<16x16xf32>
    %48 = tpu.matmul %46, %47, %cst_18 {dimension_numbers = #tpu.dot_dimension_numbers<[1], [0], [0], [1], [0, 0, 1, 1], [], []>, precision = #tpu.contract_precision<fp32>} : vector<16x64xf32>, vector<64x16xf32>, vector<16x16xf32> -> vector<16x16xf32>
    %49 = arith.addf %48, %28 : vector<16x16xf32>
    %cst_19 = arith.constant dense<0xFF800000> : vector<16xf32>
    %50 = vector.multi_reduction <maximumf>, %49, %cst_19 [1] : vector<16x16xf32> to vector<16xf32>
    %51 = vector.shape_cast %50 : vector<16xf32> to vector<16x1xf32>
    %52 = vector.broadcast %51 : vector<16x1xf32> to vector<16x16xf32>
    %53 = arith.subf %49, %52 : vector<16x16xf32>
    %54 = math.exp %53 : vector<16x16xf32>
    %cst_20 = arith.constant dense<0.000000e+00> : vector<16xf32>
    %55 = vector.multi_reduction <add>, %54, %cst_20 [1] : vector<16x16xf32> to vector<16xf32>
    %56 = vector.shape_cast %55 : vector<16xf32> to vector<16x1xf32>
    %57 = vector.broadcast %56 : vector<16x1xf32> to vector<16x16xf32>
    %58 = arith.divf %54, %57 : vector<16x16xf32>
    %cst_21 = arith.constant dense<0.000000e+00> : vector<16x64xf32>
    %59 = tpu.matmul %58, %30, %cst_21 {dimension_numbers = #tpu.dot_dimension_numbers<[1], [0], [0], [1], [0, 0, 1, 1], [], []>, precision = #tpu.contract_precision<fp32>} : vector<16x16xf32>, vector<16x64xf32>, vector<16x64xf32> -> vector<16x64xf32>
    %c0_22 = arith.constant 0 : index
    %c64 = arith.constant 64 : index
    %60 = vector.load %arg9[%c0_22, %c64] : memref<16x256xf32, #tpu.memory_space<vmem>>, vector<16x64xf32>
    tpu.vector_store %arg9[%c0_22, %c64], %59 {strides = array<i32>} : memref<16x256xf32, #tpu.memory_space<vmem>>, vector<16x64xf32>,
    %61 = vector.extract_strided_slice %26 {offsets = [0, 64], sizes = [16, 64], strides = [1, 1]} : vector<16x128xf32> to vector<16x64xf32>
    %62 = vector.extract_strided_slice %27 {offsets = [0, 64], sizes = [16, 64], strides = [1, 1]} : vector<16x128xf32> to vector<16x64xf32>
    %63 = vector.extract_strided_slice %21 {offsets = [0, 128], sizes = [16, 64], strides = [1, 1]} : vector<16x256xf32> to vector<16x64xf32>
    %64 = tpu.transpose %61, [1, 0] : vector<16x64xf32> -> vector<64x16xf32>
    %cst_23 = arith.constant dense<0.000000e+00> : vector<16x16xf32>
    %65 = tpu.matmul %63, %64, %cst_23 {dimension_numbers = #tpu.dot_dimension_numbers<[1], [0], [0], [1], [0, 0, 1, 1], [], []>, precision = #tpu.contract_precision<fp32>} : vector<16x64xf32>, vector<64x16xf32>, vector<16x16xf32> -> vector<16x16xf32>
    %66 = arith.addf %65, %28 : vector<16x16xf32>
    %cst_24 = arith.constant dense<0xFF800000> : vector<16xf32>
    %67 = vector.multi_reduction <maximumf>, %66, %cst_24 [1] : vector<16x16xf32> to vector<16xf32>
    %68 = vector.shape_cast %67 : vector<16xf32> to vector<16x1xf32>
    %69 = vector.broadcast %68 : vector<16x1xf32> to vector<16x16xf32>
    %70 = arith.subf %66, %69 : vector<16x16xf32>
    %71 = math.exp %70 : vector<16x16xf32>
    %cst_25 = arith.constant dense<0.000000e+00> : vector<16xf32>
    %72 = vector.multi_reduction <add>, %71, %cst_25 [1] : vector<16x16xf32> to vector<16xf32>
    %73 = vector.shape_cast %72 : vector<16xf32> to vector<16x1xf32>
    %74 = vector.broadcast %73 : vector<16x1xf32> to vector<16x16xf32>
    %75 = arith.divf %71, %74 : vector<16x16xf32>
    %cst_26 = arith.constant dense<0.000000e+00> : vector<16x64xf32>
    %76 = tpu.matmul %75, %62, %cst_26 {dimension_numbers = #tpu.dot_dimension_numbers<[1], [0], [0], [1], [0, 0, 1, 1], [], []>, precision = #tpu.contract_precision<fp32>} : vector<16x16xf32>, vector<16x64xf32>, vector<16x64xf32> -> vector<16x64xf32>
    %c0_27 = arith.constant 0 : index
    %c128 = arith.constant 128 : index
    %77 = vector.load %arg9[%c0_27, %c128] : memref<16x256xf32, #tpu.memory_space<vmem>>, vector<16x64xf32>
    tpu.vector_store %arg9[%c0_27, %c128], %76 {strides = array<i32>} : memref<16x256xf32, #tpu.memory_space<vmem>>, vector<16x64xf32>,
    %78 = vector.extract_strided_slice %21 {offsets = [0, 192], sizes = [16, 64], strides = [1, 1]} : vector<16x256xf32> to vector<16x64xf32>
    %79 = tpu.transpose %61, [1, 0] : vector<16x64xf32> -> vector<64x16xf32>
    %cst_28 = arith.constant dense<0.000000e+00> : vector<16x16xf32>
    %80 = tpu.matmul %78, %79, %cst_28 {dimension_numbers = #tpu.dot_dimension_numbers<[1], [0], [0], [1], [0, 0, 1, 1], [], []>, precision = #tpu.contract_precision<fp32>} : vector<16x64xf32>, vector<64x16xf32>, vector<16x16xf32> -> vector<16x16xf32>
    %81 = arith.addf %80, %28 : vector<16x16xf32>
    %cst_29 = arith.constant dense<0xFF800000> : vector<16xf32>
    %82 = vector.multi_reduction <maximumf>, %81, %cst_29 [1] : vector<16x16xf32> to vector<16xf32>
    %83 = vector.shape_cast %82 : vector<16xf32> to vector<16x1xf32>
    %84 = vector.broadcast %83 : vector<16x1xf32> to vector<16x16xf32>
    %85 = arith.subf %81, %84 : vector<16x16xf32>
    %86 = math.exp %85 : vector<16x16xf32>
    %cst_30 = arith.constant dense<0.000000e+00> : vector<16xf32>
    %87 = vector.multi_reduction <add>, %86, %cst_30 [1] : vector<16x16xf32> to vector<16xf32>
    %88 = vector.shape_cast %87 : vector<16xf32> to vector<16x1xf32>
    %89 = vector.broadcast %88 : vector<16x1xf32> to vector<16x16xf32>
    %90 = arith.divf %86, %89 : vector<16x16xf32>
    %cst_31 = arith.constant dense<0.000000e+00> : vector<16x64xf32>
    %91 = tpu.matmul %90, %62, %cst_31 {dimension_numbers = #tpu.dot_dimension_numbers<[1], [0], [0], [1], [0, 0, 1, 1], [], []>, precision = #tpu.contract_precision<fp32>} : vector<16x16xf32>, vector<16x64xf32>, vector<16x64xf32> -> vector<16x64xf32>
    %c0_32 = arith.constant 0 : index
    %c192 = arith.constant 192 : index
    %92 = vector.load %arg9[%c0_32, %c192] : memref<16x256xf32, #tpu.memory_space<vmem>>, vector<16x64xf32>
    tpu.vector_store %arg9[%c0_32, %c192], %91 {strides = array<i32>} : memref<16x256xf32, #tpu.memory_space<vmem>>, vector<16x64xf32>,
    %c0_33 = arith.constant 0 : index
    %c0_34 = arith.constant 0 : index
    %93 = vector.load %arg9[%c0_33, %c0_34] : memref<16x256xf32, #tpu.memory_space<vmem>>, vector<16x256xf32>
    %c0_35 = arith.constant 0 : index
    %c0_36 = arith.constant 0 : index
    %94 = vector.load %arg5[%c0_35, %c0_36] : memref<256x32xf32, #tpu.memory_space<vmem>>, vector<256x32xf32>
    %cst_37 = arith.constant dense<0.000000e+00> : vector<16x32xf32>
    %95 = tpu.matmul %93, %94, %cst_37 {dimension_numbers = #tpu.dot_dimension_numbers<[1], [0], [0], [1], [0, 0, 1, 1], [], []>, precision = #tpu.contract_precision<fp32>} : vector<16x256xf32>, vector<256x32xf32>, vector<16x32xf32> -> vector<16x32xf32>
    %96 = arith.addf %0, %95 : vector<16x32xf32>
    %97 = arith.mulf %96, %96 : vector<16x32xf32>
    %cst_38 = arith.constant dense<0.000000e+00> : vector<16xf32>
    %98 = vector.multi_reduction <add>, %97, %cst_38 [1] : vector<16x32xf32> to vector<16xf32>
    %99 = vector.shape_cast %98 : vector<16xf32> to vector<16x1xf32>
    %cst_39 = arith.constant 3.200000e+01 : f32
    %100 = vector.broadcast %cst_39 : f32 to vector<16x1xf32>
    %101 = arith.divf %99, %100 : vector<16x1xf32>
    %cst_40 = arith.constant 9.99999997E-7 : f32
    %102 = vector.broadcast %cst_40 : f32 to vector<16x1xf32>
    %103 = arith.addf %101, %102 : vector<16x1xf32>
    %104 = math.rsqrt %103 : vector<16x1xf32>
    %105 = vector.broadcast %104 : vector<16x1xf32> to vector<16x32xf32>
    %106 = arith.mulf %96, %105 : vector<16x32xf32>
    %c0_41 = arith.constant 0 : index
    %c0_42 = arith.constant 0 : index
    %107 = vector.load %arg6[%c0_41, %c0_42] : memref<32x128xf32, #tpu.memory_space<vmem>>, vector<32x128xf32>
    %cst_43 = arith.constant dense<0.000000e+00> : vector<16x128xf32>
    %108 = tpu.matmul %106, %107, %cst_43 {dimension_numbers = #tpu.dot_dimension_numbers<[1], [0], [0], [1], [0, 0, 1, 1], [], []>, precision = #tpu.contract_precision<fp32>} : vector<16x32xf32>, vector<32x128xf32>, vector<16x128xf32> -> vector<16x128xf32>
    %109 = vector.extract_strided_slice %108 {offsets = [0, 0], sizes = [16, 64], strides = [1, 1]} : vector<16x128xf32> to vector<16x64xf32>
    %110 = vector.extract_strided_slice %108 {offsets = [0, 64], sizes = [16, 64], strides = [1, 1]} : vector<16x128xf32> to vector<16x64xf32>
    %111 = arith.negf %109 : vector<16x64xf32>
    %112 = math.exp %111 : vector<16x64xf32>
    %cst_44 = arith.constant 1.000000e+00 : f32
    %113 = vector.broadcast %cst_44 : f32 to vector<16x64xf32>
    %114 = arith.addf %113, %112 : vector<16x64xf32>
    %115 = arith.divf %113, %114 : vector<16x64xf32>
    %116 = arith.mulf %109, %115 : vector<16x64xf32>
    %117 = arith.mulf %116, %110 : vector<16x64xf32>
    %c0_45 = arith.constant 0 : index
    %c0_46 = arith.constant 0 : index
    %118 = vector.load %arg7[%c0_45, %c0_46] : memref<64x32xf32, #tpu.memory_space<vmem>>, vector<64x32xf32>
    %cst_47 = arith.constant dense<0.000000e+00> : vector<16x32xf32>
    %119 = tpu.matmul %117, %118, %cst_47 {dimension_numbers = #tpu.dot_dimension_numbers<[1], [0], [0], [1], [0, 0, 1, 1], [], []>, precision = #tpu.contract_precision<fp32>} : vector<16x64xf32>, vector<64x32xf32>, vector<16x32xf32> -> vector<16x32xf32>
    %120 = arith.addf %96, %119 : vector<16x32xf32>
    %c0_48 = arith.constant 0 : index
    %c0_49 = arith.constant 0 : index
    %121 = vector.load %arg8[%c0_48, %c0_49] : memref<16x32xf32, #tpu.memory_space<vmem>>, vector<16x32xf32>
    tpu.vector_store %arg8[%c0_48, %c0_49], %120 {strides = array<i32>} : memref<16x32xf32, #tpu.memory_space<vmem>>, vector<16x32xf32>,
    return
  }
}

</mosaic_0001>

<llo_original>
// kernel: tpu_custom_call.1
$region0: #{tpu_custom_call.1}
  #allocation0 [shape = 'u32[]', space=smem, size = 0x4, offset = 0x4, fixed_abs, tag = 'smem constant byte address 0x4 - core index']
  #allocation1 [shape = 'u32[72,128]{1,0:T(1,128)}', space=vmem, size = 0x9000, scoped, tag = 'internal scratch']
  #allocation2 [shape = 'f32[16,256]{1,0:T(8,128)}', space=vmem, size = 0x4000, scoped, tag = 'scratch operand']
  %s0 = inlined_call_operand.vmem [shape: f32[16,32], index: 0, kind: input, shape index: {}]
  %s1 = inlined_call_operand.vmem [shape: f32[16,256], index: 1, kind: input, shape index: {}]
  %s2 = inlined_call_operand.vmem [shape: f32[16,256], index: 2, kind: input, shape index: {}]
  %s3 = inlined_call_operand.vmem [shape: f32[16,16], index: 3, kind: input, shape index: {}]
  %s4 = inlined_call_operand.vmem [shape: f32[32,896], index: 4, kind: input, shape index: {}]
  %s5 = inlined_call_operand.vmem [shape: f32[256,32], index: 5, kind: input, shape index: {}]
  %s6 = inlined_call_operand.vmem [shape: f32[32,128], index: 6, kind: input, shape index: {}]
  %s7 = inlined_call_operand.vmem [shape: f32[64,32], index: 7, kind: input, shape index: {}]
  %s8 = inlined_call_operand.hbm [shape: f32[16,32], index: 8, kind: output, shape index: {}]
  %s9 = sld [smem:[#allocation0]]
  $region42: #{tpu_custom_call.1} parent=0
    _
  %s11 = ssub.s32 1, %s9
  %s12 = scalar_select 0, %s11, %s9
  $region1: #{tpu_custom_call.1} parent=0
    #allocation3 [shape = 'u8[8192]{0}', space=vmem, size = 0x2000, scoped, tag = 'output window, operand 0, single buffered']
    #allocation4 [shape = 's32[1]{0}', space=sflag, size = 0x4, scoped, tag = 'scoped memory for tpu_custom_call.1']
    %13 = vsyncpa [#allocation4], 0
    // Predicated region
    $region2: #{tpu_custom_call.1} parent=1 // pred_check
      _
    $region3: #{tpu_custom_call.1} parent=1 // pred_check_branch
      %15 = sbr.rel (0) target = $region5
    $region4: #{tpu_custom_call.1} parent=1 // pred_region
      _
    $region5: #{tpu_custom_call.1} parent=1 // pred_fallthru
      _
    // Predicated region
    $region6: #{tpu_custom_call.1} parent=1 // pred_check
      _
    $region7: #{tpu_custom_call.1} parent=1 // pred_check_branch
      %17 = sbr.rel (0) target = $region9
    $region8: #{tpu_custom_call.1} parent=1 // pred_region
      _
    $region9: #{tpu_custom_call.1} parent=1 // pred_fallthru
      _
    // Predicated region
    $region10: #{tpu_custom_call.1} parent=1 // pred_check
      _
    $region11: #{tpu_custom_call.1} parent=1 // pred_check_branch
      %19 = sbr.rel (0) target = $region13
    $region12: #{tpu_custom_call.1} parent=1 // pred_region
      _
    $region13: #{tpu_custom_call.1} parent=1 // pred_fallthru
      _
    // Predicated region
    $region14: #{tpu_custom_call.1} parent=1 // pred_check
      _
    $region15: #{tpu_custom_call.1} parent=1 // pred_check_branch
      %21 = sbr.rel (0) target = $region17
    $region16: #{tpu_custom_call.1} parent=1 // pred_region
      _
    $region17: #{tpu_custom_call.1} parent=1 // pred_fallthru
      _
    // Predicated region
    $region18: #{tpu_custom_call.1} parent=1 // pred_check
      _
    $region19: #{tpu_custom_call.1} parent=1 // pred_check_branch
      %23 = sbr.rel (0) target = $region21
    $region20: #{tpu_custom_call.1} parent=1 // pred_region
      _
    $region21: #{tpu_custom_call.1} parent=1 // pred_fallthru
      _
    // Predicated region
    $region22: #{tpu_custom_call.1} parent=1 // pred_check
      _
    $region23: #{tpu_custom_call.1} parent=1 // pred_check_branch
      %25 = sbr.rel (0) target = $region25
    $region24: #{tpu_custom_call.1} parent=1 // pred_region
      _
    $region25: #{tpu_custom_call.1} parent=1 // pred_fallthru
      _
    // Predicated region
    $region26: #{tpu_custom_call.1} parent=1 // pred_check
      _
    $region27: #{tpu_custom_call.1} parent=1 // pred_check_branch
      %27 = sbr.rel (0) target = $region29
    $region28: #{tpu_custom_call.1} parent=1 // pred_region
      _
    $region29: #{tpu_custom_call.1} parent=1 // pred_fallthru
      _
    // Predicated region
    $region30: #{tpu_custom_call.1} parent=1 // pred_check
      _
    $region31: #{tpu_custom_call.1} parent=1 // pred_check_branch
      %29 = sbr.rel (0) target = $region33
    $region32: #{tpu_custom_call.1} parent=1 // pred_region
      _
    $region33: #{tpu_custom_call.1} parent=1 // pred_fallthru
      _
    %v30 = vld [vmem:[%s0] sm:$0xff]
    %v31 = vld [vmem:[%s0 + $0x8] sm:$0xff]
    %v32 = vmul.f32 %v30, %v30
    %v33 = vmul.f32 %v31, %v31
    %vm34 = vcmask 261120
    %v35 = vsel %vm34, %v32, 0.0
    %36 = vadd.xlane.f32.xlu0 %v35
    %v37 = vpop.xlane.xlu0 %36
    %v38 = vsel %vm34, %v33, 0.0
    %39 = vadd.xlane.f32.xlu0 %v38
    %v40 = vpop.xlane.xlu0 %39
    %v41 = vrcp.pop 32.0
    %v42 = vmul.f32 32.0, %v41
    %v43 = vsub.f32 1.0, %v42
    %v44 = vmul.f32 %v41, %v43
    %v45 = vadd.f32 %v41, %v44
    %vm46 = vweird.f32 %v41
    %v47 = vsel %vm46, %v41, %v45
    %v48 = vmul.f32 %v37, %v47
    %v49 = vmul.f32 %v40, %v47
    %v50 = vadd.f32 %v48, 1e-06
    %v51 = vadd.f32 %v49, 1e-06
    %v52 = vrsqrt.pop %v50
    %v53 = vmul.f32 %v52, %v50
    %v54 = vmul.f32 %v53, %v52
    %v55 = vmul.f32 0.5, %v54
    %v56 = vsub.f32 1.5, %v55
    %v57 = vmul.f32 %v52, %v56
    %vm58 = vweird.f32 %v50
    %vm59 = vweird.f32 %v52
    %vm60 = vmor %vm58, %vm59
    %v61 = vsel %vm60, %v52, %v57
    %v62 = vrsqrt.pop %v51
    %v63 = vmul.f32 %v62, %v51
    %v64 = vmul.f32 %v63, %v62
    %v65 = vmul.f32 0.5, %v64
    %v66 = vsub.f32 1.5, %v65
    %v67 = vmul.f32 %v62, %v66
    %vm68 = vweird.f32 %v51
    %vm69 = vweird.f32 %v62
    %vm70 = vmor %vm68, %vm69
    %v71 = vsel %vm70, %v62, %v67
    %v72 = vmul.f32 %v30, %v61
    %v73 = vmul.f32 %v31, %v71
    %v74 = vld [vmem:[%s4] sm:$0xff]
    %v75 = vld [vmem:[%s4 + $0x8] sm:$0xff]
    %v76 = vld [vmem:[%s4 + $0x10] sm:$0xff]
    %v77 = vld [vmem:[%s4 + $0x18] sm:$0xff]
    %v78 = vld [vmem:[%s4 + $0x20] sm:$0xff]
    %v79 = vld [vmem:[%s4 + $0x28] sm:$0xff]
    %v80 = vld [vmem:[%s4 + $0x30] sm:$0xff]
    %v81 = vld [vmem:[%s4 + $0x38] sm:$0xff]
    %v82 = vld [vmem:[%s4 + $0x40] sm:$0xff]
    %v83 = vld [vmem:[%s4 + $0x48] sm:$0xff]
    %v84 = vld [vmem:[%s4 + $0x50] sm:$0xff]
    %v85 = vld [vmem:[%s4 + $0x58] sm:$0xff]
    %v86 = vld [vmem:[%s4 + $0x60] sm:$0xff]
    %v87 = vld [vmem:[%s4 + $0x68] sm:$0xff]
    %v88 = vld [vmem:[%s4 + $0x70] sm:$0xff]
    %v89 = vld [vmem:[%s4 + $0x78] sm:$0xff]
    %v90 = vld [vmem:[%s4 + $0x80] sm:$0xff]
    %v91 = vld [vmem:[%s4 + $0x88] sm:$0xff]
    %v92 = vld [vmem:[%s4 + $0x90] sm:$0xff]
    %v93 = vld [vmem:[%s4 + $0x98] sm:$0xff]
    %v94 = vld [vmem:[%s4 + $0xa0] sm:$0xff]
    %v95 = vld [vmem:[%s4 + $0xa8] sm:$0xff]
    %v96 = vld [vmem:[%s4 + $0xb0] sm:$0xff]
    %v97 = vld [vmem:[%s4 + $0xb8] sm:$0xff]
    %v98 = vld [vmem:[%s4 + $0xc0] sm:$0xff]
    %v99 = vld [vmem:[%s4 + $0xc8] sm:$0xff]
    %v100 = vld [vmem:[%s4 + $0xd0] sm:$0xff]
    %v101 = vld [vmem:[%s4 + $0xd8] sm:$0xff]
    %v103 = vsel %vm34, %v72, 0
    %v106 = vsel %vm34, %v73, 0
    %108 = vmatpush.msra.mxu0 0.0
    %109 = vmatpush.msra.mxu0 0.0
    %110 = vmatpush.msra.mxu0 0.0
    %111 = vmatpush.msra.mxu0 0.0
    %112 = vmatpush.msra.mxu0 0.0
    %113 = vmatpush.msra.mxu0 0.0
    %114 = vmatpush.msra.mxu0 0.0
    %115 = vmatpush.msra.mxu0 0.0
    %116 = vmatpush.msra.mxu0 0.0
    %117 = vmatpush.msra.mxu0 0.0
    %118 = vmatpush.msra.mxu0 0.0
    %119 = vmatpush.msra.mxu0 0.0
    %v120 = vand.u32 %v95, 4294901760
    %121 = vmatpush.msra.mxu0 %v120
    %v122 = vand.u32 %v88, 4294901760
    %123 = vmatpush.msra.mxu0 %v122
    %v124 = vand.u32 %v81, 4294901760
    %125 = vmatpush.msra.mxu0 %v124
    %v126 = vand.u32 %v74, 4294901760
    %127 = vmatpush.msra.mxu0 %v126
    %v128 = vand.u32 %v103, 4294901760
    %v129 = vsub.f32 %v103, %v128
    %v130 = vand.u32 %v129, 4294901760
    %v131 = vsub.f32 %v129, %v130
    %v132 = vand.u32 %v131, 4294901760
    %133 = vmatmul.f32.gmra.mxu0 %v132
    %v134 = vpop.f32.mrf.mxu0
    %v135 = vadd.f32 0.0, %v134
    %v136 = vand.u32 %v106, 4294901760
    %v137 = vsub.f32 %v106, %v136
    %v138 = vand.u32 %v137, 4294901760
    %v139 = vsub.f32 %v137, %v138
    %v140 = vand.u32 %v139, 4294901760
    %141 = vmatmul.f32.gmra.mxu0 %v140
    %v142 = vpop.f32.mrf.mxu0
    %v143 = vadd.f32 0.0, %v142
    %144 = vdwg.mxu0
    %145 = vmatpush.msra.mxu0 0.0
    %146 = vmatpush.msra.mxu0 0.0
    %147 = vmatpush.msra.mxu0 0.0
    %148 = vmatpush.msra.mxu0 0.0
    %149 = vmatpush.msra.mxu0 0.0
    %150 = vmatpush.msra.mxu0 0.0
    %151 = vmatpush.msra.mxu0 0.0
    %152 = vmatpush.msra.mxu0 0.0
    %153 = vmatpush.msra.mxu0 0.0
    %154 = vmatpush.msra.mxu0 0.0
    %155 = vmatpush.msra.mxu0 0.0
    %156 = vmatpush.msra.mxu0 0.0
    %v157 = vand.u32 %v95, 4294901760
    %v158 = vsub.f32 %v95, %v157
    %v159 = vand.u32 %v158, 4294901760
    %v160 = vsub.f32 %v158, %v159
    %v161 = vand.u32 %v160, 4294901760
    %162 = vmatpush.msra.mxu0 %v161
    %v163 = vand.u32 %v88, 4294901760
    %v164 = vsub.f32 %v88, %v163
    %v165 = vand.u32 %v164, 4294901760
    %v166 = vsub.f32 %v164, %v165
    %v167 = vand.u32 %v166, 4294901760
    %168 = vmatpush.msra.mxu0 %v167
    %v169 = vand.u32 %v81, 4294901760
    %v170 = vsub.f32 %v81, %v169
    %v171 = vand.u32 %v170, 4294901760
    %v172 = vsub.f32 %v170, %v171
    %v173 = vand.u32 %v172, 4294901760
    %174 = vmatpush.msra.mxu0 %v173
    %v175 = vand.u32 %v74, 4294901760
    %v176 = vsub.f32 %v74, %v175
    %v177 = vand.u32 %v176, 4294901760
    %v178 = vsub.f32 %v176, %v177
    %v179 = vand.u32 %v178, 4294901760
    %180 = vmatpush.msra.mxu0 %v179
    %v181 = vand.u32 %v103, 4294901760
    %182 = vmatmul.f32.gmra.mxu0 %v181
    %v183 = vpop.f32.mrf.mxu0
    %v184 = vadd.f32 %v135, %v183
    %v185 = vand.u32 %v106, 4294901760
    %186 = vmatmul.f32.gmra.mxu0 %v185
    %v187 = vpop.f32.mrf.mxu0
    %v188 = vadd.f32 %v143, %v187
    %189 = vdwg.mxu0
    %190 = vmatpush.msra.mxu0 0.0
    %191 = vmatpush.msra.mxu0 0.0
    %192 = vmatpush.msra.mxu0 0.0
    %193 = vmatpush.msra.mxu0 0.0
    %194 = vmatpush.msra.mxu0 0.0
    %195 = vmatpush.msra.mxu0 0.0
    %196 = vmatpush.msra.mxu0 0.0
    %197 = vmatpush.msra.mxu0 0.0
    %198 = vmatpush.msra.mxu0 0.0
    %199 = vmatpush.msra.mxu0 0.0
    %200 = vmatpush.msra.mxu0 0.0
    %201 = vmatpush.msra.mxu0 0.0
    %v202 = vand.u32 %v95, 4294901760
    %v203 = vsub.f32 %v95, %v202
    %204 = vmatpush.msra.mxu0 %v203
    %v205 = vand.u32 %v88, 4294901760
    %v206 = vsub.f32 %v88, %v205
    %207 = vmatpush.msra.mxu0 %v206
    %v208 = vand.u32 %v81, 4294901760
    %v209 = vsub.f32 %v81, %v208
    %210 = vmatpush.msra.mxu0 %v209
    %v211 = vand.u32 %v74, 4294901760
    %v212 = vsub.f32 %v74, %v211
    %213 = vmatpush.msra.mxu0 %v212
    %v214 = vand.u32 %v103, 4294901760
    %v215 = vsub.f32 %v103, %v214
    %216 = vmatmul.f32.gmra.mxu0 %v215
    %v217 = vpop.f32.mrf.mxu0
    %v218 = vadd.f32 %v184, %v217
    %v219 = vand.u32 %v106, 4294901760
    %v220 = vsub.f32 %v106, %v219
    %221 = vmatmul.f32.gmra.mxu0 %v220
    %v222 = vpop.f32.mrf.mxu0
    %v223 = vadd.f32 %v188, %v222
    %224 = vdwg.mxu0
    %225 = vmatpush.msra.mxu0 0.0
    %226 = vmatpush.msra.mxu0 0.0
    %227 = vmatpush.msra.mxu0 0.0
    %228 = vmatpush.msra.mxu0 0.0
    %229 = vmatpush.msra.mxu0 0.0
    %230 = vmatpush.msra.mxu0 0.0
    %231 = vmatpush.msra.mxu0 0.0
    %232 = vmatpush.msra.mxu0 0.0
    %233 = vmatpush.msra.mxu0 0.0
    %234 = vmatpush.msra.mxu0 0.0
    %235 = vmatpush.msra.mxu0 0.0
    %236 = vmatpush.msra.mxu0 0.0
    %v237 = vand.u32 %v95, 4294901760
    %238 = vmatpush.msra.mxu0 %v237
    %v239 = vand.u32 %v88, 4294901760
    %240 = vmatpush.msra.mxu0 %v239
    %v241 = vand.u32 %v81, 4294901760
    %242 = vmatpush.msra.mxu0 %v241
    %v243 = vand.u32 %v74, 4294901760
    %244 = vmatpush.msra.mxu0 %v243
    %v245 = vand.u32 %v103, 4294901760
    %v246 = vsub.f32 %v103, %v245
    %v247 = vand.u32 %v246, 4294901760
    %248 = vmatmul.f32.gmra.mxu0 %v247
    %v249 = vpop.f32.mrf.mxu0
    %v250 = vadd.f32 %v218, %v249
    %v251 = vand.u32 %v106, 4294901760
    %v252 = vsub.f32 %v106, %v251
    %v253 = vand.u32 %v252, 4294901760
    %254 = vmatmul.f32.gmra.mxu0 %v253
    %v255 = vpop.f32.mrf.mxu0
    %v256 = vadd.f32 %v223, %v255
    %257 = vdwg.mxu0
    %258 = vmatpush.msra.mxu0 0.0
    %259 = vmatpush.msra.mxu0 0.0
    %260 = vmatpush.msra.mxu0 0.0
    %261 = vmatpush.msra.mxu0 0.0
    %262 = vmatpush.msra.mxu0 0.0
    %263 = vmatpush.msra.mxu0 0.0
    %264 = vmatpush.msra.mxu0 0.0
    %265 = vmatpush.msra.mxu0 0.0
    %266 = vmatpush.msra.mxu0 0.0
    %267 = vmatpush.msra.mxu0 0.0
    %268 = vmatpush.msra.mxu0 0.0
    %269 = vmatpush.msra.mxu0 0.0
    %v270 = vand.u32 %v95, 4294901760
    %v271 = vsub.f32 %v95, %v270
    %v272 = vand.u32 %v271, 4294901760
    %273 = vmatpush.msra.mxu0 %v272
    %v274 = vand.u32 %v88, 4294901760
    %v275 = vsub.f32 %v88, %v274
    %v276 = vand.u32 %v275, 4294901760
    %277 = vmatpush.msra.mxu0 %v276
    %v278 = vand.u32 %v81, 4294901760
    %v279 = vsub.f32 %v81, %v278
    %v280 = vand.u32 %v279, 4294901760
    %281 = vmatpush.msra.mxu0 %v280
    %v282 = vand.u32 %v74, 4294901760
    %v283 = vsub.f32 %v74, %v282
    %v284 = vand.u32 %v283, 4294901760
    %285 = vmatpush.msra.mxu0 %v284
    %v286 = vand.u32 %v103, 4294901760
    %287 = vmatmul.f32.gmra.mxu0 %v286
    %v288 = vpop.f32.mrf.mxu0
    %v289 = vadd.f32 %v250, %v288
    %v290 = vand.u32 %v106, 4294901760
    %291 = vmatmul.f32.gmra.mxu0 %v290
    %v292 = vpop.f32.mrf.mxu0
    %v293 = vadd.f32 %v256, %v292
    %294 = vdwg.mxu0
    %295 = vmatpush.msra.mxu0 0.0
    %296 = vmatpush.msra.mxu0 0.0
    %297 = vmatpush.msra.mxu0 0.0
    %298 = vmatpush.msra.mxu0 0.0
    %299 = vmatpush.msra.mxu0 0.0
    %300 = vmatpush.msra.mxu0 0.0
    %301 = vmatpush.msra.mxu0 0.0
    %302 = vmatpush.msra.mxu0 0.0
    %303 = vmatpush.msra.mxu0 0.0
    %304 = vmatpush.msra.mxu0 0.0
    %305 = vmatpush.msra.mxu0 0.0
    %306 = vmatpush.msra.mxu0 0.0
    %v307 = vand.u32 %v95, 4294901760
    %308 = vmatpush.msra.mxu0 %v307
    %v309 = vand.u32 %v88, 4294901760
    %310 = vmatpush.msra.mxu0 %v309
    %v311 = vand.u32 %v81, 4294901760
    %312 = vmatpush.msra.mxu0 %v311
    %v313 = vand.u32 %v74, 4294901760
    %314 = vmatpush.msra.mxu0 %v313
    %v315 = vand.u32 %v103, 4294901760
    %316 = vmatmul.f32.gmra.mxu0 %v315
    %v317 = vpop.f32.mrf.mxu0
    %v318 = vadd.f32 %v289, %v317
    %v319 = vand.u32 %v106, 4294901760
    %320 = vmatmul.f32.gmra.mxu0 %v319
    %v321 = vpop.f32.mrf.mxu0
    %v322 = vadd.f32 %v293, %v321
    %323 = vdwg.mxu0
    %324 = vmatpush.msra.mxu0 0.0
    %325 = vmatpush.msra.mxu0 0.0
    %326 = vmatpush.msra.mxu0 0.0
    %327 = vmatpush.msra.mxu0 0.0
    %328 = vmatpush.msra.mxu0 0.0
    %329 = vmatpush.msra.mxu0 0.0
    %330 = vmatpush.msra.mxu0 0.0
    %331 = vmatpush.msra.mxu0 0.0
    %332 = vmatpush.msra.mxu0 0.0
    %333 = vmatpush.msra.mxu0 0.0
    %334 = vmatpush.msra.mxu0 0.0
    %335 = vmatpush.msra.mxu0 0.0
    %v336 = vand.u32 %v96, 4294901760
    %337 = vmatpush.msra.mxu0 %v336
    %v338 = vand.u32 %v89, 4294901760
    %339 = vmatpush.msra.mxu0 %v338
    %v340 = vand.u32 %v82, 4294901760
    %341 = vmatpush.msra.mxu0 %v340
    %v342 = vand.u32 %v75, 4294901760
    %343 = vmatpush.msra.mxu0 %v342
    %v344 = vand.u32 %v103, 4294901760
    %v345 = vsub.f32 %v103, %v344
    %v346 = vand.u32 %v345, 4294901760
    %v347 = vsub.f32 %v345, %v346
    %v348 = vand.u32 %v347, 4294901760
    %349 = vmatmul.f32.gmra.mxu0 %v348
    %v350 = vpop.f32.mrf.mxu0
    %v351 = vadd.f32 0.0, %v350
    %v352 = vand.u32 %v106, 4294901760
    %v353 = vsub.f32 %v106, %v352
    %v354 = vand.u32 %v353, 4294901760
    %v355 = vsub.f32 %v353, %v354
    %v356 = vand.u32 %v355, 4294901760
    %357 = vmatmul.f32.gmra.mxu0 %v356
    %v358 = vpop.f32.mrf.mxu0
    %v359 = vadd.f32 0.0, %v358
    %360 = vdwg.mxu0
    %361 = vmatpush.msra.mxu0 0.0
    %362 = vmatpush.msra.mxu0 0.0
    %363 = vmatpush.msra.mxu0 0.0
    %364 = vmatpush.msra.mxu0 0.0
    %365 = vmatpush.msra.mxu0 0.0
    %366 = vmatpush.msra.mxu0 0.0
    %367 = vmatpush.msra.mxu0 0.0
    %368 = vmatpush.msra.mxu0 0.0
    %369 = vmatpush.msra.mxu0 0.0
    %370 = vmatpush.msra.mxu0 0.0
    %371 = vmatpush.msra.mxu0 0.0
    %372 = vmatpush.msra.mxu0 0.0
    %v373 = vand.u32 %v96, 4294901760
    %v374 = vsub.f32 %v96, %v373
    %v375 = vand.u32 %v374, 4294901760
    %v376 = vsub.f32 %v374, %v375
    %v377 = vand.u32 %v376, 4294901760
    %378 = vmatpush.msra.mxu0 %v377
    %v379 = vand.u32 %v89, 4294901760
    %v380 = vsub.f32 %v89, %v379
    %v381 = vand.u32 %v380, 4294901760
    %v382 = vsub.f32 %v380, %v381
    %v383 = vand.u32 %v382, 4294901760
    %384 = vmatpush.msra.mxu0 %v383
    %v385 = vand.u32 %v82, 4294901760
    %v386 = vsub.f32 %v82, %v385
    %v387 = vand.u32 %v386, 4294901760
    %v388 = vsub.f32 %v386, %v387
    %v389 = vand.u32 %v388, 4294901760
    %390 = vmatpush.msra.mxu0 %v389
    %v391 = vand.u32 %v75, 4294901760
    %v392 = vsub.f32 %v75, %v391
    %v393 = vand.u32 %v392, 4294901760
    %v394 = vsub.f32 %v392, %v393
    %v395 = vand.u32 %v394, 4294901760
    %396 = vmatpush.msra.mxu0 %v395
    %v397 = vand.u32 %v103, 4294901760
    %398 = vmatmul.f32.gmra.mxu0 %v397
    %v399 = vpop.f32.mrf.mxu0
    %v400 = vadd.f32 %v351, %v399
    %v401 = vand.u32 %v106, 4294901760
    %402 = vmatmul.f32.gmra.mxu0 %v401
    %v403 = vpop.f32.mrf.mxu0
    %v404 = vadd.f32 %v359, %v403
    %405 = vdwg.mxu0
    %406 = vmatpush.msra.mxu0 0.0
    %407 = vmatpush.msra.mxu0 0.0
    %408 = vmatpush.msra.mxu0 0.0
    %409 = vmatpush.msra.mxu0 0.0
    %410 = vmatpush.msra.mxu0 0.0
    %411 = vmatpush.msra.mxu0 0.0
    %412 = vmatpush.msra.mxu0 0.0
    %413 = vmatpush.msra.mxu0 0.0
    %414 = vmatpush.msra.mxu0 0.0
    %415 = vmatpush.msra.mxu0 0.0
    %416 = vmatpush.msra.mxu0 0.0
    %417 = vmatpush.msra.mxu0 0.0
    %v418 = vand.u32 %v96, 4294901760
    %v419 = vsub.f32 %v96, %v418
    %420 = vmatpush.msra.mxu0 %v419
    %v421 = vand.u32 %v89, 4294901760
    %v422 = vsub.f32 %v89, %v421
    %423 = vmatpush.msra.mxu0 %v422
    %v424 = vand.u32 %v82, 4294901760
    %v425 = vsub.f32 %v82, %v424
    %426 = vmatpush.msra.mxu0 %v425
    %v427 = vand.u32 %v75, 4294901760
    %v428 = vsub.f32 %v75, %v427
    %429 = vmatpush.msra.mxu0 %v428
    %v430 = vand.u32 %v103, 4294901760
    %v431 = vsub.f32 %v103, %v430
    %432 = vmatmul.f32.gmra.mxu0 %v431
    %v433 = vpop.f32.mrf.mxu0
    %v434 = vadd.f32 %v400, %v433
    %v435 = vand.u32 %v106, 4294901760
    %v436 = vsub.f32 %v106, %v435
    %437 = vmatmul.f32.gmra.mxu0 %v436
    %v438 = vpop.f32.mrf.mxu0
    %v439 = vadd.f32 %v404, %v438
    %440 = vdwg.mxu0
    %441 = vmatpush.msra.mxu0 0.0
    %442 = vmatpush.msra.mxu0 0.0
    %443 = vmatpush.msra.mxu0 0.0
    %444 = vmatpush.msra.mxu0 0.0
    %445 = vmatpush.msra.mxu0 0.0
    %446 = vmatpush.msra.mxu0 0.0
    %447 = vmatpush.msra.mxu0 0.0
    %448 = vmatpush.msra.mxu0 0.0
    %449 = vmatpush.msra.mxu0 0.0
    %450 = vmatpush.msra.mxu0 0.0
    %451 = vmatpush.msra.mxu0 0.0
    %452 = vmatpush.msra.mxu0 0.0
    %v453 = vand.u32 %v96, 4294901760
    %454 = vmatpush.msra.mxu0 %v453
    %v455 = vand.u32 %v89, 4294901760
    %456 = vmatpush.msra.mxu0 %v455
    %v457 = vand.u32 %v82, 4294901760
    %458 = vmatpush.msra.mxu0 %v457
    %v459 = vand.u32 %v75, 4294901760
    %460 = vmatpush.msra.mxu0 %v459
    %v461 = vand.u32 %v103, 4294901760
    %v462 = vsub.f32 %v103, %v461
    %v463 = vand.u32 %v462, 4294901760
    %464 = vmatmul.f32.gmra.mxu0 %v463
    %v465 = vpop.f32.mrf.mxu0
    %v466 = vadd.f32 %v434, %v465
    %v467 = vand.u32 %v106, 4294901760
    %v468 = vsub.f32 %v106, %v467
    %v469 = vand.u32 %v468, 4294901760
    %470 = vmatmul.f32.gmra.mxu0 %v469
    %v471 = vpop.f32.mrf.mxu0
    %v472 = vadd.f32 %v439, %v471
    %473 = vdwg.mxu0
    %474 = vmatpush.msra.mxu0 0.0
    %475 = vmatpush.msra.mxu0 0.0
    %476 = vmatpush.msra.mxu0 0.0
    %477 = vmatpush.msra.mxu0 0.0
    %478 = vmatpush.msra.mxu0 0.0
    %479 = vmatpush.msra.mxu0 0.0
    %480 = vmatpush.msra.mxu0 0.0
    %481 = vmatpush.msra.mxu0 0.0
    %482 = vmatpush.msra.mxu0 0.0
    %483 = vmatpush.msra.mxu0 0.0
    %484 = vmatpush.msra.mxu0 0.0
    %485 = vmatpush.msra.mxu0 0.0
    %v486 = vand.u32 %v96, 4294901760
    %v487 = vsub.f32 %v96, %v486
    %v488 = vand.u32 %v487, 4294901760
    %489 = vmatpush.msra.mxu0 %v488
    %v490 = vand.u32 %v89, 4294901760
    %v491 = vsub.f32 %v89, %v490
    %v492 = vand.u32 %v491, 4294901760
    %493 = vmatpush.msra.mxu0 %v492
    %v494 = vand.u32 %v82, 4294901760
    %v495 = vsub.f32 %v82, %v494
    %v496 = vand.u32 %v495, 4294901760
    %497 = vmatpush.msra.mxu0 %v496
    %v498 = vand.u32 %v75, 4294901760
    %v499 = vsub.f32 %v75, %v498
    %v500 = vand.u32 %v499, 4294901760
    %501 = vmatpush.msra.mxu0 %v500
    %v502 = vand.u32 %v103, 4294901760
    %503 = vmatmul.f32.gmra.mxu0 %v502
    %v504 = vpop.f32.mrf.mxu0
    %v505 = vadd.f32 %v466, %v504
    %v506 = vand.u32 %v106, 4294901760
    %507 = vmatmul.f32.gmra.mxu0 %v506
    %v508 = vpop.f32.mrf.mxu0
    %v509 = vadd.f32 %v472, %v508
    %510 = vdwg.mxu0
    %511 = vmatpush.msra.mxu0 0.0
    %512 = vmatpush.msra.mxu0 0.0
    %513 = vmatpush.msra.mxu0 0.0
    %514 = vmatpush.msra.mxu0 0.0
    %515 = vmatpush.msra.mxu0 0.0
    %516 = vmatpush.msra.mxu0 0.0
    %517 = vmatpush.msra.mxu0 0.0
    %518 = vmatpush.msra.mxu0 0.0
    %519 = vmatpush.msra.mxu0 0.0
    %520 = vmatpush.msra.mxu0 0.0
    %521 = vmatpush.msra.mxu0 0.0
    %522 = vmatpush.msra.mxu0 0.0
    %v523 = vand.u32 %v96, 4294901760
    %524 = vmatpush.msra.mxu0 %v523
    %v525 = vand.u32 %v89, 4294901760
    %526 = vmatpush.msra.mxu0 %v525
    %v527 = vand.u32 %v82, 4294901760
    %528 = vmatpush.msra.mxu0 %v527
    %v529 = vand.u32 %v75, 4294901760
    %530 = vmatpush.msra.mxu0 %v529
    %v531 = vand.u32 %v103, 4294901760
    %532 = vmatmul.f32.gmra.mxu0 %v531
    %v533 = vpop.f32.mrf.mxu0
    %v534 = vadd.f32 %v505, %v533
    %v535 = vand.u32 %v106, 4294901760
    %536 = vmatmul.f32.gmra.mxu0 %v535
    %v537 = vpop.f32.mrf.mxu0
    %v538 = vadd.f32 %v509, %v537
    %539 = vdwg.mxu0
    %540 = vmatpush.msra.mxu0 0.0
    %541 = vmatpush.msra.mxu0 0.0
    %542 = vmatpush.msra.mxu0 0.0
    %543 = vmatpush.msra.mxu0 0.0
    %544 = vmatpush.msra.mxu0 0.0
    %545 = vmatpush.msra.mxu0 0.0
    %546 = vmatpush.msra.mxu0 0.0
    %547 = vmatpush.msra.mxu0 0.0
    %548 = vmatpush.msra.mxu0 0.0
    %549 = vmatpush.msra.mxu0 0.0
    %550 = vmatpush.msra.mxu0 0.0
    %551 = vmatpush.msra.mxu0 0.0
    %v552 = vand.u32 %v97, 4294901760
    %553 = vmatpush.msra.mxu0 %v552
    %v554 = vand.u32 %v90, 4294901760
    %555 = vmatpush.msra.mxu0 %v554
    %v556 = vand.u32 %v83, 4294901760
    %557 = vmatpush.msra.mxu0 %v556
    %v558 = vand.u32 %v76, 4294901760
    %559 = vmatpush.msra.mxu0 %v558
    %v560 = vand.u32 %v103, 4294901760
    %v561 = vsub.f32 %v103, %v560
    %v562 = vand.u32 %v561, 4294901760
    %v563 = vsub.f32 %v561, %v562
    %v564 = vand.u32 %v563, 4294901760
    %565 = vmatmul.f32.gmra.mxu0 %v564
    %v566 = vpop.f32.mrf.mxu0
    %v567 = vadd.f32 0.0, %v566
    %v568 = vand.u32 %v106, 4294901760
    %v569 = vsub.f32 %v106, %v568
    %v570 = vand.u32 %v569, 4294901760
    %v571 = vsub.f32 %v569, %v570
    %v572 = vand.u32 %v571, 4294901760
    %573 = vmatmul.f32.gmra.mxu0 %v572
    %v574 = vpop.f32.mrf.mxu0
    %v575 = vadd.f32 0.0, %v574
    %576 = vdwg.mxu0
    %577 = vmatpush.msra.mxu0 0.0
    %578 = vmatpush.msra.mxu0 0.0
    %579 = vmatpush.msra.mxu0 0.0
    %580 = vmatpush.msra.mxu0 0.0
    %581 = vmatpush.msra.mxu0 0.0
    %582 = vmatpush.msra.mxu0 0.0
    %583 = vmatpush.msra.mxu0 0.0
    %584 = vmatpush.msra.mxu0 0.0
    %585 = vmatpush.msra.mxu0 0.0
    %586 = vmatpush.msra.mxu0 0.0
    %587 = vmatpush.msra.mxu0 0.0
    %588 = vmatpush.msra.mxu0 0.0
    %v589 = vand.u32 %v97, 4294901760
    %v590 = vsub.f32 %v97, %v589
    %v591 = vand.u32 %v590, 4294901760
    %v592 = vsub.f32 %v590, %v591
    %v593 = vand.u32 %v592, 4294901760
    %594 = vmatpush.msra.mxu0 %v593
    %v595 = vand.u32 %v90, 4294901760
    %v596 = vsub.f32 %v90, %v595
    %v597 = vand.u32 %v596, 4294901760
    %v598 = vsub.f32 %v596, %v597
    %v599 = vand.u32 %v598, 4294901760
    %600 = vmatpush.msra.mxu0 %v599
    %v601 = vand.u32 %v83, 4294901760
    %v602 = vsub.f32 %v83, %v601
    %v603 = vand.u32 %v602, 4294901760
    %v604 = vsub.f32 %v602, %v603
    %v605 = vand.u32 %v604, 4294901760
    %606 = vmatpush.msra.mxu0 %v605
    %v607 = vand.u32 %v76, 4294901760
    %v608 = vsub.f32 %v76, %v607
    %v609 = vand.u32 %v608, 4294901760
    %v610 = vsub.f32 %v608, %v609
    %v611 = vand.u32 %v610, 4294901760
    %612 = vmatpush.msra.mxu0 %v611
    %v613 = vand.u32 %v103, 4294901760
    %614 = vmatmul.f32.gmra.mxu0 %v613
    %v615 = vpop.f32.mrf.mxu0
    %v616 = vadd.f32 %v567, %v615
    %v617 = vand.u32 %v106, 4294901760
    %618 = vmatmul.f32.gmra.mxu0 %v617
    %v619 = vpop.f32.mrf.mxu0
    %v620 = vadd.f32 %v575, %v619
    %621 = vdwg.mxu0
    %622 = vmatpush.msra.mxu0 0.0
    %623 = vmatpush.msra.mxu0 0.0
    %624 = vmatpush.msra.mxu0 0.0
    %625 = vmatpush.msra.mxu0 0.0
    %626 = vmatpush.msra.mxu0 0.0
    %627 = vmatpush.msra.mxu0 0.0
    %628 = vmatpush.msra.mxu0 0.0
    %629 = vmatpush.msra.mxu0 0.0
    %630 = vmatpush.msra.mxu0 0.0
    %631 = vmatpush.msra.mxu0 0.0
    %632 = vmatpush.msra.mxu0 0.0
    %633 = vmatpush.msra.mxu0 0.0
    %v634 = vand.u32 %v97, 4294901760
    %v635 = vsub.f32 %v97, %v634
    %636 = vmatpush.msra.mxu0 %v635
    %v637 = vand.u32 %v90, 4294901760
    %v638 = vsub.f32 %v90, %v637
    %639 = vmatpush.msra.mxu0 %v638
    %v640 = vand.u32 %v83, 4294901760
    %v641 = vsub.f32 %v83, %v640
    %642 = vmatpush.msra.mxu0 %v641
    %v643 = vand.u32 %v76, 4294901760
    %v644 = vsub.f32 %v76, %v643
    %645 = vmatpush.msra.mxu0 %v644
    %v646 = vand.u32 %v103, 4294901760
    %v647 = vsub.f32 %v103, %v646
    %648 = vmatmul.f32.gmra.mxu0 %v647
    %v649 = vpop.f32.mrf.mxu0
    %v650 = vadd.f32 %v616, %v649
    %v651 = vand.u32 %v106, 4294901760
    %v652 = vsub.f32 %v106, %v651
    %653 = vmatmul.f32.gmra.mxu0 %v652
    %v654 = vpop.f32.mrf.mxu0
    %v655 = vadd.f32 %v620, %v654
    %656 = vdwg.mxu0
    %657 = vmatpush.msra.mxu0 0.0
    %658 = vmatpush.msra.mxu0 0.0
    %659 = vmatpush.msra.mxu0 0.0
    %660 = vmatpush.msra.mxu0 0.0
    %661 = vmatpush.msra.mxu0 0.0
    %662 = vmatpush.msra.mxu0 0.0
    %663 = vmatpush.msra.mxu0 0.0
    %664 = vmatpush.msra.mxu0 0.0
    %665 = vmatpush.msra.mxu0 0.0
    %666 = vmatpush.msra.mxu0 0.0
    %667 = vmatpush.msra.mxu0 0.0
    %668 = vmatpush.msra.mxu0 0.0
    %v669 = vand.u32 %v97, 4294901760
    %670 = vmatpush.msra.mxu0 %v669
    %v671 = vand.u32 %v90, 4294901760
    %672 = vmatpush.msra.mxu0 %v671
    %v673 = vand.u32 %v83, 4294901760
    %674 = vmatpush.msra.mxu0 %v673
    %v675 = vand.u32 %v76, 4294901760
    %676 = vmatpush.msra.mxu0 %v675
    %v677 = vand.u32 %v103, 4294901760
    %v678 = vsub.f32 %v103, %v677
    %v679 = vand.u32 %v678, 4294901760
    %680 = vmatmul.f32.gmra.mxu0 %v679
    %v681 = vpop.f32.mrf.mxu0
    %v682 = vadd.f32 %v650, %v681
    %v683 = vand.u32 %v106, 4294901760
    %v684 = vsub.f32 %v106, %v683
    %v685 = vand.u32 %v684, 4294901760
    %686 = vmatmul.f32.gmra.mxu0 %v685
    %v687 = vpop.f32.mrf.mxu0
    %v688 = vadd.f32 %v655, %v687
    %689 = vdwg.mxu0
    %690 = vmatpush.msra.mxu0 0.0
    %691 = vmatpush.msra.mxu0 0.0
    %692 = vmatpush.msra.mxu0 0.0
    %693 = vmatpush.msra.mxu0 0.0
    %694 = vmatpush.msra.mxu0 0.0
    %695 = vmatpush.msra.mxu0 0.0
    %696 = vmatpush.msra.mxu0 0.0
    %697 = vmatpush.msra.mxu0 0.0
    %698 = vmatpush.msra.mxu0 0.0
    %699 = vmatpush.msra.mxu0 0.0
    %700 = vmatpush.msra.mxu0 0.0
    %701 = vmatpush.msra.mxu0 0.0
    %v702 = vand.u32 %v97, 4294901760
    %v703 = vsub.f32 %v97, %v702
    %v704 = vand.u32 %v703, 4294901760
    %705 = vmatpush.msra.mxu0 %v704
    %v706 = vand.u32 %v90, 4294901760
    %v707 = vsub.f32 %v90, %v706
    %v708 = vand.u32 %v707, 4294901760
    %709 = vmatpush.msra.mxu0 %v708
    %v710 = vand.u32 %v83, 4294901760
    %v711 = vsub.f32 %v83, %v710
    %v712 = vand.u32 %v711, 4294901760
    %713 = vmatpush.msra.mxu0 %v712
    %v714 = vand.u32 %v76, 4294901760
    %v715 = vsub.f32 %v76, %v714
    %v716 = vand.u32 %v715, 4294901760
    %717 = vmatpush.msra.mxu0 %v716
    %v718 = vand.u32 %v103, 4294901760
    %719 = vmatmul.f32.gmra.mxu0 %v718
    %v720 = vpop.f32.mrf.mxu0
    %v721 = vadd.f32 %v682, %v720
    %v722 = vand.u32 %v106, 4294901760
    %723 = vmatmul.f32.gmra.mxu0 %v722
    %v724 = vpop.f32.mrf.mxu0
    %v725 = vadd.f32 %v688, %v724
    %726 = vdwg.mxu0
    %727 = vmatpush.msra.mxu0 0.0
    %728 = vmatpush.msra.mxu0 0.0
    %729 = vmatpush.msra.mxu0 0.0
    %730 = vmatpush.msra.mxu0 0.0
    %731 = vmatpush.msra.mxu0 0.0
    %732 = vmatpush.msra.mxu0 0.0
    %733 = vmatpush.msra.mxu0 0.0
    %734 = vmatpush.msra.mxu0 0.0
    %735 = vmatpush.msra.mxu0 0.0
    %736 = vmatpush.msra.mxu0 0.0
    %737 = vmatpush.msra.mxu0 0.0
    %738 = vmatpush.msra.mxu0 0.0
    %v739 = vand.u32 %v97, 4294901760
    %740 = vmatpush.msra.mxu0 %v739
    %v741 = vand.u32 %v90, 4294901760
    %742 = vmatpush.msra.mxu0 %v741
    %v743 = vand.u32 %v83, 4294901760
    %744 = vmatpush.msra.mxu0 %v743
    %v745 = vand.u32 %v76, 4294901760
    %746 = vmatpush.msra.mxu0 %v745
    %v747 = vand.u32 %v103, 4294901760
    %748 = vmatmul.f32.gmra.mxu0 %v747
    %v749 = vpop.f32.mrf.mxu0
    %v750 = vadd.f32 %v721, %v749
    %v751 = vand.u32 %v106, 4294901760
    %752 = vmatmul.f32.gmra.mxu0 %v751
    %v753 = vpop.f32.mrf.mxu0
    %v754 = vadd.f32 %v725, %v753
    %755 = vdwg.mxu0
    %756 = vmatpush.msra.mxu0 0.0
    %757 = vmatpush.msra.mxu0 0.0
    %758 = vmatpush.msra.mxu0 0.0
    %759 = vmatpush.msra.mxu0 0.0
    %760 = vmatpush.msra.mxu0 0.0
    %761 = vmatpush.msra.mxu0 0.0
    %762 = vmatpush.msra.mxu0 0.0
    %763 = vmatpush.msra.mxu0 0.0
    %764 = vmatpush.msra.mxu0 0.0
    %765 = vmatpush.msra.mxu0 0.0
    %766 = vmatpush.msra.mxu0 0.0
    %767 = vmatpush.msra.mxu0 0.0
    %v768 = vand.u32 %v98, 4294901760
    %769 = vmatpush.msra.mxu0 %v768
    %v770 = vand.u32 %v91, 4294901760
    %771 = vmatpush.msra.mxu0 %v770
    %v772 = vand.u32 %v84, 4294901760
    %773 = vmatpush.msra.mxu0 %v772
    %v774 = vand.u32 %v77, 4294901760
    %775 = vmatpush.msra.mxu0 %v774
    %v776 = vand.u32 %v103, 4294901760
    %v777 = vsub.f32 %v103, %v776
    %v778 = vand.u32 %v777, 4294901760
    %v779 = vsub.f32 %v777, %v778
    %v780 = vand.u32 %v779, 4294901760
    %781 = vmatmul.f32.gmra.mxu0 %v780
    %v782 = vpop.f32.mrf.mxu0
    %v783 = vadd.f32 0.0, %v782
    %v784 = vand.u32 %v106, 4294901760
    %v785 = vsub.f32 %v106, %v784
    %v786 = vand.u32 %v785, 4294901760
    %v787 = vsub.f32 %v785, %v786
    %v788 = vand.u32 %v787, 4294901760
    %789 = vmatmul.f32.gmra.mxu0 %v788
    %v790 = vpop.f32.mrf.mxu0
    %v791 = vadd.f32 0.0, %v790
    %792 = vdwg.mxu0
    %793 = vmatpush.msra.mxu0 0.0
    %794 = vmatpush.msra.mxu0 0.0
    %795 = vmatpush.msra.mxu0 0.0
    %796 = vmatpush.msra.mxu0 0.0
    %797 = vmatpush.msra.mxu0 0.0
    %798 = vmatpush.msra.mxu0 0.0
    %799 = vmatpush.msra.mxu0 0.0
    %800 = vmatpush.msra.mxu0 0.0
    %801 = vmatpush.msra.mxu0 0.0
    %802 = vmatpush.msra.mxu0 0.0
    %803 = vmatpush.msra.mxu0 0.0
    %804 = vmatpush.msra.mxu0 0.0
    %v805 = vand.u32 %v98, 4294901760
    %v806 = vsub.f32 %v98, %v805
    %v807 = vand.u32 %v806, 4294901760
    %v808 = vsub.f32 %v806, %v807
    %v809 = vand.u32 %v808, 4294901760
    %810 = vmatpush.msra.mxu0 %v809
    %v811 = vand.u32 %v91, 4294901760
    %v812 = vsub.f32 %v91, %v811
    %v813 = vand.u32 %v812, 4294901760
    %v814 = vsub.f32 %v812, %v813
    %v815 = vand.u32 %v814, 4294901760
    %816 = vmatpush.msra.mxu0 %v815
    %v817 = vand.u32 %v84, 4294901760
    %v818 = vsub.f32 %v84, %v817
    %v819 = vand.u32 %v818, 4294901760
    %v820 = vsub.f32 %v818, %v819
    %v821 = vand.u32 %v820, 4294901760
    %822 = vmatpush.msra.mxu0 %v821
    %v823 = vand.u32 %v77, 4294901760
    %v824 = vsub.f32 %v77, %v823
    %v825 = vand.u32 %v824, 4294901760
    %v826 = vsub.f32 %v824, %v825
    %v827 = vand.u32 %v826, 4294901760
    %828 = vmatpush.msra.mxu0 %v827
    %v829 = vand.u32 %v103, 4294901760
    %830 = vmatmul.f32.gmra.mxu0 %v829
    %v831 = vpop.f32.mrf.mxu0
    %v832 = vadd.f32 %v783, %v831
    %v833 = vand.u32 %v106, 4294901760
    %834 = vmatmul.f32.gmra.mxu0 %v833
    %v835 = vpop.f32.mrf.mxu0
    %v836 = vadd.f32 %v791, %v835
    %837 = vdwg.mxu0
    %838 = vmatpush.msra.mxu0 0.0
    %839 = vmatpush.msra.mxu0 0.0
    %840 = vmatpush.msra.mxu0 0.0
    %841 = vmatpush.msra.mxu0 0.0
    %842 = vmatpush.msra.mxu0 0.0
    %843 = vmatpush.msra.mxu0 0.0
    %844 = vmatpush.msra.mxu0 0.0
    %845 = vmatpush.msra.mxu0 0.0
    %846 = vmatpush.msra.mxu0 0.0
    %847 = vmatpush.msra.mxu0 0.0
    %848 = vmatpush.msra.mxu0 0.0
    %849 = vmatpush.msra.mxu0 0.0
    %v850 = vand.u32 %v98, 4294901760
    %v851 = vsub.f32 %v98, %v850
    %852 = vmatpush.msra.mxu0 %v851
    %v853 = vand.u32 %v91, 4294901760
    %v854 = vsub.f32 %v91, %v853
    %855 = vmatpush.msra.mxu0 %v854
    %v856 = vand.u32 %v84, 4294901760
    %v857 = vsub.f32 %v84, %v856
    %858 = vmatpush.msra.mxu0 %v857
    %v859 = vand.u32 %v77, 4294901760
    %v860 = vsub.f32 %v77, %v859
    %861 = vmatpush.msra.mxu0 %v860
    %v862 = vand.u32 %v103, 4294901760
    %v863 = vsub.f32 %v103, %v862
    %864 = vmatmul.f32.gmra.mxu0 %v863
    %v865 = vpop.f32.mrf.mxu0
    %v866 = vadd.f32 %v832, %v865
    %v867 = vand.u32 %v106, 4294901760
    %v868 = vsub.f32 %v106, %v867
    %869 = vmatmul.f32.gmra.mxu0 %v868
    %v870 = vpop.f32.mrf.mxu0
    %v871 = vadd.f32 %v836, %v870
    %872 = vdwg.mxu0
    %873 = vmatpush.msra.mxu0 0.0
    %874 = vmatpush.msra.mxu0 0.0
    %875 = vmatpush.msra.mxu0 0.0
    %876 = vmatpush.msra.mxu0 0.0
    %877 = vmatpush.msra.mxu0 0.0
    %878 = vmatpush.msra.mxu0 0.0
    %879 = vmatpush.msra.mxu0 0.0
    %880 = vmatpush.msra.mxu0 0.0
    %881 = vmatpush.msra.mxu0 0.0
    %882 = vmatpush.msra.mxu0 0.0
    %883 = vmatpush.msra.mxu0 0.0
    %884 = vmatpush.msra.mxu0 0.0
    %v885 = vand.u32 %v98, 4294901760
    %886 = vmatpush.msra.mxu0 %v885
    %v887 = vand.u32 %v91, 4294901760
    %888 = vmatpush.msra.mxu0 %v887
    %v889 = vand.u32 %v84, 4294901760
    %890 = vmatpush.msra.mxu0 %v889
    %v891 = vand.u32 %v77, 4294901760
    %892 = vmatpush.msra.mxu0 %v891
    %v893 = vand.u32 %v103, 4294901760
    %v894 = vsub.f32 %v103, %v893
    %v895 = vand.u32 %v894, 4294901760
    %896 = vmatmul.f32.gmra.mxu0 %v895
    %v897 = vpop.f32.mrf.mxu0
    %v898 = vadd.f32 %v866, %v897
    %v899 = vand.u32 %v106, 4294901760
    %v900 = vsub.f32 %v106, %v899
    %v901 = vand.u32 %v900, 4294901760
    %902 = vmatmul.f32.gmra.mxu0 %v901
    %v903 = vpop.f32.mrf.mxu0
    %v904 = vadd.f32 %v871, %v903
    %905 = vdwg.mxu0
    %906 = vmatpush.msra.mxu0 0.0
    %907 = vmatpush.msra.mxu0 0.0
    %908 = vmatpush.msra.mxu0 0.0
    %909 = vmatpush.msra.mxu0 0.0
    %910 = vmatpush.msra.mxu0 0.0
    %911 = vmatpush.msra.mxu0 0.0
    %912 = vmatpush.msra.mxu0 0.0
    %913 = vmatpush.msra.mxu0 0.0
    %914 = vmatpush.msra.mxu0 0.0
    %915 = vmatpush.msra.mxu0 0.0
    %916 = vmatpush.msra.mxu0 0.0
    %917 = vmatpush.msra.mxu0 0.0
    %v918 = vand.u32 %v98, 4294901760
    %v919 = vsub.f32 %v98, %v918
    %v920 = vand.u32 %v919, 4294901760
    %921 = vmatpush.msra.mxu0 %v920
    %v922 = vand.u32 %v91, 4294901760
    %v923 = vsub.f32 %v91, %v922
    %v924 = vand.u32 %v923, 4294901760
    %925 = vmatpush.msra.mxu0 %v924
    %v926 = vand.u32 %v84, 4294901760
    %v927 = vsub.f32 %v84, %v926
    %v928 = vand.u32 %v927, 4294901760
    %929 = vmatpush.msra.mxu0 %v928
    %v930 = vand.u32 %v77, 4294901760
    %v931 = vsub.f32 %v77, %v930
    %v932 = vand.u32 %v931, 4294901760
    %933 = vmatpush.msra.mxu0 %v932
    %v934 = vand.u32 %v103, 4294901760
    %935 = vmatmul.f32.gmra.mxu0 %v934
    %v936 = vpop.f32.mrf.mxu0
    %v937 = vadd.f32 %v898, %v936
    %v938 = vand.u32 %v106, 4294901760
    %939 = vmatmul.f32.gmra.mxu0 %v938
    %v940 = vpop.f32.mrf.mxu0
    %v941 = vadd.f32 %v904, %v940
    %942 = vdwg.mxu0
    %943 = vmatpush.msra.mxu0 0.0
    %944 = vmatpush.msra.mxu0 0.0
    %945 = vmatpush.msra.mxu0 0.0
    %946 = vmatpush.msra.mxu0 0.0
    %947 = vmatpush.msra.mxu0 0.0
    %948 = vmatpush.msra.mxu0 0.0
    %949 = vmatpush.msra.mxu0 0.0
    %950 = vmatpush.msra.mxu0 0.0
    %951 = vmatpush.msra.mxu0 0.0
    %952 = vmatpush.msra.mxu0 0.0
    %953 = vmatpush.msra.mxu0 0.0
    %954 = vmatpush.msra.mxu0 0.0
    %v955 = vand.u32 %v98, 4294901760
    %956 = vmatpush.msra.mxu0 %v955
    %v957 = vand.u32 %v91, 4294901760
    %958 = vmatpush.msra.mxu0 %v957
    %v959 = vand.u32 %v84, 4294901760
    %960 = vmatpush.msra.mxu0 %v959
    %v961 = vand.u32 %v77, 4294901760
    %962 = vmatpush.msra.mxu0 %v961
    %v963 = vand.u32 %v103, 4294901760
    %964 = vmatmul.f32.gmra.mxu0 %v963
    %v965 = vpop.f32.mrf.mxu0
    %v966 = vadd.f32 %v937, %v965
    %v967 = vand.u32 %v106, 4294901760
    %968 = vmatmul.f32.gmra.mxu0 %v967
    %v969 = vpop.f32.mrf.mxu0
    %v970 = vadd.f32 %v941, %v969
    %971 = vdwg.mxu0
    %972 = vmatpush.msra.mxu0 0.0
    %973 = vmatpush.msra.mxu0 0.0
    %974 = vmatpush.msra.mxu0 0.0
    %975 = vmatpush.msra.mxu0 0.0
    %976 = vmatpush.msra.mxu0 0.0
    %977 = vmatpush.msra.mxu0 0.0
    %978 = vmatpush.msra.mxu0 0.0
    %979 = vmatpush.msra.mxu0 0.0
    %980 = vmatpush.msra.mxu0 0.0
    %981 = vmatpush.msra.mxu0 0.0
    %982 = vmatpush.msra.mxu0 0.0
    %983 = vmatpush.msra.mxu0 0.0
    %v984 = vand.u32 %v99, 4294901760
    %985 = vmatpush.msra.mxu0 %v984
    %v986 = vand.u32 %v92, 4294901760
    %987 = vmatpush.msra.mxu0 %v986
    %v988 = vand.u32 %v85, 4294901760
    %989 = vmatpush.msra.mxu0 %v988
    %v990 = vand.u32 %v78, 4294901760
    %991 = vmatpush.msra.mxu0 %v990
    %v992 = vand.u32 %v103, 4294901760
    %v993 = vsub.f32 %v103, %v992
    %v994 = vand.u32 %v993, 4294901760
    %v995 = vsub.f32 %v993, %v994
    %v996 = vand.u32 %v995, 4294901760
    %997 = vmatmul.f32.gmra.mxu0 %v996
    %v998 = vpop.f32.mrf.mxu0
    %v999 = vadd.f32 0.0, %v998
    %v1000 = vand.u32 %v106, 4294901760
    %v1001 = vsub.f32 %v106, %v1000
    %v1002 = vand.u32 %v1001, 4294901760
    %v1003 = vsub.f32 %v1001, %v1002
    %v1004 = vand.u32 %v1003, 4294901760
    %1005 = vmatmul.f32.gmra.mxu0 %v1004
    %v1006 = vpop.f32.mrf.mxu0
    %v1007 = vadd.f32 0.0, %v1006
    %1008 = vdwg.mxu0
    %1009 = vmatpush.msra.mxu0 0.0
    %1010 = vmatpush.msra.mxu0 0.0
    %1011 = vmatpush.msra.mxu0 0.0
    %1012 = vmatpush.msra.mxu0 0.0
    %1013 = vmatpush.msra.mxu0 0.0
    %1014 = vmatpush.msra.mxu0 0.0
    %1015 = vmatpush.msra.mxu0 0.0
    %1016 = vmatpush.msra.mxu0 0.0
    %1017 = vmatpush.msra.mxu0 0.0
    %1018 = vmatpush.msra.mxu0 0.0
    %1019 = vmatpush.msra.mxu0 0.0
    %1020 = vmatpush.msra.mxu0 0.0
    %v1021 = vand.u32 %v99, 4294901760
    %v1022 = vsub.f32 %v99, %v1021
    %v1023 = vand.u32 %v1022, 4294901760
    %v1024 = vsub.f32 %v1022, %v1023
    %v1025 = vand.u32 %v1024, 4294901760
    %1026 = vmatpush.msra.mxu0 %v1025
    %v1027 = vand.u32 %v92, 4294901760
    %v1028 = vsub.f32 %v92, %v1027
    %v1029 = vand.u32 %v1028, 4294901760
    %v1030 = vsub.f32 %v1028, %v1029
    %v1031 = vand.u32 %v1030, 4294901760
    %1032 = vmatpush.msra.mxu0 %v1031
    %v1033 = vand.u32 %v85, 4294901760
    %v1034 = vsub.f32 %v85, %v1033
    %v1035 = vand.u32 %v1034, 4294901760
    %v1036 = vsub.f32 %v1034, %v1035
    %v1037 = vand.u32 %v1036, 4294901760
    %1038 = vmatpush.msra.mxu0 %v1037
    %v1039 = vand.u32 %v78, 4294901760
    %v1040 = vsub.f32 %v78, %v1039
    %v1041 = vand.u32 %v1040, 4294901760
    %v1042 = vsub.f32 %v1040, %v1041
    %v1043 = vand.u32 %v1042, 4294901760
    %1044 = vmatpush.msra.mxu0 %v1043
    %v1045 = vand.u32 %v103, 4294901760
    %1046 = vmatmul.f32.gmra.mxu0 %v1045
    %v1047 = vpop.f32.mrf.mxu0
    %v1048 = vadd.f32 %v999, %v1047
    %v1049 = vand.u32 %v106, 4294901760
    %1050 = vmatmul.f32.gmra.mxu0 %v1049
    %v1051 = vpop.f32.mrf.mxu0
    %v1052 = vadd.f32 %v1007, %v1051
    %1053 = vdwg.mxu0
    %1054 = vmatpush.msra.mxu0 0.0
    %1055 = vmatpush.msra.mxu0 0.0
    %1056 = vmatpush.msra.mxu0 0.0
    %1057 = vmatpush.msra.mxu0 0.0
    %1058 = vmatpush.msra.mxu0 0.0
    %1059 = vmatpush.msra.mxu0 0.0
    %1060 = vmatpush.msra.mxu0 0.0
    %1061 = vmatpush.msra.mxu0 0.0
    %1062 = vmatpush.msra.mxu0 0.0
    %1063 = vmatpush.msra.mxu0 0.0
    %1064 = vmatpush.msra.mxu0 0.0
    %1065 = vmatpush.msra.mxu0 0.0
    %v1066 = vand.u32 %v99, 4294901760
    %v1067 = vsub.f32 %v99, %v1066
    %1068 = vmatpush.msra.mxu0 %v1067
    %v1069 = vand.u32 %v92, 4294901760
    %v1070 = vsub.f32 %v92, %v1069
    %1071 = vmatpush.msra.mxu0 %v1070
    %v1072 = vand.u32 %v85, 4294901760
    %v1073 = vsub.f32 %v85, %v1072
    %1074 = vmatpush.msra.mxu0 %v1073
    %v1075 = vand.u32 %v78, 4294901760
    %v1076 = vsub.f32 %v78, %v1075
    %1077 = vmatpush.msra.mxu0 %v1076
    %v1078 = vand.u32 %v103, 4294901760
    %v1079 = vsub.f32 %v103, %v1078
    %1080 = vmatmul.f32.gmra.mxu0 %v1079
    %v1081 = vpop.f32.mrf.mxu0
    %v1082 = vadd.f32 %v1048, %v1081
    %v1083 = vand.u32 %v106, 4294901760
    %v1084 = vsub.f32 %v106, %v1083
    %1085 = vmatmul.f32.gmra.mxu0 %v1084
    %v1086 = vpop.f32.mrf.mxu0
    %v1087 = vadd.f32 %v1052, %v1086
    %1088 = vdwg.mxu0
    %1089 = vmatpush.msra.mxu0 0.0
    %1090 = vmatpush.msra.mxu0 0.0
    %1091 = vmatpush.msra.mxu0 0.0
    %1092 = vmatpush.msra.mxu0 0.0
    %1093 = vmatpush.msra.mxu0 0.0
    %1094 = vmatpush.msra.mxu0 0.0
    %1095 = vmatpush.msra.mxu0 0.0
    %1096 = vmatpush.msra.mxu0 0.0
    %1097 = vmatpush.msra.mxu0 0.0
    %1098 = vmatpush.msra.mxu0 0.0
    %1099 = vmatpush.msra.mxu0 0.0
    %1100 = vmatpush.msra.mxu0 0.0
    %v1101 = vand.u32 %v99, 4294901760
    %1102 = vmatpush.msra.mxu0 %v1101
    %v1103 = vand.u32 %v92, 4294901760
    %1104 = vmatpush.msra.mxu0 %v1103
    %v1105 = vand.u32 %v85, 4294901760
    %1106 = vmatpush.msra.mxu0 %v1105
    %v1107 = vand.u32 %v78, 4294901760
    %1108 = vmatpush.msra.mxu0 %v1107
    %v1109 = vand.u32 %v103, 4294901760
    %v1110 = vsub.f32 %v103, %v1109
    %v1111 = vand.u32 %v1110, 4294901760
    %1112 = vmatmul.f32.gmra.mxu0 %v1111
    %v1113 = vpop.f32.mrf.mxu0
    %v1114 = vadd.f32 %v1082, %v1113
    %v1115 = vand.u32 %v106, 4294901760
    %v1116 = vsub.f32 %v106, %v1115
    %v1117 = vand.u32 %v1116, 4294901760
    %1118 = vmatmul.f32.gmra.mxu0 %v1117
    %v1119 = vpop.f32.mrf.mxu0
    %v1120 = vadd.f32 %v1087, %v1119
    %1121 = vdwg.mxu0
    %1122 = vmatpush.msra.mxu0 0.0
    %1123 = vmatpush.msra.mxu0 0.0
    %1124 = vmatpush.msra.mxu0 0.0
    %1125 = vmatpush.msra.mxu0 0.0
    %1126 = vmatpush.msra.mxu0 0.0
    %1127 = vmatpush.msra.mxu0 0.0
    %1128 = vmatpush.msra.mxu0 0.0
    %1129 = vmatpush.msra.mxu0 0.0
    %1130 = vmatpush.msra.mxu0 0.0
    %1131 = vmatpush.msra.mxu0 0.0
    %1132 = vmatpush.msra.mxu0 0.0
    %1133 = vmatpush.msra.mxu0 0.0
    %v1134 = vand.u32 %v99, 4294901760
    %v1135 = vsub.f32 %v99, %v1134
    %v1136 = vand.u32 %v1135, 4294901760
    %1137 = vmatpush.msra.mxu0 %v1136
    %v1138 = vand.u32 %v92, 4294901760
    %v1139 = vsub.f32 %v92, %v1138
    %v1140 = vand.u32 %v1139, 4294901760
    %1141 = vmatpush.msra.mxu0 %v1140
    %v1142 = vand.u32 %v85, 4294901760
    %v1143 = vsub.f32 %v85, %v1142
    %v1144 = vand.u32 %v1143, 4294901760
    %1145 = vmatpush.msra.mxu0 %v1144
    %v1146 = vand.u32 %v78, 4294901760
    %v1147 = vsub.f32 %v78, %v1146
    %v1148 = vand.u32 %v1147, 4294901760
    %1149 = vmatpush.msra.mxu0 %v1148
    %v1150 = vand.u32 %v103, 4294901760
    %1151 = vmatmul.f32.gmra.mxu0 %v1150
    %v1152 = vpop.f32.mrf.mxu0
    %v1153 = vadd.f32 %v1114, %v1152
    %v1154 = vand.u32 %v106, 4294901760
    %1155 = vmatmul.f32.gmra.mxu0 %v1154
    %v1156 = vpop.f32.mrf.mxu0
    %v1157 = vadd.f32 %v1120, %v1156
    %1158 = vdwg.mxu0
    %1159 = vmatpush.msra.mxu0 0.0
    %1160 = vmatpush.msra.mxu0 0.0
    %1161 = vmatpush.msra.mxu0 0.0
    %1162 = vmatpush.msra.mxu0 0.0
    %1163 = vmatpush.msra.mxu0 0.0
    %1164 = vmatpush.msra.mxu0 0.0
    %1165 = vmatpush.msra.mxu0 0.0
    %1166 = vmatpush.msra.mxu0 0.0
    %1167 = vmatpush.msra.mxu0 0.0
    %1168 = vmatpush.msra.mxu0 0.0
    %1169 = vmatpush.msra.mxu0 0.0
    %1170 = vmatpush.msra.mxu0 0.0
    %v1171 = vand.u32 %v99, 4294901760
    %1172 = vmatpush.msra.mxu0 %v1171
    %v1173 = vand.u32 %v92, 4294901760
    %1174 = vmatpush.msra.mxu0 %v1173
    %v1175 = vand.u32 %v85, 4294901760
    %1176 = vmatpush.msra.mxu0 %v1175
    %v1177 = vand.u32 %v78, 4294901760
    %1178 = vmatpush.msra.mxu0 %v1177
    %v1179 = vand.u32 %v103, 4294901760
    %1180 = vmatmul.f32.gmra.mxu0 %v1179
    %v1181 = vpop.f32.mrf.mxu0
    %v1182 = vadd.f32 %v1153, %v1181
    %v1183 = vand.u32 %v106, 4294901760
    %1184 = vmatmul.f32.gmra.mxu0 %v1183
    %v1185 = vpop.f32.mrf.mxu0
    %v1186 = vadd.f32 %v1157, %v1185
    %1187 = vdwg.mxu0
    %1188 = vmatpush.msra.mxu0 0.0
    %1189 = vmatpush.msra.mxu0 0.0
    %1190 = vmatpush.msra.mxu0 0.0
    %1191 = vmatpush.msra.mxu0 0.0
    %1192 = vmatpush.msra.mxu0 0.0
    %1193 = vmatpush.msra.mxu0 0.0
    %1194 = vmatpush.msra.mxu0 0.0
    %1195 = vmatpush.msra.mxu0 0.0
    %1196 = vmatpush.msra.mxu0 0.0
    %1197 = vmatpush.msra.mxu0 0.0
    %1198 = vmatpush.msra.mxu0 0.0
    %1199 = vmatpush.msra.mxu0 0.0
    %v1200 = vand.u32 %v100, 4294901760
    %1201 = vmatpush.msra.mxu0 %v1200
    %v1202 = vand.u32 %v93, 4294901760
    %1203 = vmatpush.msra.mxu0 %v1202
    %v1204 = vand.u32 %v86, 4294901760
    %1205 = vmatpush.msra.mxu0 %v1204
    %v1206 = vand.u32 %v79, 4294901760
    %1207 = vmatpush.msra.mxu0 %v1206
    %v1208 = vand.u32 %v103, 4294901760
    %v1209 = vsub.f32 %v103, %v1208
    %v1210 = vand.u32 %v1209, 4294901760
    %v1211 = vsub.f32 %v1209, %v1210
    %v1212 = vand.u32 %v1211, 4294901760
    %1213 = vmatmul.f32.gmra.mxu0 %v1212
    %v1214 = vpop.f32.mrf.mxu0
    %v1215 = vadd.f32 0.0, %v1214
    %v1216 = vand.u32 %v106, 4294901760
    %v1217 = vsub.f32 %v106, %v1216
    %v1218 = vand.u32 %v1217, 4294901760
    %v1219 = vsub.f32 %v1217, %v1218
    %v1220 = vand.u32 %v1219, 4294901760
    %1221 = vmatmul.f32.gmra.mxu0 %v1220
    %v1222 = vpop.f32.mrf.mxu0
    %v1223 = vadd.f32 0.0, %v1222
    %1224 = vdwg.mxu0
    %1225 = vmatpush.msra.mxu0 0.0
    %1226 = vmatpush.msra.mxu0 0.0
    %1227 = vmatpush.msra.mxu0 0.0
    %1228 = vmatpush.msra.mxu0 0.0
    %1229 = vmatpush.msra.mxu0 0.0
    %1230 = vmatpush.msra.mxu0 0.0
    %1231 = vmatpush.msra.mxu0 0.0
    %1232 = vmatpush.msra.mxu0 0.0
    %1233 = vmatpush.msra.mxu0 0.0
    %1234 = vmatpush.msra.mxu0 0.0
    %1235 = vmatpush.msra.mxu0 0.0
    %1236 = vmatpush.msra.mxu0 0.0
    %v1237 = vand.u32 %v100, 4294901760
    %v1238 = vsub.f32 %v100, %v1237
    %v1239 = vand.u32 %v1238, 4294901760
    %v1240 = vsub.f32 %v1238, %v1239
    %v1241 = vand.u32 %v1240, 4294901760
    %1242 = vmatpush.msra.mxu0 %v1241
    %v1243 = vand.u32 %v93, 4294901760
    %v1244 = vsub.f32 %v93, %v1243
    %v1245 = vand.u32 %v1244, 4294901760
    %v1246 = vsub.f32 %v1244, %v1245
    %v1247 = vand.u32 %v1246, 4294901760
    %1248 = vmatpush.msra.mxu0 %v1247
    %v1249 = vand.u32 %v86, 4294901760
    %v1250 = vsub.f32 %v86, %v1249
    %v1251 = vand.u32 %v1250, 4294901760
    %v1252 = vsub.f32 %v1250, %v1251
    %v1253 = vand.u32 %v1252, 4294901760
    %1254 = vmatpush.msra.mxu0 %v1253
    %v1255 = vand.u32 %v79, 4294901760
    %v1256 = vsub.f32 %v79, %v1255
    %v1257 = vand.u32 %v1256, 4294901760
    %v1258 = vsub.f32 %v1256, %v1257
    %v1259 = vand.u32 %v1258, 4294901760
    %1260 = vmatpush.msra.mxu0 %v1259
    %v1261 = vand.u32 %v103, 4294901760
    %1262 = vmatmul.f32.gmra.mxu0 %v1261
    %v1263 = vpop.f32.mrf.mxu0
    %v1264 = vadd.f32 %v1215, %v1263
    %v1265 = vand.u32 %v106, 4294901760
    %1266 = vmatmul.f32.gmra.mxu0 %v1265
    %v1267 = vpop.f32.mrf.mxu0
    %v1268 = vadd.f32 %v1223, %v1267
    %1269 = vdwg.mxu0
    %1270 = vmatpush.msra.mxu0 0.0
    %1271 = vmatpush.msra.mxu0 0.0
    %1272 = vmatpush.msra.mxu0 0.0
    %1273 = vmatpush.msra.mxu0 0.0
    %1274 = vmatpush.msra.mxu0 0.0
    %1275 = vmatpush.msra.mxu0 0.0
    %1276 = vmatpush.msra.mxu0 0.0
    %1277 = vmatpush.msra.mxu0 0.0
    %1278 = vmatpush.msra.mxu0 0.0
    %1279 = vmatpush.msra.mxu0 0.0
    %1280 = vmatpush.msra.mxu0 0.0
    %1281 = vmatpush.msra.mxu0 0.0
    %v1282 = vand.u32 %v100, 4294901760
    %v1283 = vsub.f32 %v100, %v1282
    %1284 = vmatpush.msra.mxu0 %v1283
    %v1285 = vand.u32 %v93, 4294901760
    %v1286 = vsub.f32 %v93, %v1285
    %1287 = vmatpush.msra.mxu0 %v1286
    %v1288 = vand.u32 %v86, 4294901760
    %v1289 = vsub.f32 %v86, %v1288
    %1290 = vmatpush.msra.mxu0 %v1289
    %v1291 = vand.u32 %v79, 4294901760
    %v1292 = vsub.f32 %v79, %v1291
    %1293 = vmatpush.msra.mxu0 %v1292
    %v1294 = vand.u32 %v103, 4294901760
    %v1295 = vsub.f32 %v103, %v1294
    %1296 = vmatmul.f32.gmra.mxu0 %v1295
    %v1297 = vpop.f32.mrf.mxu0
    %v1298 = vadd.f32 %v1264, %v1297
    %v1299 = vand.u32 %v106, 4294901760
    %v1300 = vsub.f32 %v106, %v1299
    %1301 = vmatmul.f32.gmra.mxu0 %v1300
    %v1302 = vpop.f32.mrf.mxu0
    %v1303 = vadd.f32 %v1268, %v1302
    %1304 = vdwg.mxu0
    %1305 = vmatpush.msra.mxu0 0.0
    %1306 = vmatpush.msra.mxu0 0.0
    %1307 = vmatpush.msra.mxu0 0.0
    %1308 = vmatpush.msra.mxu0 0.0
    %1309 = vmatpush.msra.mxu0 0.0
    %1310 = vmatpush.msra.mxu0 0.0
    %1311 = vmatpush.msra.mxu0 0.0
    %1312 = vmatpush.msra.mxu0 0.0
    %1313 = vmatpush.msra.mxu0 0.0
    %1314 = vmatpush.msra.mxu0 0.0
    %1315 = vmatpush.msra.mxu0 0.0
    %1316 = vmatpush.msra.mxu0 0.0
    %v1317 = vand.u32 %v100, 4294901760
    %1318 = vmatpush.msra.mxu0 %v1317
    %v1319 = vand.u32 %v93, 4294901760
    %1320 = vmatpush.msra.mxu0 %v1319
    %v1321 = vand.u32 %v86, 4294901760
    %1322 = vmatpush.msra.mxu0 %v1321
    %v1323 = vand.u32 %v79, 4294901760
    %1324 = vmatpush.msra.mxu0 %v1323
    %v1325 = vand.u32 %v103, 4294901760
    %v1326 = vsub.f32 %v103, %v1325
    %v1327 = vand.u32 %v1326, 4294901760
    %1328 = vmatmul.f32.gmra.mxu0 %v1327
    %v1329 = vpop.f32.mrf.mxu0
    %v1330 = vadd.f32 %v1298, %v1329
    %v1331 = vand.u32 %v106, 4294901760
    %v1332 = vsub.f32 %v106, %v1331
    %v1333 = vand.u32 %v1332, 4294901760
    %1334 = vmatmul.f32.gmra.mxu0 %v1333
    %v1335 = vpop.f32.mrf.mxu0
    %v1336 = vadd.f32 %v1303, %v1335
    %1337 = vdwg.mxu0
    %1338 = vmatpush.msra.mxu0 0.0
    %1339 = vmatpush.msra.mxu0 0.0
    %1340 = vmatpush.msra.mxu0 0.0
    %1341 = vmatpush.msra.mxu0 0.0
    %1342 = vmatpush.msra.mxu0 0.0
    %1343 = vmatpush.msra.mxu0 0.0
    %1344 = vmatpush.msra.mxu0 0.0
    %1345 = vmatpush.msra.mxu0 0.0
    %1346 = vmatpush.msra.mxu0 0.0
    %1347 = vmatpush.msra.mxu0 0.0
    %1348 = vmatpush.msra.mxu0 0.0
    %1349 = vmatpush.msra.mxu0 0.0
    %v1350 = vand.u32 %v100, 4294901760
    %v1351 = vsub.f32 %v100, %v1350
    %v1352 = vand.u32 %v1351, 4294901760
    %1353 = vmatpush.msra.mxu0 %v1352
    %v1354 = vand.u32 %v93, 4294901760
    %v1355 = vsub.f32 %v93, %v1354
    %v1356 = vand.u32 %v1355, 4294901760
    %1357 = vmatpush.msra.mxu0 %v1356
    %v1358 = vand.u32 %v86, 4294901760
    %v1359 = vsub.f32 %v86, %v1358
    %v1360 = vand.u32 %v1359, 4294901760
    %1361 = vmatpush.msra.mxu0 %v1360
    %v1362 = vand.u32 %v79, 4294901760
    %v1363 = vsub.f32 %v79, %v1362
    %v1364 = vand.u32 %v1363, 4294901760
    %1365 = vmatpush.msra.mxu0 %v1364
    %v1366 = vand.u32 %v103, 4294901760
    %1367 = vmatmul.f32.gmra.mxu0 %v1366
    %v1368 = vpop.f32.mrf.mxu0
    %v1369 = vadd.f32 %v1330, %v1368
    %v1370 = vand.u32 %v106, 4294901760
    %1371 = vmatmul.f32.gmra.mxu0 %v1370
    %v1372 = vpop.f32.mrf.mxu0
    %v1373 = vadd.f32 %v1336, %v1372
    %1374 = vdwg.mxu0
    %1375 = vmatpush.msra.mxu0 0.0
    %1376 = vmatpush.msra.mxu0 0.0
    %1377 = vmatpush.msra.mxu0 0.0
    %1378 = vmatpush.msra.mxu0 0.0
    %1379 = vmatpush.msra.mxu0 0.0
    %1380 = vmatpush.msra.mxu0 0.0
    %1381 = vmatpush.msra.mxu0 0.0
    %1382 = vmatpush.msra.mxu0 0.0
    %1383 = vmatpush.msra.mxu0 0.0
    %1384 = vmatpush.msra.mxu0 0.0
    %1385 = vmatpush.msra.mxu0 0.0
    %1386 = vmatpush.msra.mxu0 0.0
    %v1387 = vand.u32 %v100, 4294901760
    %1388 = vmatpush.msra.mxu0 %v1387
    %v1389 = vand.u32 %v93, 4294901760
    %1390 = vmatpush.msra.mxu0 %v1389
    %v1391 = vand.u32 %v86, 4294901760
    %1392 = vmatpush.msra.mxu0 %v1391
    %v1393 = vand.u32 %v79, 4294901760
    %1394 = vmatpush.msra.mxu0 %v1393
    %v1395 = vand.u32 %v103, 4294901760
    %1396 = vmatmul.f32.gmra.mxu0 %v1395
    %v1397 = vpop.f32.mrf.mxu0
    %v1398 = vadd.f32 %v1369, %v1397
    %v1399 = vand.u32 %v106, 4294901760
    %1400 = vmatmul.f32.gmra.mxu0 %v1399
    %v1401 = vpop.f32.mrf.mxu0
    %v1402 = vadd.f32 %v1373, %v1401
    %1403 = vdwg.mxu0
    %1404 = vmatpush.msra.mxu0 0.0
    %1405 = vmatpush.msra.mxu0 0.0
    %1406 = vmatpush.msra.mxu0 0.0
    %1407 = vmatpush.msra.mxu0 0.0
    %1408 = vmatpush.msra.mxu0 0.0
    %1409 = vmatpush.msra.mxu0 0.0
    %1410 = vmatpush.msra.mxu0 0.0
    %1411 = vmatpush.msra.mxu0 0.0
    %1412 = vmatpush.msra.mxu0 0.0
    %1413 = vmatpush.msra.mxu0 0.0
    %1414 = vmatpush.msra.mxu0 0.0
    %1415 = vmatpush.msra.mxu0 0.0
    %v1416 = vand.u32 %v101, 4294901760
    %1417 = vmatpush.msra.mxu0 %v1416
    %v1418 = vand.u32 %v94, 4294901760
    %1419 = vmatpush.msra.mxu0 %v1418
    %v1420 = vand.u32 %v87, 4294901760
    %1421 = vmatpush.msra.mxu0 %v1420
    %v1422 = vand.u32 %v80, 4294901760
    %1423 = vmatpush.msra.mxu0 %v1422
    %v1424 = vand.u32 %v103, 4294901760
    %v1425 = vsub.f32 %v103, %v1424
    %v1426 = vand.u32 %v1425, 4294901760
    %v1427 = vsub.f32 %v1425, %v1426
    %v1428 = vand.u32 %v1427, 4294901760
    %1429 = vmatmul.f32.gmra.mxu0 %v1428
    %v1430 = vpop.f32.mrf.mxu0
    %v1431 = vadd.f32 0.0, %v1430
    %v1432 = vand.u32 %v106, 4294901760
    %v1433 = vsub.f32 %v106, %v1432
    %v1434 = vand.u32 %v1433, 4294901760
    %v1435 = vsub.f32 %v1433, %v1434
    %v1436 = vand.u32 %v1435, 4294901760
    %1437 = vmatmul.f32.gmra.mxu0 %v1436
    %v1438 = vpop.f32.mrf.mxu0
    %v1439 = vadd.f32 0.0, %v1438
    %1440 = vdwg.mxu0
    %1441 = vmatpush.msra.mxu0 0.0
    %1442 = vmatpush.msra.mxu0 0.0
    %1443 = vmatpush.msra.mxu0 0.0
    %1444 = vmatpush.msra.mxu0 0.0
    %1445 = vmatpush.msra.mxu0 0.0
    %1446 = vmatpush.msra.mxu0 0.0
    %1447 = vmatpush.msra.mxu0 0.0
    %1448 = vmatpush.msra.mxu0 0.0
    %1449 = vmatpush.msra.mxu0 0.0
    %1450 = vmatpush.msra.mxu0 0.0
    %1451 = vmatpush.msra.mxu0 0.0
    %1452 = vmatpush.msra.mxu0 0.0
    %v1453 = vand.u32 %v101, 4294901760
    %v1454 = vsub.f32 %v101, %v1453
    %v1455 = vand.u32 %v1454, 4294901760
    %v1456 = vsub.f32 %v1454, %v1455
    %v1457 = vand.u32 %v1456, 4294901760
    %1458 = vmatpush.msra.mxu0 %v1457
    %v1459 = vand.u32 %v94, 4294901760
    %v1460 = vsub.f32 %v94, %v1459
    %v1461 = vand.u32 %v1460, 4294901760
    %v1462 = vsub.f32 %v1460, %v1461
    %v1463 = vand.u32 %v1462, 4294901760
    %1464 = vmatpush.msra.mxu0 %v1463
    %v1465 = vand.u32 %v87, 4294901760
    %v1466 = vsub.f32 %v87, %v1465
    %v1467 = vand.u32 %v1466, 4294901760
    %v1468 = vsub.f32 %v1466, %v1467
    %v1469 = vand.u32 %v1468, 4294901760
    %1470 = vmatpush.msra.mxu0 %v1469
    %v1471 = vand.u32 %v80, 4294901760
    %v1472 = vsub.f32 %v80, %v1471
    %v1473 = vand.u32 %v1472, 4294901760
    %v1474 = vsub.f32 %v1472, %v1473
    %v1475 = vand.u32 %v1474, 4294901760
    %1476 = vmatpush.msra.mxu0 %v1475
    %v1477 = vand.u32 %v103, 4294901760
    %1478 = vmatmul.f32.gmra.mxu0 %v1477
    %v1479 = vpop.f32.mrf.mxu0
    %v1480 = vadd.f32 %v1431, %v1479
    %v1481 = vand.u32 %v106, 4294901760
    %1482 = vmatmul.f32.gmra.mxu0 %v1481
    %v1483 = vpop.f32.mrf.mxu0
    %v1484 = vadd.f32 %v1439, %v1483
    %1485 = vdwg.mxu0
    %1486 = vmatpush.msra.mxu0 0.0
    %1487 = vmatpush.msra.mxu0 0.0
    %1488 = vmatpush.msra.mxu0 0.0
    %1489 = vmatpush.msra.mxu0 0.0
    %1490 = vmatpush.msra.mxu0 0.0
    %1491 = vmatpush.msra.mxu0 0.0
    %1492 = vmatpush.msra.mxu0 0.0
    %1493 = vmatpush.msra.mxu0 0.0
    %1494 = vmatpush.msra.mxu0 0.0
    %1495 = vmatpush.msra.mxu0 0.0
    %1496 = vmatpush.msra.mxu0 0.0
    %1497 = vmatpush.msra.mxu0 0.0
    %v1498 = vand.u32 %v101, 4294901760
    %v1499 = vsub.f32 %v101, %v1498
    %1500 = vmatpush.msra.mxu0 %v1499
    %v1501 = vand.u32 %v94, 4294901760
    %v1502 = vsub.f32 %v94, %v1501
    %1503 = vmatpush.msra.mxu0 %v1502
    %v1504 = vand.u32 %v87, 4294901760
    %v1505 = vsub.f32 %v87, %v1504
    %1506 = vmatpush.msra.mxu0 %v1505
    %v1507 = vand.u32 %v80, 4294901760
    %v1508 = vsub.f32 %v80, %v1507
    %1509 = vmatpush.msra.mxu0 %v1508
    %v1510 = vand.u32 %v103, 4294901760
    %v1511 = vsub.f32 %v103, %v1510
    %1512 = vmatmul.f32.gmra.mxu0 %v1511
    %v1513 = vpop.f32.mrf.mxu0
    %v1514 = vadd.f32 %v1480, %v1513
    %v1515 = vand.u32 %v106, 4294901760
    %v1516 = vsub.f32 %v106, %v1515
    %1517 = vmatmul.f32.gmra.mxu0 %v1516
    %v1518 = vpop.f32.mrf.mxu0
    %v1519 = vadd.f32 %v1484, %v1518
    %1520 = vdwg.mxu0
    %1521 = vmatpush.msra.mxu0 0.0
    %1522 = vmatpush.msra.mxu0 0.0
    %1523 = vmatpush.msra.mxu0 0.0
    %1524 = vmatpush.msra.mxu0 0.0
    %1525 = vmatpush.msra.mxu0 0.0
    %1526 = vmatpush.msra.mxu0 0.0
    %1527 = vmatpush.msra.mxu0 0.0
    %1528 = vmatpush.msra.mxu0 0.0
    %1529 = vmatpush.msra.mxu0 0.0
    %1530 = vmatpush.msra.mxu0 0.0
    %1531 = vmatpush.msra.mxu0 0.0
    %1532 = vmatpush.msra.mxu0 0.0
    %v1533 = vand.u32 %v101, 4294901760
    %1534 = vmatpush.msra.mxu0 %v1533
    %v1535 = vand.u32 %v94, 4294901760
    %1536 = vmatpush.msra.mxu0 %v1535
    %v1537 = vand.u32 %v87, 4294901760
    %1538 = vmatpush.msra.mxu0 %v1537
    %v1539 = vand.u32 %v80, 4294901760
    %1540 = vmatpush.msra.mxu0 %v1539
    %v1541 = vand.u32 %v103, 4294901760
    %v1542 = vsub.f32 %v103, %v1541
    %v1543 = vand.u32 %v1542, 4294901760
    %1544 = vmatmul.f32.gmra.mxu0 %v1543
    %v1545 = vpop.f32.mrf.mxu0
    %v1546 = vadd.f32 %v1514, %v1545
    %v1547 = vand.u32 %v106, 4294901760
    %v1548 = vsub.f32 %v106, %v1547
    %v1549 = vand.u32 %v1548, 4294901760
    %1550 = vmatmul.f32.gmra.mxu0 %v1549
    %v1551 = vpop.f32.mrf.mxu0
    %v1552 = vadd.f32 %v1519, %v1551
    %1553 = vdwg.mxu0
    %1554 = vmatpush.msra.mxu0 0.0
    %1555 = vmatpush.msra.mxu0 0.0
    %1556 = vmatpush.msra.mxu0 0.0
    %1557 = vmatpush.msra.mxu0 0.0
    %1558 = vmatpush.msra.mxu0 0.0
    %1559 = vmatpush.msra.mxu0 0.0
    %1560 = vmatpush.msra.mxu0 0.0
    %1561 = vmatpush.msra.mxu0 0.0
    %1562 = vmatpush.msra.mxu0 0.0
    %1563 = vmatpush.msra.mxu0 0.0
    %1564 = vmatpush.msra.mxu0 0.0
    %1565 = vmatpush.msra.mxu0 0.0
    %v1566 = vand.u32 %v101, 4294901760
    %v1567 = vsub.f32 %v101, %v1566
    %v1568 = vand.u32 %v1567, 4294901760
    %1569 = vmatpush.msra.mxu0 %v1568
    %v1570 = vand.u32 %v94, 4294901760
    %v1571 = vsub.f32 %v94, %v1570
    %v1572 = vand.u32 %v1571, 4294901760
    %1573 = vmatpush.msra.mxu0 %v1572
    %v1574 = vand.u32 %v87, 4294901760
    %v1575 = vsub.f32 %v87, %v1574
    %v1576 = vand.u32 %v1575, 4294901760
    %1577 = vmatpush.msra.mxu0 %v1576
    %v1578 = vand.u32 %v80, 4294901760
    %v1579 = vsub.f32 %v80, %v1578
    %v1580 = vand.u32 %v1579, 4294901760
    %1581 = vmatpush.msra.mxu0 %v1580
    %v1582 = vand.u32 %v103, 4294901760
    %1583 = vmatmul.f32.gmra.mxu0 %v1582
    %v1584 = vpop.f32.mrf.mxu0
    %v1585 = vadd.f32 %v1546, %v1584
    %v1586 = vand.u32 %v106, 4294901760
    %1587 = vmatmul.f32.gmra.mxu0 %v1586
    %v1588 = vpop.f32.mrf.mxu0
    %v1589 = vadd.f32 %v1552, %v1588
    %1590 = vdwg.mxu0
    %1591 = vmatpush.msra.mxu0 0.0
    %1592 = vmatpush.msra.mxu0 0.0
    %1593 = vmatpush.msra.mxu0 0.0
    %1594 = vmatpush.msra.mxu0 0.0
    %1595 = vmatpush.msra.mxu0 0.0
    %1596 = vmatpush.msra.mxu0 0.0
    %1597 = vmatpush.msra.mxu0 0.0
    %1598 = vmatpush.msra.mxu0 0.0
    %1599 = vmatpush.msra.mxu0 0.0
    %1600 = vmatpush.msra.mxu0 0.0
    %1601 = vmatpush.msra.mxu0 0.0
    %1602 = vmatpush.msra.mxu0 0.0
    %v1603 = vand.u32 %v101, 4294901760
    %1604 = vmatpush.msra.mxu0 %v1603
    %v1605 = vand.u32 %v94, 4294901760
    %1606 = vmatpush.msra.mxu0 %v1605
    %v1607 = vand.u32 %v87, 4294901760
    %1608 = vmatpush.msra.mxu0 %v1607
    %v1609 = vand.u32 %v80, 4294901760
    %1610 = vmatpush.msra.mxu0 %v1609
    %v1611 = vand.u32 %v103, 4294901760
    %1612 = vmatmul.f32.gmra.mxu0 %v1611
    %v1613 = vpop.f32.mrf.mxu0
    %v1614 = vadd.f32 %v1585, %v1613
    %v1615 = vand.u32 %v106, 4294901760
    %1616 = vmatmul.f32.gmra.mxu0 %v1615
    %v1617 = vpop.f32.mrf.mxu0
    %v1618 = vadd.f32 %v1589, %v1617
    %1619 = vdwg.mxu0
    %v1620 = vld [vmem:[%s1] sm:$0xff]
    %v1621 = vld [vmem:[%s1 + $0x8] sm:$0xff]
    %v1622 = vld [vmem:[%s1 + $0x10] sm:$0xff]
    %v1623 = vld [vmem:[%s1 + $0x18] sm:$0xff]
    %v1624 = vld [vmem:[%s2] sm:$0xff]
    %v1625 = vld [vmem:[%s2 + $0x8] sm:$0xff]
    %v1626 = vld [vmem:[%s2 + $0x10] sm:$0xff]
    %v1627 = vld [vmem:[%s2 + $0x18] sm:$0xff]
    %v1628 = vmul.f32 %v318, %v1620
    %v1629 = vmul.f32 %v534, %v1621
    %v1630 = vmul.f32 %v322, %v1622
    %v1631 = vmul.f32 %v538, %v1623
    %v1632 = vmul.f32 %v750, %v1624
    %v1633 = vmul.f32 %v966, %v1625
    %v1634 = vmul.f32 %v754, %v1626
    %v1635 = vmul.f32 %v970, %v1627
    %v1636 = vadd.f32 %v1628, %v1632
    %v1637 = vadd.f32 %v1629, %v1633
    %v1638 = vadd.f32 %v1630, %v1634
    %v1639 = vadd.f32 %v1631, %v1635
    %v1640 = vmul.f32 %v1182, %v1620
    %v1641 = vmul.f32 %v1186, %v1622
    %v1642 = vmul.f32 %v1398, %v1624
    %v1643 = vmul.f32 %v1402, %v1626
    %v1644 = vadd.f32 %v1640, %v1642
    %v1645 = vadd.f32 %v1641, %v1643
    %v1646 = vld [vmem:[%s3] sm:$0xff]
    %v1647 = vld [vmem:[%s3 + $0x8] sm:$0xff]
    %vm1648 = vcmask 523264
    %v1650 = vsel %vm1648, %v1636, 0
    %v1653 = vsel %vm1648, %v1638, 0
    %v1656 = vsel %vm1648, %v1644, 0
    %v1659 = vsel %vm1648, %v1645, 0
    %1661 = vmatpush.xpose.msra.mxu0 0.0
    %1662 = vmatpush.xpose.msra.mxu0 0.0
    %1663 = vmatpush.xpose.msra.mxu0 0.0
    %1664 = vmatpush.xpose.msra.mxu0 0.0
    %1665 = vmatpush.xpose.msra.mxu0 0.0
    %1666 = vmatpush.xpose.msra.mxu0 0.0
    %1667 = vmatpush.xpose.msra.mxu0 0.0
    %1668 = vmatpush.xpose.msra.mxu0 0.0
    %1669 = vmatpush.xpose.msra.mxu0 0.0
    %1670 = vmatpush.xpose.msra.mxu0 0.0
    %1671 = vmatpush.xpose.msra.mxu0 0.0
    %1672 = vmatpush.xpose.msra.mxu0 0.0
    %1673 = vmatpush.xpose.msra.mxu0 0.0
    %1674 = vmatpush.xpose.msra.mxu0 0.0
    %v1675 = vand.u32 %v1659, 4294901760
    %1676 = vmatpush.xpose.msra.mxu0 %v1675
    %v1677 = vand.u32 %v1656, 4294901760
    %1678 = vmatpush.xpose.msra.mxu0 %v1677
    %v1679 = vand.u32 %v1650, 4294901760
    %v1680 = vsub.f32 %v1650, %v1679
    %v1681 = vand.u32 %v1680, 4294901760
    %v1682 = vsub.f32 %v1680, %v1681
    %v1683 = vand.u32 %v1682, 4294901760
    %1684 = vmatmul.f32.gmra.mxu0 %v1683
    %v1685 = vpop.f32.mrf.mxu0
    %v1686 = vadd.f32 %v1646, %v1685
    %v1687 = vand.u32 %v1653, 4294901760
    %v1688 = vsub.f32 %v1653, %v1687
    %v1689 = vand.u32 %v1688, 4294901760
    %v1690 = vsub.f32 %v1688, %v1689
    %v1691 = vand.u32 %v1690, 4294901760
    %1692 = vmatmul.f32.gmra.mxu0 %v1691
    %v1693 = vpop.f32.mrf.mxu0
    %v1694 = vadd.f32 %v1647, %v1693
    %1695 = vdwg.mxu0
    %1696 = vmatpush.xpose.msra.mxu0 0.0
    %1697 = vmatpush.xpose.msra.mxu0 0.0
    %1698 = vmatpush.xpose.msra.mxu0 0.0
    %1699 = vmatpush.xpose.msra.mxu0 0.0
    %1700 = vmatpush.xpose.msra.mxu0 0.0
    %1701 = vmatpush.xpose.msra.mxu0 0.0
    %1702 = vmatpush.xpose.msra.mxu0 0.0
    %1703 = vmatpush.xpose.msra.mxu0 0.0
    %1704 = vmatpush.xpose.msra.mxu0 0.0
    %1705 = vmatpush.xpose.msra.mxu0 0.0
    %1706 = vmatpush.xpose.msra.mxu0 0.0
    %1707 = vmatpush.xpose.msra.mxu0 0.0
    %1708 = vmatpush.xpose.msra.mxu0 0.0
    %1709 = vmatpush.xpose.msra.mxu0 0.0
    %v1710 = vand.u32 %v1659, 4294901760
    %v1711 = vsub.f32 %v1659, %v1710
    %v1712 = vand.u32 %v1711, 4294901760
    %v1713 = vsub.f32 %v1711, %v1712
    %v1714 = vand.u32 %v1713, 4294901760
    %1715 = vmatpush.xpose.msra.mxu0 %v1714
    %v1716 = vand.u32 %v1656, 4294901760
    %v1717 = vsub.f32 %v1656, %v1716
    %v1718 = vand.u32 %v1717, 4294901760
    %v1719 = vsub.f32 %v1717, %v1718
    %v1720 = vand.u32 %v1719, 4294901760
    %1721 = vmatpush.xpose.msra.mxu0 %v1720
    %v1722 = vand.u32 %v1650, 4294901760
    %1723 = vmatmul.f32.gmra.mxu0 %v1722
    %v1724 = vpop.f32.mrf.mxu0
    %v1725 = vadd.f32 %v1686, %v1724
    %v1726 = vand.u32 %v1653, 4294901760
    %1727 = vmatmul.f32.gmra.mxu0 %v1726
    %v1728 = vpop.f32.mrf.mxu0
    %v1729 = vadd.f32 %v1694, %v1728
    %1730 = vdwg.mxu0
    %1731 = vmatpush.xpose.msra.mxu0 0.0
    %1732 = vmatpush.xpose.msra.mxu0 0.0
    %1733 = vmatpush.xpose.msra.mxu0 0.0
    %1734 = vmatpush.xpose.msra.mxu0 0.0
    %1735 = vmatpush.xpose.msra.mxu0 0.0
    %1736 = vmatpush.xpose.msra.mxu0 0.0
    %1737 = vmatpush.xpose.msra.mxu0 0.0
    %1738 = vmatpush.xpose.msra.mxu0 0.0
    %1739 = vmatpush.xpose.msra.mxu0 0.0
    %1740 = vmatpush.xpose.msra.mxu0 0.0
    %1741 = vmatpush.xpose.msra.mxu0 0.0
    %1742 = vmatpush.xpose.msra.mxu0 0.0
    %1743 = vmatpush.xpose.msra.mxu0 0.0
    %1744 = vmatpush.xpose.msra.mxu0 0.0
    %v1745 = vand.u32 %v1659, 4294901760
    %v1746 = vsub.f32 %v1659, %v1745
    %1747 = vmatpush.xpose.msra.mxu0 %v1746
    %v1748 = vand.u32 %v1656, 4294901760
    %v1749 = vsub.f32 %v1656, %v1748
    %1750 = vmatpush.xpose.msra.mxu0 %v1749
    %v1751 = vand.u32 %v1650, 4294901760
    %v1752 = vsub.f32 %v1650, %v1751
    %1753 = vmatmul.f32.gmra.mxu0 %v1752
    %v1754 = vpop.f32.mrf.mxu0
    %v1755 = vadd.f32 %v1725, %v1754
    %v1756 = vand.u32 %v1653, 4294901760
    %v1757 = vsub.f32 %v1653, %v1756
    %1758 = vmatmul.f32.gmra.mxu0 %v1757
    %v1759 = vpop.f32.mrf.mxu0
    %v1760 = vadd.f32 %v1729, %v1759
    %1761 = vdwg.mxu0
    %1762 = vmatpush.xpose.msra.mxu0 0.0
    %1763 = vmatpush.xpose.msra.mxu0 0.0
    %1764 = vmatpush.xpose.msra.mxu0 0.0
    %1765 = vmatpush.xpose.msra.mxu0 0.0
    %1766 = vmatpush.xpose.msra.mxu0 0.0
    %1767 = vmatpush.xpose.msra.mxu0 0.0
    %1768 = vmatpush.xpose.msra.mxu0 0.0
    %1769 = vmatpush.xpose.msra.mxu0 0.0
    %1770 = vmatpush.xpose.msra.mxu0 0.0
    %1771 = vmatpush.xpose.msra.mxu0 0.0
    %1772 = vmatpush.xpose.msra.mxu0 0.0
    %1773 = vmatpush.xpose.msra.mxu0 0.0
    %1774 = vmatpush.xpose.msra.mxu0 0.0
    %1775 = vmatpush.xpose.msra.mxu0 0.0
    %v1776 = vand.u32 %v1659, 4294901760
    %1777 = vmatpush.xpose.msra.mxu0 %v1776
    %v1778 = vand.u32 %v1656, 4294901760
    %1779 = vmatpush.xpose.msra.mxu0 %v1778
    %v1780 = vand.u32 %v1650, 4294901760
    %v1781 = vsub.f32 %v1650, %v1780
    %v1782 = vand.u32 %v1781, 4294901760
    %1783 = vmatmul.f32.gmra.mxu0 %v1782
    %v1784 = vpop.f32.mrf.mxu0
    %v1785 = vadd.f32 %v1755, %v1784
    %v1786 = vand.u32 %v1653, 4294901760
    %v1787 = vsub.f32 %v1653, %v1786
    %v1788 = vand.u32 %v1787, 4294901760
    %1789 = vmatmul.f32.gmra.mxu0 %v1788
    %v1790 = vpop.f32.mrf.mxu0
    %v1791 = vadd.f32 %v1760, %v1790
    %1792 = vdwg.mxu0
    %1793 = vmatpush.xpose.msra.mxu0 0.0
    %1794 = vmatpush.xpose.msra.mxu0 0.0
    %1795 = vmatpush.xpose.msra.mxu0 0.0
    %1796 = vmatpush.xpose.msra.mxu0 0.0
    %1797 = vmatpush.xpose.msra.mxu0 0.0
    %1798 = vmatpush.xpose.msra.mxu0 0.0
    %1799 = vmatpush.xpose.msra.mxu0 0.0
    %1800 = vmatpush.xpose.msra.mxu0 0.0
    %1801 = vmatpush.xpose.msra.mxu0 0.0
    %1802 = vmatpush.xpose.msra.mxu0 0.0
    %1803 = vmatpush.xpose.msra.mxu0 0.0
    %1804 = vmatpush.xpose.msra.mxu0 0.0
    %1805 = vmatpush.xpose.msra.mxu0 0.0
    %1806 = vmatpush.xpose.msra.mxu0 0.0
    %v1807 = vand.u32 %v1659, 4294901760
    %v1808 = vsub.f32 %v1659, %v1807
    %v1809 = vand.u32 %v1808, 4294901760
    %1810 = vmatpush.xpose.msra.mxu0 %v1809
    %v1811 = vand.u32 %v1656, 4294901760
    %v1812 = vsub.f32 %v1656, %v1811
    %v1813 = vand.u32 %v1812, 4294901760
    %1814 = vmatpush.xpose.msra.mxu0 %v1813
    %v1815 = vand.u32 %v1650, 4294901760
    %1816 = vmatmul.f32.gmra.mxu0 %v1815
    %v1817 = vpop.f32.mrf.mxu0
    %v1818 = vadd.f32 %v1785, %v1817
    %v1819 = vand.u32 %v1653, 4294901760
    %1820 = vmatmul.f32.gmra.mxu0 %v1819
    %v1821 = vpop.f32.mrf.mxu0
    %v1822 = vadd.f32 %v1791, %v1821
    %1823 = vdwg.mxu0
    %1824 = vmatpush.xpose.msra.mxu0 0.0
    %1825 = vmatpush.xpose.msra.mxu0 0.0
    %1826 = vmatpush.xpose.msra.mxu0 0.0
    %1827 = vmatpush.xpose.msra.mxu0 0.0
    %1828 = vmatpush.xpose.msra.mxu0 0.0
    %1829 = vmatpush.xpose.msra.mxu0 0.0
    %1830 = vmatpush.xpose.msra.mxu0 0.0
    %1831 = vmatpush.xpose.msra.mxu0 0.0
    %1832 = vmatpush.xpose.msra.mxu0 0.0
    %1833 = vmatpush.xpose.msra.mxu0 0.0
    %1834 = vmatpush.xpose.msra.mxu0 0.0
    %1835 = vmatpush.xpose.msra.mxu0 0.0
    %1836 = vmatpush.xpose.msra.mxu0 0.0
    %1837 = vmatpush.xpose.msra.mxu0 0.0
    %v1838 = vand.u32 %v1659, 4294901760
    %1839 = vmatpush.xpose.msra.mxu0 %v1838
    %v1840 = vand.u32 %v1656, 4294901760
    %1841 = vmatpush.xpose.msra.mxu0 %v1840
    %v1842 = vand.u32 %v1650, 4294901760
    %1843 = vmatmul.f32.gmra.mxu0 %v1842
    %v1844 = vpop.f32.mrf.mxu0
    %v1845 = vadd.f32 %v1818, %v1844
    %v1846 = vand.u32 %v1653, 4294901760
    %1847 = vmatmul.f32.gmra.mxu0 %v1846
    %v1848 = vpop.f32.mrf.mxu0
    %v1849 = vadd.f32 %v1822, %v1848
    %1850 = vdwg.mxu0
    %vm1851 = vcmask 130048
    %v1852 = vsel %vm1851, %v1845, -inf
    %1853 = vmax.xlane.f32.xlu0 %v1852
    %v1854 = vpop.xlane.xlu0 %1853
    %v1855 = vsel %vm1851, %v1849, -inf
    %1856 = vmax.xlane.f32.xlu0 %v1855
    %v1857 = vpop.xlane.xlu0 %1856
    %v1858 = vsub.f32 %v1845, %v1854
    %v1859 = vsub.f32 %v1849, %v1857
    %v1860 = vmul.f32 %v1858, 1.442695
    %v1861 = vpow.pop %v1860
    %v1862 = vmul.f32 %v1859, 1.442695
    %v1863 = vpow.pop %v1862
    %v1864 = vsel %vm1851, %v1861, 0.0
    %1865 = vadd.xlane.f32.xlu0 %v1864
    %v1866 = vpop.xlane.xlu0 %1865
    %v1867 = vsel %vm1851, %v1863, 0.0
    %1868 = vadd.xlane.f32.xlu0 %v1867
    %v1869 = vpop.xlane.xlu0 %1868
    %v1870 = vrcp.pop %v1866
    %v1871 = vmul.f32 %v1866, %v1870
    %v1872 = vsub.f32 1.0, %v1871
    %v1873 = vmul.f32 %v1870, %v1872
    %v1874 = vadd.f32 %v1870, %v1873
    %vm1875 = vweird.f32 %v1866
    %vm1876 = vweird.f32 %v1870
    %vm1877 = vmor %vm1875, %vm1876
    %v1878 = vsel %vm1877, %v1870, %v1874
    %v1879 = vand.u32 2147483647, %v1866
    %vm1880 = vcmp.eq.f32.partialorder %v1879, 8.507059e+37
    %v1881 = vand.u32 %v1866, 2147483648
    %v1882 = vor.u32 1.1754944e-38, %v1881
    %v1883 = vsel %vm1880, %v1882, %v1878
    %v1884 = vmul.f32 %v1861, %v1883
    %v1885 = vrcp.pop %v1869
    %v1886 = vmul.f32 %v1869, %v1885
    %v1887 = vsub.f32 1.0, %v1886
    %v1888 = vmul.f32 %v1885, %v1887
    %v1889 = vadd.f32 %v1885, %v1888
    %vm1890 = vweird.f32 %v1869
    %vm1891 = vweird.f32 %v1885
    %vm1892 = vmor %vm1890, %vm1891
    %v1893 = vsel %vm1892, %v1885, %v1889
    %v1894 = vand.u32 2147483647, %v1869
    %vm1895 = vcmp.eq.f32.partialorder %v1894, 8.507059e+37
    %v1896 = vand.u32 %v1869, 2147483648
    %v1897 = vor.u32 1.1754944e-38, %v1896
    %v1898 = vsel %vm1895, %v1897, %v1893
    %v1899 = vmul.f32 %v1863, %v1898
    %v1901 = vsel %vm1851, %v1884, 0
    %v1904 = vsel %vm1851, %v1899, 0
    %1906 = vmatpush.msra.mxu0 0.0
    %1907 = vmatpush.msra.mxu0 0.0
    %1908 = vmatpush.msra.mxu0 0.0
    %1909 = vmatpush.msra.mxu0 0.0
    %1910 = vmatpush.msra.mxu0 0.0
    %1911 = vmatpush.msra.mxu0 0.0
    %1912 = vmatpush.msra.mxu0 0.0
    %1913 = vmatpush.msra.mxu0 0.0
    %1914 = vmatpush.msra.mxu0 0.0
    %1915 = vmatpush.msra.mxu0 0.0
    %1916 = vmatpush.msra.mxu0 0.0
    %1917 = vmatpush.msra.mxu0 0.0
    %1918 = vmatpush.msra.mxu0 0.0
    %1919 = vmatpush.msra.mxu0 0.0
    %v1920 = vand.u32 %v1618, 4294901760
    %1921 = vmatpush.msra.mxu0 %v1920
    %v1922 = vand.u32 %v1614, 4294901760
    %1923 = vmatpush.msra.mxu0 %v1922
    %v1924 = vand.u32 %v1901, 4294901760
    %v1925 = vsub.f32 %v1901, %v1924
    %v1926 = vand.u32 %v1925, 4294901760
    %v1927 = vsub.f32 %v1925, %v1926
    %v1928 = vand.u32 %v1927, 4294901760
    %1929 = vmatmul.f32.gmra.mxu0 %v1928
    %v1930 = vpop.f32.mrf.mxu0
    %v1931 = vadd.f32 0.0, %v1930
    %v1932 = vand.u32 %v1904, 4294901760
    %v1933 = vsub.f32 %v1904, %v1932
    %v1934 = vand.u32 %v1933, 4294901760
    %v1935 = vsub.f32 %v1933, %v1934
    %v1936 = vand.u32 %v1935, 4294901760
    %1937 = vmatmul.f32.gmra.mxu0 %v1936
    %v1938 = vpop.f32.mrf.mxu0
    %v1939 = vadd.f32 0.0, %v1938
    %1940 = vdwg.mxu0
    %1941 = vmatpush.msra.mxu0 0.0
    %1942 = vmatpush.msra.mxu0 0.0
    %1943 = vmatpush.msra.mxu0 0.0
    %1944 = vmatpush.msra.mxu0 0.0
    %1945 = vmatpush.msra.mxu0 0.0
    %1946 = vmatpush.msra.mxu0 0.0
    %1947 = vmatpush.msra.mxu0 0.0
    %1948 = vmatpush.msra.mxu0 0.0
    %1949 = vmatpush.msra.mxu0 0.0
    %1950 = vmatpush.msra.mxu0 0.0
    %1951 = vmatpush.msra.mxu0 0.0
    %1952 = vmatpush.msra.mxu0 0.0
    %1953 = vmatpush.msra.mxu0 0.0
    %1954 = vmatpush.msra.mxu0 0.0
    %v1955 = vand.u32 %v1618, 4294901760
    %v1956 = vsub.f32 %v1618, %v1955
    %v1957 = vand.u32 %v1956, 4294901760
    %v1958 = vsub.f32 %v1956, %v1957
    %v1959 = vand.u32 %v1958, 4294901760
    %1960 = vmatpush.msra.mxu0 %v1959
    %v1961 = vand.u32 %v1614, 4294901760
    %v1962 = vsub.f32 %v1614, %v1961
    %v1963 = vand.u32 %v1962, 4294901760
    %v1964 = vsub.f32 %v1962, %v1963
    %v1965 = vand.u32 %v1964, 4294901760
    %1966 = vmatpush.msra.mxu0 %v1965
    %v1967 = vand.u32 %v1901, 4294901760
    %1968 = vmatmul.f32.gmra.mxu0 %v1967
    %v1969 = vpop.f32.mrf.mxu0
    %v1970 = vadd.f32 %v1931, %v1969
    %v1971 = vand.u32 %v1904, 4294901760
    %1972 = vmatmul.f32.gmra.mxu0 %v1971
    %v1973 = vpop.f32.mrf.mxu0
    %v1974 = vadd.f32 %v1939, %v1973
    %1975 = vdwg.mxu0
    %1976 = vmatpush.msra.mxu0 0.0
    %1977 = vmatpush.msra.mxu0 0.0
    %1978 = vmatpush.msra.mxu0 0.0
    %1979 = vmatpush.msra.mxu0 0.0
    %1980 = vmatpush.msra.mxu0 0.0
    %1981 = vmatpush.msra.mxu0 0.0
    %1982 = vmatpush.msra.mxu0 0.0
    %1983 = vmatpush.msra.mxu0 0.0
    %1984 = vmatpush.msra.mxu0 0.0
    %1985 = vmatpush.msra.mxu0 0.0
    %1986 = vmatpush.msra.mxu0 0.0
    %1987 = vmatpush.msra.mxu0 0.0
    %1988 = vmatpush.msra.mxu0 0.0
    %1989 = vmatpush.msra.mxu0 0.0
    %v1990 = vand.u32 %v1618, 4294901760
    %v1991 = vsub.f32 %v1618, %v1990
    %1992 = vmatpush.msra.mxu0 %v1991
    %v1993 = vand.u32 %v1614, 4294901760
    %v1994 = vsub.f32 %v1614, %v1993
    %1995 = vmatpush.msra.mxu0 %v1994
    %v1996 = vand.u32 %v1901, 4294901760
    %v1997 = vsub.f32 %v1901, %v1996
    %1998 = vmatmul.f32.gmra.mxu0 %v1997
    %v1999 = vpop.f32.mrf.mxu0
    %v2000 = vadd.f32 %v1970, %v1999
    %v2001 = vand.u32 %v1904, 4294901760
    %v2002 = vsub.f32 %v1904, %v2001
    %2003 = vmatmul.f32.gmra.mxu0 %v2002
    %v2004 = vpop.f32.mrf.mxu0
    %v2005 = vadd.f32 %v1974, %v2004
    %2006 = vdwg.mxu0
    %2007 = vmatpush.msra.mxu0 0.0
    %2008 = vmatpush.msra.mxu0 0.0
    %2009 = vmatpush.msra.mxu0 0.0
    %2010 = vmatpush.msra.mxu0 0.0
    %2011 = vmatpush.msra.mxu0 0.0
    %2012 = vmatpush.msra.mxu0 0.0
    %2013 = vmatpush.msra.mxu0 0.0
    %2014 = vmatpush.msra.mxu0 0.0
    %2015 = vmatpush.msra.mxu0 0.0
    %2016 = vmatpush.msra.mxu0 0.0
    %2017 = vmatpush.msra.mxu0 0.0
    %2018 = vmatpush.msra.mxu0 0.0
    %2019 = vmatpush.msra.mxu0 0.0
    %2020 = vmatpush.msra.mxu0 0.0
    %v2021 = vand.u32 %v1618, 4294901760
    %2022 = vmatpush.msra.mxu0 %v2021
    %v2023 = vand.u32 %v1614, 4294901760
    %2024 = vmatpush.msra.mxu0 %v2023
    %v2025 = vand.u32 %v1901, 4294901760
    %v2026 = vsub.f32 %v1901, %v2025
    %v2027 = vand.u32 %v2026, 4294901760
    %2028 = vmatmul.f32.gmra.mxu0 %v2027
    %v2029 = vpop.f32.mrf.mxu0
    %v2030 = vadd.f32 %v2000, %v2029
    %v2031 = vand.u32 %v1904, 4294901760
    %v2032 = vsub.f32 %v1904, %v2031
    %v2033 = vand.u32 %v2032, 4294901760
    %2034 = vmatmul.f32.gmra.mxu0 %v2033
    %v2035 = vpop.f32.mrf.mxu0
    %v2036 = vadd.f32 %v2005, %v2035
    %2037 = vdwg.mxu0
    %2038 = vmatpush.msra.mxu0 0.0
    %2039 = vmatpush.msra.mxu0 0.0
    %2040 = vmatpush.msra.mxu0 0.0
    %2041 = vmatpush.msra.mxu0 0.0
    %2042 = vmatpush.msra.mxu0 0.0
    %2043 = vmatpush.msra.mxu0 0.0
    %2044 = vmatpush.msra.mxu0 0.0
    %2045 = vmatpush.msra.mxu0 0.0
    %2046 = vmatpush.msra.mxu0 0.0
    %2047 = vmatpush.msra.mxu0 0.0
    %2048 = vmatpush.msra.mxu0 0.0
    %2049 = vmatpush.msra.mxu0 0.0
    %2050 = vmatpush.msra.mxu0 0.0
    %2051 = vmatpush.msra.mxu0 0.0
    %v2052 = vand.u32 %v1618, 4294901760
    %v2053 = vsub.f32 %v1618, %v2052
    %v2054 = vand.u32 %v2053, 4294901760
    %2055 = vmatpush.msra.mxu0 %v2054
    %v2056 = vand.u32 %v1614, 4294901760
    %v2057 = vsub.f32 %v1614, %v2056
    %v2058 = vand.u32 %v2057, 4294901760
    %2059 = vmatpush.msra.mxu0 %v2058
    %v2060 = vand.u32 %v1901, 4294901760
    %2061 = vmatmul.f32.gmra.mxu0 %v2060
    %v2062 = vpop.f32.mrf.mxu0
    %v2063 = vadd.f32 %v2030, %v2062
    %v2064 = vand.u32 %v1904, 4294901760
    %2065 = vmatmul.f32.gmra.mxu0 %v2064
    %v2066 = vpop.f32.mrf.mxu0
    %v2067 = vadd.f32 %v2036, %v2066
    %2068 = vdwg.mxu0
    %2069 = vmatpush.msra.mxu0 0.0
    %2070 = vmatpush.msra.mxu0 0.0
    %2071 = vmatpush.msra.mxu0 0.0
    %2072 = vmatpush.msra.mxu0 0.0
    %2073 = vmatpush.msra.mxu0 0.0
    %2074 = vmatpush.msra.mxu0 0.0
    %2075 = vmatpush.msra.mxu0 0.0
    %2076 = vmatpush.msra.mxu0 0.0
    %2077 = vmatpush.msra.mxu0 0.0
    %2078 = vmatpush.msra.mxu0 0.0
    %2079 = vmatpush.msra.mxu0 0.0
    %2080 = vmatpush.msra.mxu0 0.0
    %2081 = vmatpush.msra.mxu0 0.0
    %2082 = vmatpush.msra.mxu0 0.0
    %v2083 = vand.u32 %v1618, 4294901760
    %2084 = vmatpush.msra.mxu0 %v2083
    %v2085 = vand.u32 %v1614, 4294901760
    %2086 = vmatpush.msra.mxu0 %v2085
    %v2087 = vand.u32 %v1901, 4294901760
    %2088 = vmatmul.f32.gmra.mxu0 %v2087
    %v2089 = vpop.f32.mrf.mxu0
    %v2090 = vadd.f32 %v2063, %v2089
    %v2091 = vand.u32 %v1904, 4294901760
    %2092 = vmatmul.f32.gmra.mxu0 %v2091
    %v2093 = vpop.f32.mrf.mxu0
    %v2094 = vadd.f32 %v2067, %v2093
    %2095 = vdwg.mxu0
    %2096 = vst.msk [vmem:[#allocation2] sm:$0xff] %vm1648, %v2090
    %2097 = vst.msk [vmem:[#allocation2 + $0x10] sm:$0xff] %vm1648, %v2094
    %2098 = vrot.lane.b32.xlu0 %v1636, 64
    %v2099 = vpop.permute.xlu0 %2098
    %2100 = vrot.lane.b32.xlu0 %v1638, 64
    %v2101 = vpop.permute.xlu0 %2100
    %v2102 = vsel %vm1648, %v2099, 0
    %v2104 = vsel %vm1648, %v2101, 0
    %2106 = vmatpush.xpose.msra.mxu0 0.0
    %2107 = vmatpush.xpose.msra.mxu0 0.0
    %2108 = vmatpush.xpose.msra.mxu0 0.0
    %2109 = vmatpush.xpose.msra.mxu0 0.0
    %2110 = vmatpush.xpose.msra.mxu0 0.0
    %2111 = vmatpush.xpose.msra.mxu0 0.0
    %2112 = vmatpush.xpose.msra.mxu0 0.0
    %2113 = vmatpush.xpose.msra.mxu0 0.0
    %2114 = vmatpush.xpose.msra.mxu0 0.0
    %2115 = vmatpush.xpose.msra.mxu0 0.0
    %2116 = vmatpush.xpose.msra.mxu0 0.0
    %2117 = vmatpush.xpose.msra.mxu0 0.0
    %2118 = vmatpush.xpose.msra.mxu0 0.0
    %2119 = vmatpush.xpose.msra.mxu0 0.0
    %v2120 = vand.u32 %v1659, 4294901760
    %2121 = vmatpush.xpose.msra.mxu0 %v2120
    %v2122 = vand.u32 %v1656, 4294901760
    %2123 = vmatpush.xpose.msra.mxu0 %v2122
    %v2124 = vand.u32 %v2102, 4294901760
    %v2125 = vsub.f32 %v2102, %v2124
    %v2126 = vand.u32 %v2125, 4294901760
    %v2127 = vsub.f32 %v2125, %v2126
    %v2128 = vand.u32 %v2127, 4294901760
    %2129 = vmatmul.f32.gmra.mxu0 %v2128
    %v2130 = vpop.f32.mrf.mxu0
    %v2131 = vadd.f32 %v1646, %v2130
    %v2132 = vand.u32 %v2104, 4294901760
    %v2133 = vsub.f32 %v2104, %v2132
    %v2134 = vand.u32 %v2133, 4294901760
    %v2135 = vsub.f32 %v2133, %v2134
    %v2136 = vand.u32 %v2135, 4294901760
    %2137 = vmatmul.f32.gmra.mxu0 %v2136
    %v2138 = vpop.f32.mrf.mxu0
    %v2139 = vadd.f32 %v1647, %v2138
    %2140 = vdwg.mxu0
    %2141 = vmatpush.xpose.msra.mxu0 0.0
    %2142 = vmatpush.xpose.msra.mxu0 0.0
    %2143 = vmatpush.xpose.msra.mxu0 0.0
    %2144 = vmatpush.xpose.msra.mxu0 0.0
    %2145 = vmatpush.xpose.msra.mxu0 0.0
    %2146 = vmatpush.xpose.msra.mxu0 0.0
    %2147 = vmatpush.xpose.msra.mxu0 0.0
    %2148 = vmatpush.xpose.msra.mxu0 0.0
    %2149 = vmatpush.xpose.msra.mxu0 0.0
    %2150 = vmatpush.xpose.msra.mxu0 0.0
    %2151 = vmatpush.xpose.msra.mxu0 0.0
    %2152 = vmatpush.xpose.msra.mxu0 0.0
    %2153 = vmatpush.xpose.msra.mxu0 0.0
    %2154 = vmatpush.xpose.msra.mxu0 0.0
    %v2155 = vand.u32 %v1659, 4294901760
    %v2156 = vsub.f32 %v1659, %v2155
    %v2157 = vand.u32 %v2156, 4294901760
    %v2158 = vsub.f32 %v2156, %v2157
    %v2159 = vand.u32 %v2158, 4294901760
    %2160 = vmatpush.xpose.msra.mxu0 %v2159
    %v2161 = vand.u32 %v1656, 4294901760
    %v2162 = vsub.f32 %v1656, %v2161
    %v2163 = vand.u32 %v2162, 4294901760
    %v2164 = vsub.f32 %v2162, %v2163
    %v2165 = vand.u32 %v2164, 4294901760
    %2166 = vmatpush.xpose.msra.mxu0 %v2165
    %v2167 = vand.u32 %v2102, 4294901760
    %2168 = vmatmul.f32.gmra.mxu0 %v2167
    %v2169 = vpop.f32.mrf.mxu0
    %v2170 = vadd.f32 %v2131, %v2169
    %v2171 = vand.u32 %v2104, 4294901760
    %2172 = vmatmul.f32.gmra.mxu0 %v2171
    %v2173 = vpop.f32.mrf.mxu0
    %v2174 = vadd.f32 %v2139, %v2173
    %2175 = vdwg.mxu0
    %2176 = vmatpush.xpose.msra.mxu0 0.0
    %2177 = vmatpush.xpose.msra.mxu0 0.0
    %2178 = vmatpush.xpose.msra.mxu0 0.0
    %2179 = vmatpush.xpose.msra.mxu0 0.0
    %2180 = vmatpush.xpose.msra.mxu0 0.0
    %2181 = vmatpush.xpose.msra.mxu0 0.0
    %2182 = vmatpush.xpose.msra.mxu0 0.0
    %2183 = vmatpush.xpose.msra.mxu0 0.0
    %2184 = vmatpush.xpose.msra.mxu0 0.0
    %2185 = vmatpush.xpose.msra.mxu0 0.0
    %2186 = vmatpush.xpose.msra.mxu0 0.0
    %2187 = vmatpush.xpose.msra.mxu0 0.0
    %2188 = vmatpush.xpose.msra.mxu0 0.0
    %2189 = vmatpush.xpose.msra.mxu0 0.0
    %v2190 = vand.u32 %v1659, 4294901760
    %v2191 = vsub.f32 %v1659, %v2190
    %2192 = vmatpush.xpose.msra.mxu0 %v2191
    %v2193 = vand.u32 %v1656, 4294901760
    %v2194 = vsub.f32 %v1656, %v2193
    %2195 = vmatpush.xpose.msra.mxu0 %v2194
    %v2196 = vand.u32 %v2102, 4294901760
    %v2197 = vsub.f32 %v2102, %v2196
    %2198 = vmatmul.f32.gmra.mxu0 %v2197
    %v2199 = vpop.f32.mrf.mxu0
    %v2200 = vadd.f32 %v2170, %v2199
    %v2201 = vand.u32 %v2104, 4294901760
    %v2202 = vsub.f32 %v2104, %v2201
    %2203 = vmatmul.f32.gmra.mxu0 %v2202
    %v2204 = vpop.f32.mrf.mxu0
    %v2205 = vadd.f32 %v2174, %v2204
    %2206 = vdwg.mxu0
    %2207 = vmatpush.xpose.msra.mxu0 0.0
    %2208 = vmatpush.xpose.msra.mxu0 0.0
    %2209 = vmatpush.xpose.msra.mxu0 0.0
    %2210 = vmatpush.xpose.msra.mxu0 0.0
    %2211 = vmatpush.xpose.msra.mxu0 0.0
    %2212 = vmatpush.xpose.msra.mxu0 0.0
    %2213 = vmatpush.xpose.msra.mxu0 0.0
    %2214 = vmatpush.xpose.msra.mxu0 0.0
    %2215 = vmatpush.xpose.msra.mxu0 0.0
    %2216 = vmatpush.xpose.msra.mxu0 0.0
    %2217 = vmatpush.xpose.msra.mxu0 0.0
    %2218 = vmatpush.xpose.msra.mxu0 0.0
    %2219 = vmatpush.xpose.msra.mxu0 0.0
    %2220 = vmatpush.xpose.msra.mxu0 0.0
    %v2221 = vand.u32 %v1659, 4294901760
    %2222 = vmatpush.xpose.msra.mxu0 %v2221
    %v2223 = vand.u32 %v1656, 4294901760
    %2224 = vmatpush.xpose.msra.mxu0 %v2223
    %v2225 = vand.u32 %v2102, 4294901760
    %v2226 = vsub.f32 %v2102, %v2225
    %v2227 = vand.u32 %v2226, 4294901760
    %2228 = vmatmul.f32.gmra.mxu0 %v2227
    %v2229 = vpop.f32.mrf.mxu0
    %v2230 = vadd.f32 %v2200, %v2229
    %v2231 = vand.u32 %v2104, 4294901760
    %v2232 = vsub.f32 %v2104, %v2231
    %v2233 = vand.u32 %v2232, 4294901760
    %2234 = vmatmul.f32.gmra.mxu0 %v2233
    %v2235 = vpop.f32.mrf.mxu0
    %v2236 = vadd.f32 %v2205, %v2235
    %2237 = vdwg.mxu0
    %2238 = vmatpush.xpose.msra.mxu0 0.0
    %2239 = vmatpush.xpose.msra.mxu0 0.0
    %2240 = vmatpush.xpose.msra.mxu0 0.0
    %2241 = vmatpush.xpose.msra.mxu0 0.0
    %2242 = vmatpush.xpose.msra.mxu0 0.0
    %2243 = vmatpush.xpose.msra.mxu0 0.0
    %2244 = vmatpush.xpose.msra.mxu0 0.0
    %2245 = vmatpush.xpose.msra.mxu0 0.0
    %2246 = vmatpush.xpose.msra.mxu0 0.0
    %2247 = vmatpush.xpose.msra.mxu0 0.0
    %2248 = vmatpush.xpose.msra.mxu0 0.0
    %2249 = vmatpush.xpose.msra.mxu0 0.0
    %2250 = vmatpush.xpose.msra.mxu0 0.0
    %2251 = vmatpush.xpose.msra.mxu0 0.0
    %v2252 = vand.u32 %v1659, 4294901760
    %v2253 = vsub.f32 %v1659, %v2252
    %v2254 = vand.u32 %v2253, 4294901760
    %2255 = vmatpush.xpose.msra.mxu0 %v2254
    %v2256 = vand.u32 %v1656, 4294901760
    %v2257 = vsub.f32 %v1656, %v2256
    %v2258 = vand.u32 %v2257, 4294901760
    %2259 = vmatpush.xpose.msra.mxu0 %v2258
    %v2260 = vand.u32 %v2102, 4294901760
    %2261 = vmatmul.f32.gmra.mxu0 %v2260
    %v2262 = vpop.f32.mrf.mxu0
    %v2263 = vadd.f32 %v2230, %v2262
    %v2264 = vand.u32 %v2104, 4294901760
    %2265 = vmatmul.f32.gmra.mxu0 %v2264
    %v2266 = vpop.f32.mrf.mxu0
    %v2267 = vadd.f32 %v2236, %v2266
    %2268 = vdwg.mxu0
    %2269 = vmatpush.xpose.msra.mxu0 0.0
    %2270 = vmatpush.xpose.msra.mxu0 0.0
    %2271 = vmatpush.xpose.msra.mxu0 0.0
    %2272 = vmatpush.xpose.msra.mxu0 0.0
    %2273 = vmatpush.xpose.msra.mxu0 0.0
    %2274 = vmatpush.xpose.msra.mxu0 0.0
    %2275 = vmatpush.xpose.msra.mxu0 0.0
    %2276 = vmatpush.xpose.msra.mxu0 0.0
    %2277 = vmatpush.xpose.msra.mxu0 0.0
    %2278 = vmatpush.xpose.msra.mxu0 0.0
    %2279 = vmatpush.xpose.msra.mxu0 0.0
    %2280 = vmatpush.xpose.msra.mxu0 0.0
    %2281 = vmatpush.xpose.msra.mxu0 0.0
    %2282 = vmatpush.xpose.msra.mxu0 0.0
    %v2283 = vand.u32 %v1659, 4294901760
    %2284 = vmatpush.xpose.msra.mxu0 %v2283
    %v2285 = vand.u32 %v1656, 4294901760
    %2286 = vmatpush.xpose.msra.mxu0 %v2285
    %v2287 = vand.u32 %v2102, 4294901760
    %2288 = vmatmul.f32.gmra.mxu0 %v2287
    %v2289 = vpop.f32.mrf.mxu0
    %v2290 = vadd.f32 %v2263, %v2289
    %v2291 = vand.u32 %v2104, 4294901760
    %2292 = vmatmul.f32.gmra.mxu0 %v2291
    %v2293 = vpop.f32.mrf.mxu0
    %v2294 = vadd.f32 %v2267, %v2293
    %2295 = vdwg.mxu0
    %v2296 = vsel %vm1851, %v2290, -inf
    %2297 = vmax.xlane.f32.xlu0 %v2296
    %v2298 = vpop.xlane.xlu0 %2297
    %v2299 = vsel %vm1851, %v2294, -inf
    %2300 = vmax.xlane.f32.xlu0 %v2299
    %v2301 = vpop.xlane.xlu0 %2300
    %v2302 = vsub.f32 %v2290, %v2298
    %v2303 = vsub.f32 %v2294, %v2301
    %v2304 = vmul.f32 %v2302, 1.442695
    %v2305 = vpow.pop %v2304
    %v2306 = vmul.f32 %v2303, 1.442695
    %v2307 = vpow.pop %v2306
    %v2308 = vsel %vm1851, %v2305, 0.0
    %2309 = vadd.xlane.f32.xlu0 %v2308
    %v2310 = vpop.xlane.xlu0 %2309
    %v2311 = vsel %vm1851, %v2307, 0.0
    %2312 = vadd.xlane.f32.xlu0 %v2311
    %v2313 = vpop.xlane.xlu0 %2312
    %v2314 = vrcp.pop %v2310
    %v2315 = vmul.f32 %v2310, %v2314
    %v2316 = vsub.f32 1.0, %v2315
    %v2317 = vmul.f32 %v2314, %v2316
    %v2318 = vadd.f32 %v2314, %v2317
    %vm2319 = vweird.f32 %v2310
    %vm2320 = vweird.f32 %v2314
    %vm2321 = vmor %vm2319, %vm2320
    %v2322 = vsel %vm2321, %v2314, %v2318
    %v2323 = vand.u32 2147483647, %v2310
    %vm2324 = vcmp.eq.f32.partialorder %v2323, 8.507059e+37
    %v2325 = vand.u32 %v2310, 2147483648
    %v2326 = vor.u32 1.1754944e-38, %v2325
    %v2327 = vsel %vm2324, %v2326, %v2322
    %v2328 = vmul.f32 %v2305, %v2327
    %v2329 = vrcp.pop %v2313
    %v2330 = vmul.f32 %v2313, %v2329
    %v2331 = vsub.f32 1.0, %v2330
    %v2332 = vmul.f32 %v2329, %v2331
    %v2333 = vadd.f32 %v2329, %v2332
    %vm2334 = vweird.f32 %v2313
    %vm2335 = vweird.f32 %v2329
    %vm2336 = vmor %vm2334, %vm2335
    %v2337 = vsel %vm2336, %v2329, %v2333
    %v2338 = vand.u32 2147483647, %v2313
    %vm2339 = vcmp.eq.f32.partialorder %v2338, 8.507059e+37
    %v2340 = vand.u32 %v2313, 2147483648
    %v2341 = vor.u32 1.1754944e-38, %v2340
    %v2342 = vsel %vm2339, %v2341, %v2337
    %v2343 = vmul.f32 %v2307, %v2342
    %v2345 = vsel %vm1851, %v2328, 0
    %v2348 = vsel %vm1851, %v2343, 0
    %2350 = vmatpush.msra.mxu0 0.0
    %2351 = vmatpush.msra.mxu0 0.0
    %2352 = vmatpush.msra.mxu0 0.0
    %2353 = vmatpush.msra.mxu0 0.0
    %2354 = vmatpush.msra.mxu0 0.0
    %2355 = vmatpush.msra.mxu0 0.0
    %2356 = vmatpush.msra.mxu0 0.0
    %2357 = vmatpush.msra.mxu0 0.0
    %2358 = vmatpush.msra.mxu0 0.0
    %2359 = vmatpush.msra.mxu0 0.0
    %2360 = vmatpush.msra.mxu0 0.0
    %2361 = vmatpush.msra.mxu0 0.0
    %2362 = vmatpush.msra.mxu0 0.0
    %2363 = vmatpush.msra.mxu0 0.0
    %v2364 = vand.u32 %v1618, 4294901760
    %2365 = vmatpush.msra.mxu0 %v2364
    %v2366 = vand.u32 %v1614, 4294901760
    %2367 = vmatpush.msra.mxu0 %v2366
    %v2368 = vand.u32 %v2345, 4294901760
    %v2369 = vsub.f32 %v2345, %v2368
    %v2370 = vand.u32 %v2369, 4294901760
    %v2371 = vsub.f32 %v2369, %v2370
    %v2372 = vand.u32 %v2371, 4294901760
    %2373 = vmatmul.f32.gmra.mxu0 %v2372
    %v2374 = vpop.f32.mrf.mxu0
    %v2375 = vadd.f32 0.0, %v2374
    %v2376 = vand.u32 %v2348, 4294901760
    %v2377 = vsub.f32 %v2348, %v2376
    %v2378 = vand.u32 %v2377, 4294901760
    %v2379 = vsub.f32 %v2377, %v2378
    %v2380 = vand.u32 %v2379, 4294901760
    %2381 = vmatmul.f32.gmra.mxu0 %v2380
    %v2382 = vpop.f32.mrf.mxu0
    %v2383 = vadd.f32 0.0, %v2382
    %2384 = vdwg.mxu0
    %2385 = vmatpush.msra.mxu0 0.0
    %2386 = vmatpush.msra.mxu0 0.0
    %2387 = vmatpush.msra.mxu0 0.0
    %2388 = vmatpush.msra.mxu0 0.0
    %2389 = vmatpush.msra.mxu0 0.0
    %2390 = vmatpush.msra.mxu0 0.0
    %2391 = vmatpush.msra.mxu0 0.0
    %2392 = vmatpush.msra.mxu0 0.0
    %2393 = vmatpush.msra.mxu0 0.0
    %2394 = vmatpush.msra.mxu0 0.0
    %2395 = vmatpush.msra.mxu0 0.0
    %2396 = vmatpush.msra.mxu0 0.0
    %2397 = vmatpush.msra.mxu0 0.0
    %2398 = vmatpush.msra.mxu0 0.0
    %v2399 = vand.u32 %v1618, 4294901760
    %v2400 = vsub.f32 %v1618, %v2399
    %v2401 = vand.u32 %v2400, 4294901760
    %v2402 = vsub.f32 %v2400, %v2401
    %v2403 = vand.u32 %v2402, 4294901760
    %2404 = vmatpush.msra.mxu0 %v2403
    %v2405 = vand.u32 %v1614, 4294901760
    %v2406 = vsub.f32 %v1614, %v2405
    %v2407 = vand.u32 %v2406, 4294901760
    %v2408 = vsub.f32 %v2406, %v2407
    %v2409 = vand.u32 %v2408, 4294901760
    %2410 = vmatpush.msra.mxu0 %v2409
    %v2411 = vand.u32 %v2345, 4294901760
    %2412 = vmatmul.f32.gmra.mxu0 %v2411
    %v2413 = vpop.f32.mrf.mxu0
    %v2414 = vadd.f32 %v2375, %v2413
    %v2415 = vand.u32 %v2348, 4294901760
    %2416 = vmatmul.f32.gmra.mxu0 %v2415
    %v2417 = vpop.f32.mrf.mxu0
    %v2418 = vadd.f32 %v2383, %v2417
    %2419 = vdwg.mxu0
    %2420 = vmatpush.msra.mxu0 0.0
    %2421 = vmatpush.msra.mxu0 0.0
    %2422 = vmatpush.msra.mxu0 0.0
    %2423 = vmatpush.msra.mxu0 0.0
    %2424 = vmatpush.msra.mxu0 0.0
    %2425 = vmatpush.msra.mxu0 0.0
    %2426 = vmatpush.msra.mxu0 0.0
    %2427 = vmatpush.msra.mxu0 0.0
    %2428 = vmatpush.msra.mxu0 0.0
    %2429 = vmatpush.msra.mxu0 0.0
    %2430 = vmatpush.msra.mxu0 0.0
    %2431 = vmatpush.msra.mxu0 0.0
    %2432 = vmatpush.msra.mxu0 0.0
    %2433 = vmatpush.msra.mxu0 0.0
    %v2434 = vand.u32 %v1618, 4294901760
    %v2435 = vsub.f32 %v1618, %v2434
    %2436 = vmatpush.msra.mxu0 %v2435
    %v2437 = vand.u32 %v1614, 4294901760
    %v2438 = vsub.f32 %v1614, %v2437
    %2439 = vmatpush.msra.mxu0 %v2438
    %v2440 = vand.u32 %v2345, 4294901760
    %v2441 = vsub.f32 %v2345, %v2440
    %2442 = vmatmul.f32.gmra.mxu0 %v2441
    %v2443 = vpop.f32.mrf.mxu0
    %v2444 = vadd.f32 %v2414, %v2443
    %v2445 = vand.u32 %v2348, 4294901760
    %v2446 = vsub.f32 %v2348, %v2445
    %2447 = vmatmul.f32.gmra.mxu0 %v2446
    %v2448 = vpop.f32.mrf.mxu0
    %v2449 = vadd.f32 %v2418, %v2448
    %2450 = vdwg.mxu0
    %2451 = vmatpush.msra.mxu0 0.0
    %2452 = vmatpush.msra.mxu0 0.0
    %2453 = vmatpush.msra.mxu0 0.0
    %2454 = vmatpush.msra.mxu0 0.0
    %2455 = vmatpush.msra.mxu0 0.0
    %2456 = vmatpush.msra.mxu0 0.0
    %2457 = vmatpush.msra.mxu0 0.0
    %2458 = vmatpush.msra.mxu0 0.0
    %2459 = vmatpush.msra.mxu0 0.0
    %2460 = vmatpush.msra.mxu0 0.0
    %2461 = vmatpush.msra.mxu0 0.0
    %2462 = vmatpush.msra.mxu0 0.0
    %2463 = vmatpush.msra.mxu0 0.0
    %2464 = vmatpush.msra.mxu0 0.0
    %v2465 = vand.u32 %v1618, 4294901760
    %2466 = vmatpush.msra.mxu0 %v2465
    %v2467 = vand.u32 %v1614, 4294901760
    %2468 = vmatpush.msra.mxu0 %v2467
    %v2469 = vand.u32 %v2345, 4294901760
    %v2470 = vsub.f32 %v2345, %v2469
    %v2471 = vand.u32 %v2470, 4294901760
    %2472 = vmatmul.f32.gmra.mxu0 %v2471
    %v2473 = vpop.f32.mrf.mxu0
    %v2474 = vadd.f32 %v2444, %v2473
    %v2475 = vand.u32 %v2348, 4294901760
    %v2476 = vsub.f32 %v2348, %v2475
    %v2477 = vand.u32 %v2476, 4294901760
    %2478 = vmatmul.f32.gmra.mxu0 %v2477
    %v2479 = vpop.f32.mrf.mxu0
    %v2480 = vadd.f32 %v2449, %v2479
    %2481 = vdwg.mxu0
    %2482 = vmatpush.msra.mxu0 0.0
    %2483 = vmatpush.msra.mxu0 0.0
    %2484 = vmatpush.msra.mxu0 0.0
    %2485 = vmatpush.msra.mxu0 0.0
    %2486 = vmatpush.msra.mxu0 0.0
    %2487 = vmatpush.msra.mxu0 0.0
    %2488 = vmatpush.msra.mxu0 0.0
    %2489 = vmatpush.msra.mxu0 0.0
    %2490 = vmatpush.msra.mxu0 0.0
    %2491 = vmatpush.msra.mxu0 0.0
    %2492 = vmatpush.msra.mxu0 0.0
    %2493 = vmatpush.msra.mxu0 0.0
    %2494 = vmatpush.msra.mxu0 0.0
    %2495 = vmatpush.msra.mxu0 0.0
    %v2496 = vand.u32 %v1618, 4294901760
    %v2497 = vsub.f32 %v1618, %v2496
    %v2498 = vand.u32 %v2497, 4294901760
    %2499 = vmatpush.msra.mxu0 %v2498
    %v2500 = vand.u32 %v1614, 4294901760
    %v2501 = vsub.f32 %v1614, %v2500
    %v2502 = vand.u32 %v2501, 4294901760
    %2503 = vmatpush.msra.mxu0 %v2502
    %v2504 = vand.u32 %v2345, 4294901760
    %2505 = vmatmul.f32.gmra.mxu0 %v2504
    %v2506 = vpop.f32.mrf.mxu0
    %v2507 = vadd.f32 %v2474, %v2506
    %v2508 = vand.u32 %v2348, 4294901760
    %2509 = vmatmul.f32.gmra.mxu0 %v2508
    %v2510 = vpop.f32.mrf.mxu0
    %v2511 = vadd.f32 %v2480, %v2510
    %2512 = vdwg.mxu0
    %2513 = vmatpush.msra.mxu0 0.0
    %2514 = vmatpush.msra.mxu0 0.0
    %2515 = vmatpush.msra.mxu0 0.0
    %2516 = vmatpush.msra.mxu0 0.0
    %2517 = vmatpush.msra.mxu0 0.0
    %2518 = vmatpush.msra.mxu0 0.0
    %2519 = vmatpush.msra.mxu0 0.0
    %2520 = vmatpush.msra.mxu0 0.0
    %2521 = vmatpush.msra.mxu0 0.0
    %2522 = vmatpush.msra.mxu0 0.0
    %2523 = vmatpush.msra.mxu0 0.0
    %2524 = vmatpush.msra.mxu0 0.0
    %2525 = vmatpush.msra.mxu0 0.0
    %2526 = vmatpush.msra.mxu0 0.0
    %v2527 = vand.u32 %v1618, 4294901760
    %2528 = vmatpush.msra.mxu0 %v2527
    %v2529 = vand.u32 %v1614, 4294901760
    %2530 = vmatpush.msra.mxu0 %v2529
    %v2531 = vand.u32 %v2345, 4294901760
    %2532 = vmatmul.f32.gmra.mxu0 %v2531
    %v2533 = vpop.f32.mrf.mxu0
    %v2534 = vadd.f32 %v2507, %v2533
    %v2535 = vand.u32 %v2348, 4294901760
    %2536 = vmatmul.f32.gmra.mxu0 %v2535
    %v2537 = vpop.f32.mrf.mxu0
    %v2538 = vadd.f32 %v2511, %v2537
    %2539 = vdwg.mxu0
    %2542 = vrot.lane.b32.xlu0 %v2534, 64
    %v2543 = vpop.permute.xlu0 %2542
    %2544 = vrot.lane.b32.xlu0 %v2538, 64
    %v2545 = vpop.permute.xlu0 %2544
    %vm2548 = vcmask 1048064
    %2549 = vst.msk [vmem:[#allocation2] sm:$0xff] %vm2548, %v2543
    %2550 = vst.msk [vmem:[#allocation2 + $0x10] sm:$0xff] %vm2548, %v2545
    %2551 = vrot.lane.b32.xlu0 %v1644, 64
    %v2552 = vpop.permute.xlu0 %2551
    %2553 = vrot.lane.b32.xlu0 %v1645, 64
    %v2554 = vpop.permute.xlu0 %2553
    %v2556 = vsel %vm1648, %v1637, 0
    %v2559 = vsel %vm1648, %v1639, 0
    %v2561 = vsel %vm1648, %v2552, 0
    %v2563 = vsel %vm1648, %v2554, 0
    %2565 = vmatpush.xpose.msra.mxu0 0.0
    %2566 = vmatpush.xpose.msra.mxu0 0.0
    %2567 = vmatpush.xpose.msra.mxu0 0.0
    %2568 = vmatpush.xpose.msra.mxu0 0.0
    %2569 = vmatpush.xpose.msra.mxu0 0.0
    %2570 = vmatpush.xpose.msra.mxu0 0.0
    %2571 = vmatpush.xpose.msra.mxu0 0.0
    %2572 = vmatpush.xpose.msra.mxu0 0.0
    %2573 = vmatpush.xpose.msra.mxu0 0.0
    %2574 = vmatpush.xpose.msra.mxu0 0.0
    %2575 = vmatpush.xpose.msra.mxu0 0.0
    %2576 = vmatpush.xpose.msra.mxu0 0.0
    %2577 = vmatpush.xpose.msra.mxu0 0.0
    %2578 = vmatpush.xpose.msra.mxu0 0.0
    %v2579 = vand.u32 %v2563, 4294901760
    %2580 = vmatpush.xpose.msra.mxu0 %v2579
    %v2581 = vand.u32 %v2561, 4294901760
    %2582 = vmatpush.xpose.msra.mxu0 %v2581
    %v2583 = vand.u32 %v2556, 4294901760
    %v2584 = vsub.f32 %v2556, %v2583
    %v2585 = vand.u32 %v2584, 4294901760
    %v2586 = vsub.f32 %v2584, %v2585
    %v2587 = vand.u32 %v2586, 4294901760
    %2588 = vmatmul.f32.gmra.mxu0 %v2587
    %v2589 = vpop.f32.mrf.mxu0
    %v2590 = vadd.f32 %v1646, %v2589
    %v2591 = vand.u32 %v2559, 4294901760
    %v2592 = vsub.f32 %v2559, %v2591
    %v2593 = vand.u32 %v2592, 4294901760
    %v2594 = vsub.f32 %v2592, %v2593
    %v2595 = vand.u32 %v2594, 4294901760
    %2596 = vmatmul.f32.gmra.mxu0 %v2595
    %v2597 = vpop.f32.mrf.mxu0
    %v2598 = vadd.f32 %v1647, %v2597
    %2599 = vdwg.mxu0
    %2600 = vmatpush.xpose.msra.mxu0 0.0
    %2601 = vmatpush.xpose.msra.mxu0 0.0
    %2602 = vmatpush.xpose.msra.mxu0 0.0
    %2603 = vmatpush.xpose.msra.mxu0 0.0
    %2604 = vmatpush.xpose.msra.mxu0 0.0
    %2605 = vmatpush.xpose.msra.mxu0 0.0
    %2606 = vmatpush.xpose.msra.mxu0 0.0
    %2607 = vmatpush.xpose.msra.mxu0 0.0
    %2608 = vmatpush.xpose.msra.mxu0 0.0
    %2609 = vmatpush.xpose.msra.mxu0 0.0
    %2610 = vmatpush.xpose.msra.mxu0 0.0
    %2611 = vmatpush.xpose.msra.mxu0 0.0
    %2612 = vmatpush.xpose.msra.mxu0 0.0
    %2613 = vmatpush.xpose.msra.mxu0 0.0
    %v2614 = vand.u32 %v2563, 4294901760
    %v2615 = vsub.f32 %v2563, %v2614
    %v2616 = vand.u32 %v2615, 4294901760
    %v2617 = vsub.f32 %v2615, %v2616
    %v2618 = vand.u32 %v2617, 4294901760
    %2619 = vmatpush.xpose.msra.mxu0 %v2618
    %v2620 = vand.u32 %v2561, 4294901760
    %v2621 = vsub.f32 %v2561, %v2620
    %v2622 = vand.u32 %v2621, 4294901760
    %v2623 = vsub.f32 %v2621, %v2622
    %v2624 = vand.u32 %v2623, 4294901760
    %2625 = vmatpush.xpose.msra.mxu0 %v2624
    %v2626 = vand.u32 %v2556, 4294901760
    %2627 = vmatmul.f32.gmra.mxu0 %v2626
    %v2628 = vpop.f32.mrf.mxu0
    %v2629 = vadd.f32 %v2590, %v2628
    %v2630 = vand.u32 %v2559, 4294901760
    %2631 = vmatmul.f32.gmra.mxu0 %v2630
    %v2632 = vpop.f32.mrf.mxu0
    %v2633 = vadd.f32 %v2598, %v2632
    %2634 = vdwg.mxu0
    %2635 = vmatpush.xpose.msra.mxu0 0.0
    %2636 = vmatpush.xpose.msra.mxu0 0.0
    %2637 = vmatpush.xpose.msra.mxu0 0.0
    %2638 = vmatpush.xpose.msra.mxu0 0.0
    %2639 = vmatpush.xpose.msra.mxu0 0.0
    %2640 = vmatpush.xpose.msra.mxu0 0.0
    %2641 = vmatpush.xpose.msra.mxu0 0.0
    %2642 = vmatpush.xpose.msra.mxu0 0.0
    %2643 = vmatpush.xpose.msra.mxu0 0.0
    %2644 = vmatpush.xpose.msra.mxu0 0.0
    %2645 = vmatpush.xpose.msra.mxu0 0.0
    %2646 = vmatpush.xpose.msra.mxu0 0.0
    %2647 = vmatpush.xpose.msra.mxu0 0.0
    %2648 = vmatpush.xpose.msra.mxu0 0.0
    %v2649 = vand.u32 %v2563, 4294901760
    %v2650 = vsub.f32 %v2563, %v2649
    %2651 = vmatpush.xpose.msra.mxu0 %v2650
    %v2652 = vand.u32 %v2561, 4294901760
    %v2653 = vsub.f32 %v2561, %v2652
    %2654 = vmatpush.xpose.msra.mxu0 %v2653
    %v2655 = vand.u32 %v2556, 4294901760
    %v2656 = vsub.f32 %v2556, %v2655
    %2657 = vmatmul.f32.gmra.mxu0 %v2656
    %v2658 = vpop.f32.mrf.mxu0
    %v2659 = vadd.f32 %v2629, %v2658
    %v2660 = vand.u32 %v2559, 4294901760
    %v2661 = vsub.f32 %v2559, %v2660
    %2662 = vmatmul.f32.gmra.mxu0 %v2661
    %v2663 = vpop.f32.mrf.mxu0
    %v2664 = vadd.f32 %v2633, %v2663
    %2665 = vdwg.mxu0
    %2666 = vmatpush.xpose.msra.mxu0 0.0
    %2667 = vmatpush.xpose.msra.mxu0 0.0
    %2668 = vmatpush.xpose.msra.mxu0 0.0
    %2669 = vmatpush.xpose.msra.mxu0 0.0
    %2670 = vmatpush.xpose.msra.mxu0 0.0
    %2671 = vmatpush.xpose.msra.mxu0 0.0
    %2672 = vmatpush.xpose.msra.mxu0 0.0
    %2673 = vmatpush.xpose.msra.mxu0 0.0
    %2674 = vmatpush.xpose.msra.mxu0 0.0
    %2675 = vmatpush.xpose.msra.mxu0 0.0
    %2676 = vmatpush.xpose.msra.mxu0 0.0
    %2677 = vmatpush.xpose.msra.mxu0 0.0
    %2678 = vmatpush.xpose.msra.mxu0 0.0
    %2679 = vmatpush.xpose.msra.mxu0 0.0
    %v2680 = vand.u32 %v2563, 4294901760
    %2681 = vmatpush.xpose.msra.mxu0 %v2680
    %v2682 = vand.u32 %v2561, 4294901760
    %2683 = vmatpush.xpose.msra.mxu0 %v2682
    %v2684 = vand.u32 %v2556, 4294901760
    %v2685 = vsub.f32 %v2556, %v2684
    %v2686 = vand.u32 %v2685, 4294901760
    %2687 = vmatmul.f32.gmra.mxu0 %v2686
    %v2688 = vpop.f32.mrf.mxu0
    %v2689 = vadd.f32 %v2659, %v2688
    %v2690 = vand.u32 %v2559, 4294901760
    %v2691 = vsub.f32 %v2559, %v2690
    %v2692 = vand.u32 %v2691, 4294901760
    %2693 = vmatmul.f32.gmra.mxu0 %v2692
    %v2694 = vpop.f32.mrf.mxu0
    %v2695 = vadd.f32 %v2664, %v2694
    %2696 = vdwg.mxu0
    %2697 = vmatpush.xpose.msra.mxu0 0.0
    %2698 = vmatpush.xpose.msra.mxu0 0.0
    %2699 = vmatpush.xpose.msra.mxu0 0.0
    %2700 = vmatpush.xpose.msra.mxu0 0.0
    %2701 = vmatpush.xpose.msra.mxu0 0.0
    %2702 = vmatpush.xpose.msra.mxu0 0.0
    %2703 = vmatpush.xpose.msra.mxu0 0.0
    %2704 = vmatpush.xpose.msra.mxu0 0.0
    %2705 = vmatpush.xpose.msra.mxu0 0.0
    %2706 = vmatpush.xpose.msra.mxu0 0.0
    %2707 = vmatpush.xpose.msra.mxu0 0.0
    %2708 = vmatpush.xpose.msra.mxu0 0.0
    %2709 = vmatpush.xpose.msra.mxu0 0.0
    %2710 = vmatpush.xpose.msra.mxu0 0.0
    %v2711 = vand.u32 %v2563, 4294901760
    %v2712 = vsub.f32 %v2563, %v2711
    %v2713 = vand.u32 %v2712, 4294901760
    %2714 = vmatpush.xpose.msra.mxu0 %v2713
    %v2715 = vand.u32 %v2561, 4294901760
    %v2716 = vsub.f32 %v2561, %v2715
    %v2717 = vand.u32 %v2716, 4294901760
    %2718 = vmatpush.xpose.msra.mxu0 %v2717
    %v2719 = vand.u32 %v2556, 4294901760
    %2720 = vmatmul.f32.gmra.mxu0 %v2719
    %v2721 = vpop.f32.mrf.mxu0
    %v2722 = vadd.f32 %v2689, %v2721
    %v2723 = vand.u32 %v2559, 4294901760
    %2724 = vmatmul.f32.gmra.mxu0 %v2723
    %v2725 = vpop.f32.mrf.mxu0
    %v2726 = vadd.f32 %v2695, %v2725
    %2727 = vdwg.mxu0
    %2728 = vmatpush.xpose.msra.mxu0 0.0
    %2729 = vmatpush.xpose.msra.mxu0 0.0
    %2730 = vmatpush.xpose.msra.mxu0 0.0
    %2731 = vmatpush.xpose.msra.mxu0 0.0
    %2732 = vmatpush.xpose.msra.mxu0 0.0
    %2733 = vmatpush.xpose.msra.mxu0 0.0
    %2734 = vmatpush.xpose.msra.mxu0 0.0
    %2735 = vmatpush.xpose.msra.mxu0 0.0
    %2736 = vmatpush.xpose.msra.mxu0 0.0
    %2737 = vmatpush.xpose.msra.mxu0 0.0
    %2738 = vmatpush.xpose.msra.mxu0 0.0
    %2739 = vmatpush.xpose.msra.mxu0 0.0
    %2740 = vmatpush.xpose.msra.mxu0 0.0
    %2741 = vmatpush.xpose.msra.mxu0 0.0
    %v2742 = vand.u32 %v2563, 4294901760
    %2743 = vmatpush.xpose.msra.mxu0 %v2742
    %v2744 = vand.u32 %v2561, 4294901760
    %2745 = vmatpush.xpose.msra.mxu0 %v2744
    %v2746 = vand.u32 %v2556, 4294901760
    %2747 = vmatmul.f32.gmra.mxu0 %v2746
    %v2748 = vpop.f32.mrf.mxu0
    %v2749 = vadd.f32 %v2722, %v2748
    %v2750 = vand.u32 %v2559, 4294901760
    %2751 = vmatmul.f32.gmra.mxu0 %v2750
    %v2752 = vpop.f32.mrf.mxu0
    %v2753 = vadd.f32 %v2726, %v2752
    %2754 = vdwg.mxu0
    %v2755 = vsel %vm1851, %v2749, -inf
    %2756 = vmax.xlane.f32.xlu0 %v2755
    %v2757 = vpop.xlane.xlu0 %2756
    %v2758 = vsel %vm1851, %v2753, -inf
    %2759 = vmax.xlane.f32.xlu0 %v2758
    %v2760 = vpop.xlane.xlu0 %2759
    %v2761 = vsub.f32 %v2749, %v2757
    %v2762 = vsub.f32 %v2753, %v2760
    %v2763 = vmul.f32 %v2761, 1.442695
    %v2764 = vpow.pop %v2763
    %v2765 = vmul.f32 %v2762, 1.442695
    %v2766 = vpow.pop %v2765
    %v2767 = vsel %vm1851, %v2764, 0.0
    %2768 = vadd.xlane.f32.xlu0 %v2767
    %v2769 = vpop.xlane.xlu0 %2768
    %v2770 = vsel %vm1851, %v2766, 0.0
    %2771 = vadd.xlane.f32.xlu0 %v2770
    %v2772 = vpop.xlane.xlu0 %2771
    %v2773 = vrcp.pop %v2769
    %v2774 = vmul.f32 %v2769, %v2773
    %v2775 = vsub.f32 1.0, %v2774
    %v2776 = vmul.f32 %v2773, %v2775
    %v2777 = vadd.f32 %v2773, %v2776
    %vm2778 = vweird.f32 %v2769
    %vm2779 = vweird.f32 %v2773
    %vm2780 = vmor %vm2778, %vm2779
    %v2781 = vsel %vm2780, %v2773, %v2777
    %v2782 = vand.u32 2147483647, %v2769
    %vm2783 = vcmp.eq.f32.partialorder %v2782, 8.507059e+37
    %v2784 = vand.u32 %v2769, 2147483648
    %v2785 = vor.u32 1.1754944e-38, %v2784
    %v2786 = vsel %vm2783, %v2785, %v2781
    %v2787 = vmul.f32 %v2764, %v2786
    %v2788 = vrcp.pop %v2772
    %v2789 = vmul.f32 %v2772, %v2788
    %v2790 = vsub.f32 1.0, %v2789
    %v2791 = vmul.f32 %v2788, %v2790
    %v2792 = vadd.f32 %v2788, %v2791
    %vm2793 = vweird.f32 %v2772
    %vm2794 = vweird.f32 %v2788
    %vm2795 = vmor %vm2793, %vm2794
    %v2796 = vsel %vm2795, %v2788, %v2792
    %v2797 = vand.u32 2147483647, %v2772
    %vm2798 = vcmp.eq.f32.partialorder %v2797, 8.507059e+37
    %v2799 = vand.u32 %v2772, 2147483648
    %v2800 = vor.u32 1.1754944e-38, %v2799
    %v2801 = vsel %vm2798, %v2800, %v2796
    %v2802 = vmul.f32 %v2766, %v2801
    %2805 = vrot.lane.b32.xlu0 %v1614, 64
    %v2806 = vpop.permute.xlu0 %2805
    %2807 = vrot.lane.b32.xlu0 %v1618, 64
    %v2808 = vpop.permute.xlu0 %2807
    %v2812 = vsel %vm1851, %v2787, 0
    %v2815 = vsel %vm1851, %v2802, 0
    %2817 = vmatpush.msra.mxu0 0.0
    %2818 = vmatpush.msra.mxu0 0.0
    %2819 = vmatpush.msra.mxu0 0.0
    %2820 = vmatpush.msra.mxu0 0.0
    %2821 = vmatpush.msra.mxu0 0.0
    %2822 = vmatpush.msra.mxu0 0.0
    %2823 = vmatpush.msra.mxu0 0.0
    %2824 = vmatpush.msra.mxu0 0.0
    %2825 = vmatpush.msra.mxu0 0.0
    %2826 = vmatpush.msra.mxu0 0.0
    %2827 = vmatpush.msra.mxu0 0.0
    %2828 = vmatpush.msra.mxu0 0.0
    %2829 = vmatpush.msra.mxu0 0.0
    %2830 = vmatpush.msra.mxu0 0.0
    %v2831 = vand.u32 %v2808, 4294901760
    %2832 = vmatpush.msra.mxu0 %v2831
    %v2833 = vand.u32 %v2806, 4294901760
    %2834 = vmatpush.msra.mxu0 %v2833
    %v2835 = vand.u32 %v2812, 4294901760
    %v2836 = vsub.f32 %v2812, %v2835
    %v2837 = vand.u32 %v2836, 4294901760
    %v2838 = vsub.f32 %v2836, %v2837
    %v2839 = vand.u32 %v2838, 4294901760
    %2840 = vmatmul.f32.gmra.mxu0 %v2839
    %v2841 = vpop.f32.mrf.mxu0
    %v2842 = vadd.f32 0.0, %v2841
    %v2843 = vand.u32 %v2815, 4294901760
    %v2844 = vsub.f32 %v2815, %v2843
    %v2845 = vand.u32 %v2844, 4294901760
    %v2846 = vsub.f32 %v2844, %v2845
    %v2847 = vand.u32 %v2846, 4294901760
    %2848 = vmatmul.f32.gmra.mxu0 %v2847
    %v2849 = vpop.f32.mrf.mxu0
    %v2850 = vadd.f32 0.0, %v2849
    %2851 = vdwg.mxu0
    %2852 = vmatpush.msra.mxu0 0.0
    %2853 = vmatpush.msra.mxu0 0.0
    %2854 = vmatpush.msra.mxu0 0.0
    %2855 = vmatpush.msra.mxu0 0.0
    %2856 = vmatpush.msra.mxu0 0.0
    %2857 = vmatpush.msra.mxu0 0.0
    %2858 = vmatpush.msra.mxu0 0.0
    %2859 = vmatpush.msra.mxu0 0.0
    %2860 = vmatpush.msra.mxu0 0.0
    %2861 = vmatpush.msra.mxu0 0.0
    %2862 = vmatpush.msra.mxu0 0.0
    %2863 = vmatpush.msra.mxu0 0.0
    %2864 = vmatpush.msra.mxu0 0.0
    %2865 = vmatpush.msra.mxu0 0.0
    %v2866 = vand.u32 %v2808, 4294901760
    %v2867 = vsub.f32 %v2808, %v2866
    %v2868 = vand.u32 %v2867, 4294901760
    %v2869 = vsub.f32 %v2867, %v2868
    %v2870 = vand.u32 %v2869, 4294901760
    %2871 = vmatpush.msra.mxu0 %v2870
    %v2872 = vand.u32 %v2806, 4294901760
    %v2873 = vsub.f32 %v2806, %v2872
    %v2874 = vand.u32 %v2873, 4294901760
    %v2875 = vsub.f32 %v2873, %v2874
    %v2876 = vand.u32 %v2875, 4294901760
    %2877 = vmatpush.msra.mxu0 %v2876
    %v2878 = vand.u32 %v2812, 4294901760
    %2879 = vmatmul.f32.gmra.mxu0 %v2878
    %v2880 = vpop.f32.mrf.mxu0
    %v2881 = vadd.f32 %v2842, %v2880
    %v2882 = vand.u32 %v2815, 4294901760
    %2883 = vmatmul.f32.gmra.mxu0 %v2882
    %v2884 = vpop.f32.mrf.mxu0
    %v2885 = vadd.f32 %v2850, %v2884
    %2886 = vdwg.mxu0
    %2887 = vmatpush.msra.mxu0 0.0
    %2888 = vmatpush.msra.mxu0 0.0
    %2889 = vmatpush.msra.mxu0 0.0
    %2890 = vmatpush.msra.mxu0 0.0
    %2891 = vmatpush.msra.mxu0 0.0
    %2892 = vmatpush.msra.mxu0 0.0
    %2893 = vmatpush.msra.mxu0 0.0
    %2894 = vmatpush.msra.mxu0 0.0
    %2895 = vmatpush.msra.mxu0 0.0
    %2896 = vmatpush.msra.mxu0 0.0
    %2897 = vmatpush.msra.mxu0 0.0
    %2898 = vmatpush.msra.mxu0 0.0
    %2899 = vmatpush.msra.mxu0 0.0
    %2900 = vmatpush.msra.mxu0 0.0
    %v2901 = vand.u32 %v2808, 4294901760
    %v2902 = vsub.f32 %v2808, %v2901
    %2903 = vmatpush.msra.mxu0 %v2902
    %v2904 = vand.u32 %v2806, 4294901760
    %v2905 = vsub.f32 %v2806, %v2904
    %2906 = vmatpush.msra.mxu0 %v2905
    %v2907 = vand.u32 %v2812, 4294901760
    %v2908 = vsub.f32 %v2812, %v2907
    %2909 = vmatmul.f32.gmra.mxu0 %v2908
    %v2910 = vpop.f32.mrf.mxu0
    %v2911 = vadd.f32 %v2881, %v2910
    %v2912 = vand.u32 %v2815, 4294901760
    %v2913 = vsub.f32 %v2815, %v2912
    %2914 = vmatmul.f32.gmra.mxu0 %v2913
    %v2915 = vpop.f32.mrf.mxu0
    %v2916 = vadd.f32 %v2885, %v2915
    %2917 = vdwg.mxu0
    %2918 = vmatpush.msra.mxu0 0.0
    %2919 = vmatpush.msra.mxu0 0.0
    %2920 = vmatpush.msra.mxu0 0.0
    %2921 = vmatpush.msra.mxu0 0.0
    %2922 = vmatpush.msra.mxu0 0.0
    %2923 = vmatpush.msra.mxu0 0.0
    %2924 = vmatpush.msra.mxu0 0.0
    %2925 = vmatpush.msra.mxu0 0.0
    %2926 = vmatpush.msra.mxu0 0.0
    %2927 = vmatpush.msra.mxu0 0.0
    %2928 = vmatpush.msra.mxu0 0.0
    %2929 = vmatpush.msra.mxu0 0.0
    %2930 = vmatpush.msra.mxu0 0.0
    %2931 = vmatpush.msra.mxu0 0.0
    %v2932 = vand.u32 %v2808, 4294901760
    %2933 = vmatpush.msra.mxu0 %v2932
    %v2934 = vand.u32 %v2806, 4294901760
    %2935 = vmatpush.msra.mxu0 %v2934
    %v2936 = vand.u32 %v2812, 4294901760
    %v2937 = vsub.f32 %v2812, %v2936
    %v2938 = vand.u32 %v2937, 4294901760
    %2939 = vmatmul.f32.gmra.mxu0 %v2938
    %v2940 = vpop.f32.mrf.mxu0
    %v2941 = vadd.f32 %v2911, %v2940
    %v2942 = vand.u32 %v2815, 4294901760
    %v2943 = vsub.f32 %v2815, %v2942
    %v2944 = vand.u32 %v2943, 4294901760
    %2945 = vmatmul.f32.gmra.mxu0 %v2944
    %v2946 = vpop.f32.mrf.mxu0
    %v2947 = vadd.f32 %v2916, %v2946
    %2948 = vdwg.mxu0
    %2949 = vmatpush.msra.mxu0 0.0
    %2950 = vmatpush.msra.mxu0 0.0
    %2951 = vmatpush.msra.mxu0 0.0
    %2952 = vmatpush.msra.mxu0 0.0
    %2953 = vmatpush.msra.mxu0 0.0
    %2954 = vmatpush.msra.mxu0 0.0
    %2955 = vmatpush.msra.mxu0 0.0
    %2956 = vmatpush.msra.mxu0 0.0
    %2957 = vmatpush.msra.mxu0 0.0
    %2958 = vmatpush.msra.mxu0 0.0
    %2959 = vmatpush.msra.mxu0 0.0
    %2960 = vmatpush.msra.mxu0 0.0
    %2961 = vmatpush.msra.mxu0 0.0
    %2962 = vmatpush.msra.mxu0 0.0
    %v2963 = vand.u32 %v2808, 4294901760
    %v2964 = vsub.f32 %v2808, %v2963
    %v2965 = vand.u32 %v2964, 4294901760
    %2966 = vmatpush.msra.mxu0 %v2965
    %v2967 = vand.u32 %v2806, 4294901760
    %v2968 = vsub.f32 %v2806, %v2967
    %v2969 = vand.u32 %v2968, 4294901760
    %2970 = vmatpush.msra.mxu0 %v2969
    %v2971 = vand.u32 %v2812, 4294901760
    %2972 = vmatmul.f32.gmra.mxu0 %v2971
    %v2973 = vpop.f32.mrf.mxu0
    %v2974 = vadd.f32 %v2941, %v2973
    %v2975 = vand.u32 %v2815, 4294901760
    %2976 = vmatmul.f32.gmra.mxu0 %v2975
    %v2977 = vpop.f32.mrf.mxu0
    %v2978 = vadd.f32 %v2947, %v2977
    %2979 = vdwg.mxu0
    %2980 = vmatpush.msra.mxu0 0.0
    %2981 = vmatpush.msra.mxu0 0.0
    %2982 = vmatpush.msra.mxu0 0.0
    %2983 = vmatpush.msra.mxu0 0.0
    %2984 = vmatpush.msra.mxu0 0.0
    %2985 = vmatpush.msra.mxu0 0.0
    %2986 = vmatpush.msra.mxu0 0.0
    %2987 = vmatpush.msra.mxu0 0.0
    %2988 = vmatpush.msra.mxu0 0.0
    %2989 = vmatpush.msra.mxu0 0.0
    %2990 = vmatpush.msra.mxu0 0.0
    %2991 = vmatpush.msra.mxu0 0.0
    %2992 = vmatpush.msra.mxu0 0.0
    %2993 = vmatpush.msra.mxu0 0.0
    %v2994 = vand.u32 %v2808, 4294901760
    %2995 = vmatpush.msra.mxu0 %v2994
    %v2996 = vand.u32 %v2806, 4294901760
    %2997 = vmatpush.msra.mxu0 %v2996
    %v2998 = vand.u32 %v2812, 4294901760
    %2999 = vmatmul.f32.gmra.mxu0 %v2998
    %v3000 = vpop.f32.mrf.mxu0
    %v3001 = vadd.f32 %v2974, %v3000
    %v3002 = vand.u32 %v2815, 4294901760
    %3003 = vmatmul.f32.gmra.mxu0 %v3002
    %v3004 = vpop.f32.mrf.mxu0
    %v3005 = vadd.f32 %v2978, %v3004
    %3006 = vdwg.mxu0
    %3007 = vst.msk [vmem:[#allocation2 + $0x8] sm:$0xff] %vm1648, %v3001
    %3008 = vst.msk [vmem:[#allocation2 + $0x18] sm:$0xff] %vm1648, %v3005
    %3009 = vrot.lane.b32.xlu0 %v1637, 64
    %v3010 = vpop.permute.xlu0 %3009
    %3011 = vrot.lane.b32.xlu0 %v1639, 64
    %v3012 = vpop.permute.xlu0 %3011
    %v3013 = vsel %vm1648, %v3010, 0
    %v3015 = vsel %vm1648, %v3012, 0
    %3017 = vmatpush.xpose.msra.mxu0 0.0
    %3018 = vmatpush.xpose.msra.mxu0 0.0
    %3019 = vmatpush.xpose.msra.mxu0 0.0
    %3020 = vmatpush.xpose.msra.mxu0 0.0
    %3021 = vmatpush.xpose.msra.mxu0 0.0
    %3022 = vmatpush.xpose.msra.mxu0 0.0
    %3023 = vmatpush.xpose.msra.mxu0 0.0
    %3024 = vmatpush.xpose.msra.mxu0 0.0
    %3025 = vmatpush.xpose.msra.mxu0 0.0
    %3026 = vmatpush.xpose.msra.mxu0 0.0
    %3027 = vmatpush.xpose.msra.mxu0 0.0
    %3028 = vmatpush.xpose.msra.mxu0 0.0
    %3029 = vmatpush.xpose.msra.mxu0 0.0
    %3030 = vmatpush.xpose.msra.mxu0 0.0
    %v3031 = vand.u32 %v2563, 4294901760
    %3032 = vmatpush.xpose.msra.mxu0 %v3031
    %v3033 = vand.u32 %v2561, 4294901760
    %3034 = vmatpush.xpose.msra.mxu0 %v3033
    %v3035 = vand.u32 %v3013, 4294901760
    %v3036 = vsub.f32 %v3013, %v3035
    %v3037 = vand.u32 %v3036, 4294901760
    %v3038 = vsub.f32 %v3036, %v3037
    %v3039 = vand.u32 %v3038, 4294901760
    %3040 = vmatmul.f32.gmra.mxu0 %v3039
    %v3041 = vpop.f32.mrf.mxu0
    %v3042 = vadd.f32 %v1646, %v3041
    %v3043 = vand.u32 %v3015, 4294901760
    %v3044 = vsub.f32 %v3015, %v3043
    %v3045 = vand.u32 %v3044, 4294901760
    %v3046 = vsub.f32 %v3044, %v3045
    %v3047 = vand.u32 %v3046, 4294901760
    %3048 = vmatmul.f32.gmra.mxu0 %v3047
    %v3049 = vpop.f32.mrf.mxu0
    %v3050 = vadd.f32 %v1647, %v3049
    %3051 = vdwg.mxu0
    %3052 = vmatpush.xpose.msra.mxu0 0.0
    %3053 = vmatpush.xpose.msra.mxu0 0.0
    %3054 = vmatpush.xpose.msra.mxu0 0.0
    %3055 = vmatpush.xpose.msra.mxu0 0.0
    %3056 = vmatpush.xpose.msra.mxu0 0.0
    %3057 = vmatpush.xpose.msra.mxu0 0.0
    %3058 = vmatpush.xpose.msra.mxu0 0.0
    %3059 = vmatpush.xpose.msra.mxu0 0.0
    %3060 = vmatpush.xpose.msra.mxu0 0.0
    %3061 = vmatpush.xpose.msra.mxu0 0.0
    %3062 = vmatpush.xpose.msra.mxu0 0.0
    %3063 = vmatpush.xpose.msra.mxu0 0.0
    %3064 = vmatpush.xpose.msra.mxu0 0.0
    %3065 = vmatpush.xpose.msra.mxu0 0.0
    %v3066 = vand.u32 %v2563, 4294901760
    %v3067 = vsub.f32 %v2563, %v3066
    %v3068 = vand.u32 %v3067, 4294901760
    %v3069 = vsub.f32 %v3067, %v3068
    %v3070 = vand.u32 %v3069, 4294901760
    %3071 = vmatpush.xpose.msra.mxu0 %v3070
    %v3072 = vand.u32 %v2561, 4294901760
    %v3073 = vsub.f32 %v2561, %v3072
    %v3074 = vand.u32 %v3073, 4294901760
    %v3075 = vsub.f32 %v3073, %v3074
    %v3076 = vand.u32 %v3075, 4294901760
    %3077 = vmatpush.xpose.msra.mxu0 %v3076
    %v3078 = vand.u32 %v3013, 4294901760
    %3079 = vmatmul.f32.gmra.mxu0 %v3078
    %v3080 = vpop.f32.mrf.mxu0
    %v3081 = vadd.f32 %v3042, %v3080
    %v3082 = vand.u32 %v3015, 4294901760
    %3083 = vmatmul.f32.gmra.mxu0 %v3082
    %v3084 = vpop.f32.mrf.mxu0
    %v3085 = vadd.f32 %v3050, %v3084
    %3086 = vdwg.mxu0
    %3087 = vmatpush.xpose.msra.mxu0 0.0
    %3088 = vmatpush.xpose.msra.mxu0 0.0
    %3089 = vmatpush.xpose.msra.mxu0 0.0
    %3090 = vmatpush.xpose.msra.mxu0 0.0
    %3091 = vmatpush.xpose.msra.mxu0 0.0
    %3092 = vmatpush.xpose.msra.mxu0 0.0
    %3093 = vmatpush.xpose.msra.mxu0 0.0
    %3094 = vmatpush.xpose.msra.mxu0 0.0
    %3095 = vmatpush.xpose.msra.mxu0 0.0
    %3096 = vmatpush.xpose.msra.mxu0 0.0
    %3097 = vmatpush.xpose.msra.mxu0 0.0
    %3098 = vmatpush.xpose.msra.mxu0 0.0
    %3099 = vmatpush.xpose.msra.mxu0 0.0
    %3100 = vmatpush.xpose.msra.mxu0 0.0
    %v3101 = vand.u32 %v2563, 4294901760
    %v3102 = vsub.f32 %v2563, %v3101
    %3103 = vmatpush.xpose.msra.mxu0 %v3102
    %v3104 = vand.u32 %v2561, 4294901760
    %v3105 = vsub.f32 %v2561, %v3104
    %3106 = vmatpush.xpose.msra.mxu0 %v3105
    %v3107 = vand.u32 %v3013, 4294901760
    %v3108 = vsub.f32 %v3013, %v3107
    %3109 = vmatmul.f32.gmra.mxu0 %v3108
    %v3110 = vpop.f32.mrf.mxu0
    %v3111 = vadd.f32 %v3081, %v3110
    %v3112 = vand.u32 %v3015, 4294901760
    %v3113 = vsub.f32 %v3015, %v3112
    %3114 = vmatmul.f32.gmra.mxu0 %v3113
    %v3115 = vpop.f32.mrf.mxu0
    %v3116 = vadd.f32 %v3085, %v3115
    %3117 = vdwg.mxu0
    %3118 = vmatpush.xpose.msra.mxu0 0.0
    %3119 = vmatpush.xpose.msra.mxu0 0.0
    %3120 = vmatpush.xpose.msra.mxu0 0.0
    %3121 = vmatpush.xpose.msra.mxu0 0.0
    %3122 = vmatpush.xpose.msra.mxu0 0.0
    %3123 = vmatpush.xpose.msra.mxu0 0.0
    %3124 = vmatpush.xpose.msra.mxu0 0.0
    %3125 = vmatpush.xpose.msra.mxu0 0.0
    %3126 = vmatpush.xpose.msra.mxu0 0.0
    %3127 = vmatpush.xpose.msra.mxu0 0.0
    %3128 = vmatpush.xpose.msra.mxu0 0.0
    %3129 = vmatpush.xpose.msra.mxu0 0.0
    %3130 = vmatpush.xpose.msra.mxu0 0.0
    %3131 = vmatpush.xpose.msra.mxu0 0.0
    %v3132 = vand.u32 %v2563, 4294901760
    %3133 = vmatpush.xpose.msra.mxu0 %v3132
    %v3134 = vand.u32 %v2561, 4294901760
    %3135 = vmatpush.xpose.msra.mxu0 %v3134
    %v3136 = vand.u32 %v3013, 4294901760
    %v3137 = vsub.f32 %v3013, %v3136
    %v3138 = vand.u32 %v3137, 4294901760
    %3139 = vmatmul.f32.gmra.mxu0 %v3138
    %v3140 = vpop.f32.mrf.mxu0
    %v3141 = vadd.f32 %v3111, %v3140
    %v3142 = vand.u32 %v3015, 4294901760
    %v3143 = vsub.f32 %v3015, %v3142
    %v3144 = vand.u32 %v3143, 4294901760
    %3145 = vmatmul.f32.gmra.mxu0 %v3144
    %v3146 = vpop.f32.mrf.mxu0
    %v3147 = vadd.f32 %v3116, %v3146
    %3148 = vdwg.mxu0
    %3149 = vmatpush.xpose.msra.mxu0 0.0
    %3150 = vmatpush.xpose.msra.mxu0 0.0
    %3151 = vmatpush.xpose.msra.mxu0 0.0
    %3152 = vmatpush.xpose.msra.mxu0 0.0
    %3153 = vmatpush.xpose.msra.mxu0 0.0
    %3154 = vmatpush.xpose.msra.mxu0 0.0
    %3155 = vmatpush.xpose.msra.mxu0 0.0
    %3156 = vmatpush.xpose.msra.mxu0 0.0
    %3157 = vmatpush.xpose.msra.mxu0 0.0
    %3158 = vmatpush.xpose.msra.mxu0 0.0
    %3159 = vmatpush.xpose.msra.mxu0 0.0
    %3160 = vmatpush.xpose.msra.mxu0 0.0
    %3161 = vmatpush.xpose.msra.mxu0 0.0
    %3162 = vmatpush.xpose.msra.mxu0 0.0
    %v3163 = vand.u32 %v2563, 4294901760
    %v3164 = vsub.f32 %v2563, %v3163
    %v3165 = vand.u32 %v3164, 4294901760
    %3166 = vmatpush.xpose.msra.mxu0 %v3165
    %v3167 = vand.u32 %v2561, 4294901760
    %v3168 = vsub.f32 %v2561, %v3167
    %v3169 = vand.u32 %v3168, 4294901760
    %3170 = vmatpush.xpose.msra.mxu0 %v3169
    %v3171 = vand.u32 %v3013, 4294901760
    %3172 = vmatmul.f32.gmra.mxu0 %v3171
    %v3173 = vpop.f32.mrf.mxu0
    %v3174 = vadd.f32 %v3141, %v3173
    %v3175 = vand.u32 %v3015, 4294901760
    %3176 = vmatmul.f32.gmra.mxu0 %v3175
    %v3177 = vpop.f32.mrf.mxu0
    %v3178 = vadd.f32 %v3147, %v3177
    %3179 = vdwg.mxu0
    %3180 = vmatpush.xpose.msra.mxu0 0.0
    %3181 = vmatpush.xpose.msra.mxu0 0.0
    %3182 = vmatpush.xpose.msra.mxu0 0.0
    %3183 = vmatpush.xpose.msra.mxu0 0.0
    %3184 = vmatpush.xpose.msra.mxu0 0.0
    %3185 = vmatpush.xpose.msra.mxu0 0.0
    %3186 = vmatpush.xpose.msra.mxu0 0.0
    %3187 = vmatpush.xpose.msra.mxu0 0.0
    %3188 = vmatpush.xpose.msra.mxu0 0.0
    %3189 = vmatpush.xpose.msra.mxu0 0.0
    %3190 = vmatpush.xpose.msra.mxu0 0.0
    %3191 = vmatpush.xpose.msra.mxu0 0.0
    %3192 = vmatpush.xpose.msra.mxu0 0.0
    %3193 = vmatpush.xpose.msra.mxu0 0.0
    %v3194 = vand.u32 %v2563, 4294901760
    %3195 = vmatpush.xpose.msra.mxu0 %v3194
    %v3196 = vand.u32 %v2561, 4294901760
    %3197 = vmatpush.xpose.msra.mxu0 %v3196
    %v3198 = vand.u32 %v3013, 4294901760
    %3199 = vmatmul.f32.gmra.mxu0 %v3198
    %v3200 = vpop.f32.mrf.mxu0
    %v3201 = vadd.f32 %v3174, %v3200
    %v3202 = vand.u32 %v3015, 4294901760
    %3203 = vmatmul.f32.gmra.mxu0 %v3202
    %v3204 = vpop.f32.mrf.mxu0
    %v3205 = vadd.f32 %v3178, %v3204
    %3206 = vdwg.mxu0
    %v3207 = vsel %vm1851, %v3201, -inf
    %3208 = vmax.xlane.f32.xlu0 %v3207
    %v3209 = vpop.xlane.xlu0 %3208
    %v3210 = vsel %vm1851, %v3205, -inf
    %3211 = vmax.xlane.f32.xlu0 %v3210
    %v3212 = vpop.xlane.xlu0 %3211
    %v3213 = vsub.f32 %v3201, %v3209
    %v3214 = vsub.f32 %v3205, %v3212
    %v3215 = vmul.f32 %v3213, 1.442695
    %v3216 = vpow.pop %v3215
    %v3217 = vmul.f32 %v3214, 1.442695
    %v3218 = vpow.pop %v3217
    %v3219 = vsel %vm1851, %v3216, 0.0
    %3220 = vadd.xlane.f32.xlu0 %v3219
    %v3221 = vpop.xlane.xlu0 %3220
    %v3222 = vsel %vm1851, %v3218, 0.0
    %3223 = vadd.xlane.f32.xlu0 %v3222
    %v3224 = vpop.xlane.xlu0 %3223
    %v3225 = vrcp.pop %v3221
    %v3226 = vmul.f32 %v3221, %v3225
    %v3227 = vsub.f32 1.0, %v3226
    %v3228 = vmul.f32 %v3225, %v3227
    %v3229 = vadd.f32 %v3225, %v3228
    %vm3230 = vweird.f32 %v3221
    %vm3231 = vweird.f32 %v3225
    %vm3232 = vmor %vm3230, %vm3231
    %v3233 = vsel %vm3232, %v3225, %v3229
    %v3234 = vand.u32 2147483647, %v3221
    %vm3235 = vcmp.eq.f32.partialorder %v3234, 8.507059e+37
    %v3236 = vand.u32 %v3221, 2147483648
    %v3237 = vor.u32 1.1754944e-38, %v3236
    %v3238 = vsel %vm3235, %v3237, %v3233
    %v3239 = vmul.f32 %v3216, %v3238
    %v3240 = vrcp.pop %v3224
    %v3241 = vmul.f32 %v3224, %v3240
    %v3242 = vsub.f32 1.0, %v3241
    %v3243 = vmul.f32 %v3240, %v3242
    %v3244 = vadd.f32 %v3240, %v3243
    %vm3245 = vweird.f32 %v3224
    %vm3246 = vweird.f32 %v3240
    %vm3247 = vmor %vm3245, %vm3246
    %v3248 = vsel %vm3247, %v3240, %v3244
    %v3249 = vand.u32 2147483647, %v3224
    %vm3250 = vcmp.eq.f32.partialorder %v3249, 8.507059e+37
    %v3251 = vand.u32 %v3224, 2147483648
    %v3252 = vor.u32 1.1754944e-38, %v3251
    %v3253 = vsel %vm3250, %v3252, %v3248
    %v3254 = vmul.f32 %v3218, %v3253
    %v3256 = vsel %vm1851, %v3239, 0
    %v3259 = vsel %vm1851, %v3254, 0
    %3261 = vmatpush.msra.mxu0 0.0
    %3262 = vmatpush.msra.mxu0 0.0
    %3263 = vmatpush.msra.mxu0 0.0
    %3264 = vmatpush.msra.mxu0 0.0
    %3265 = vmatpush.msra.mxu0 0.0
    %3266 = vmatpush.msra.mxu0 0.0
    %3267 = vmatpush.msra.mxu0 0.0
    %3268 = vmatpush.msra.mxu0 0.0
    %3269 = vmatpush.msra.mxu0 0.0
    %3270 = vmatpush.msra.mxu0 0.0
    %3271 = vmatpush.msra.mxu0 0.0
    %3272 = vmatpush.msra.mxu0 0.0
    %3273 = vmatpush.msra.mxu0 0.0
    %3274 = vmatpush.msra.mxu0 0.0
    %v3275 = vand.u32 %v2808, 4294901760
    %3276 = vmatpush.msra.mxu0 %v3275
    %v3277 = vand.u32 %v2806, 4294901760
    %3278 = vmatpush.msra.mxu0 %v3277
    %v3279 = vand.u32 %v3256, 4294901760
    %v3280 = vsub.f32 %v3256, %v3279
    %v3281 = vand.u32 %v3280, 4294901760
    %v3282 = vsub.f32 %v3280, %v3281
    %v3283 = vand.u32 %v3282, 4294901760
    %3284 = vmatmul.f32.gmra.mxu0 %v3283
    %v3285 = vpop.f32.mrf.mxu0
    %v3286 = vadd.f32 0.0, %v3285
    %v3287 = vand.u32 %v3259, 4294901760
    %v3288 = vsub.f32 %v3259, %v3287
    %v3289 = vand.u32 %v3288, 4294901760
    %v3290 = vsub.f32 %v3288, %v3289
    %v3291 = vand.u32 %v3290, 4294901760
    %3292 = vmatmul.f32.gmra.mxu0 %v3291
    %v3293 = vpop.f32.mrf.mxu0
    %v3294 = vadd.f32 0.0, %v3293
    %3295 = vdwg.mxu0
    %3296 = vmatpush.msra.mxu0 0.0
    %3297 = vmatpush.msra.mxu0 0.0
    %3298 = vmatpush.msra.mxu0 0.0
    %3299 = vmatpush.msra.mxu0 0.0
    %3300 = vmatpush.msra.mxu0 0.0
    %3301 = vmatpush.msra.mxu0 0.0
    %3302 = vmatpush.msra.mxu0 0.0
    %3303 = vmatpush.msra.mxu0 0.0
    %3304 = vmatpush.msra.mxu0 0.0
    %3305 = vmatpush.msra.mxu0 0.0
    %3306 = vmatpush.msra.mxu0 0.0
    %3307 = vmatpush.msra.mxu0 0.0
    %3308 = vmatpush.msra.mxu0 0.0
    %3309 = vmatpush.msra.mxu0 0.0
    %v3310 = vand.u32 %v2808, 4294901760
    %v3311 = vsub.f32 %v2808, %v3310
    %v3312 = vand.u32 %v3311, 4294901760
    %v3313 = vsub.f32 %v3311, %v3312
    %v3314 = vand.u32 %v3313, 4294901760
    %3315 = vmatpush.msra.mxu0 %v3314
    %v3316 = vand.u32 %v2806, 4294901760
    %v3317 = vsub.f32 %v2806, %v3316
    %v3318 = vand.u32 %v3317, 4294901760
    %v3319 = vsub.f32 %v3317, %v3318
    %v3320 = vand.u32 %v3319, 4294901760
    %3321 = vmatpush.msra.mxu0 %v3320
    %v3322 = vand.u32 %v3256, 4294901760
    %3323 = vmatmul.f32.gmra.mxu0 %v3322
    %v3324 = vpop.f32.mrf.mxu0
    %v3325 = vadd.f32 %v3286, %v3324
    %v3326 = vand.u32 %v3259, 4294901760
    %3327 = vmatmul.f32.gmra.mxu0 %v3326
    %v3328 = vpop.f32.mrf.mxu0
    %v3329 = vadd.f32 %v3294, %v3328
    %3330 = vdwg.mxu0
    %3331 = vmatpush.msra.mxu0 0.0
    %3332 = vmatpush.msra.mxu0 0.0
    %3333 = vmatpush.msra.mxu0 0.0
    %3334 = vmatpush.msra.mxu0 0.0
    %3335 = vmatpush.msra.mxu0 0.0
    %3336 = vmatpush.msra.mxu0 0.0
    %3337 = vmatpush.msra.mxu0 0.0
    %3338 = vmatpush.msra.mxu0 0.0
    %3339 = vmatpush.msra.mxu0 0.0
    %3340 = vmatpush.msra.mxu0 0.0
    %3341 = vmatpush.msra.mxu0 0.0
    %3342 = vmatpush.msra.mxu0 0.0
    %3343 = vmatpush.msra.mxu0 0.0
    %3344 = vmatpush.msra.mxu0 0.0
    %v3345 = vand.u32 %v2808, 4294901760
    %v3346 = vsub.f32 %v2808, %v3345
    %3347 = vmatpush.msra.mxu0 %v3346
    %v3348 = vand.u32 %v2806, 4294901760
    %v3349 = vsub.f32 %v2806, %v3348
    %3350 = vmatpush.msra.mxu0 %v3349
    %v3351 = vand.u32 %v3256, 4294901760
    %v3352 = vsub.f32 %v3256, %v3351
    %3353 = vmatmul.f32.gmra.mxu0 %v3352
    %v3354 = vpop.f32.mrf.mxu0
    %v3355 = vadd.f32 %v3325, %v3354
    %v3356 = vand.u32 %v3259, 4294901760
    %v3357 = vsub.f32 %v3259, %v3356
    %3358 = vmatmul.f32.gmra.mxu0 %v3357
    %v3359 = vpop.f32.mrf.mxu0
    %v3360 = vadd.f32 %v3329, %v3359
    %3361 = vdwg.mxu0
    %3362 = vmatpush.msra.mxu0 0.0
    %3363 = vmatpush.msra.mxu0 0.0
    %3364 = vmatpush.msra.mxu0 0.0
    %3365 = vmatpush.msra.mxu0 0.0
    %3366 = vmatpush.msra.mxu0 0.0
    %3367 = vmatpush.msra.mxu0 0.0
    %3368 = vmatpush.msra.mxu0 0.0
    %3369 = vmatpush.msra.mxu0 0.0
    %3370 = vmatpush.msra.mxu0 0.0
    %3371 = vmatpush.msra.mxu0 0.0
    %3372 = vmatpush.msra.mxu0 0.0
    %3373 = vmatpush.msra.mxu0 0.0
    %3374 = vmatpush.msra.mxu0 0.0
    %3375 = vmatpush.msra.mxu0 0.0
    %v3376 = vand.u32 %v2808, 4294901760
    %3377 = vmatpush.msra.mxu0 %v3376
    %v3378 = vand.u32 %v2806, 4294901760
    %3379 = vmatpush.msra.mxu0 %v3378
    %v3380 = vand.u32 %v3256, 4294901760
    %v3381 = vsub.f32 %v3256, %v3380
    %v3382 = vand.u32 %v3381, 4294901760
    %3383 = vmatmul.f32.gmra.mxu0 %v3382
    %v3384 = vpop.f32.mrf.mxu0
    %v3385 = vadd.f32 %v3355, %v3384
    %v3386 = vand.u32 %v3259, 4294901760
    %v3387 = vsub.f32 %v3259, %v3386
    %v3388 = vand.u32 %v3387, 4294901760
    %3389 = vmatmul.f32.gmra.mxu0 %v3388
    %v3390 = vpop.f32.mrf.mxu0
    %v3391 = vadd.f32 %v3360, %v3390
    %3392 = vdwg.mxu0
    %3393 = vmatpush.msra.mxu0 0.0
    %3394 = vmatpush.msra.mxu0 0.0
    %3395 = vmatpush.msra.mxu0 0.0
    %3396 = vmatpush.msra.mxu0 0.0
    %3397 = vmatpush.msra.mxu0 0.0
    %3398 = vmatpush.msra.mxu0 0.0
    %3399 = vmatpush.msra.mxu0 0.0
    %3400 = vmatpush.msra.mxu0 0.0
    %3401 = vmatpush.msra.mxu0 0.0
    %3402 = vmatpush.msra.mxu0 0.0
    %3403 = vmatpush.msra.mxu0 0.0
    %3404 = vmatpush.msra.mxu0 0.0
    %3405 = vmatpush.msra.mxu0 0.0
    %3406 = vmatpush.msra.mxu0 0.0
    %v3407 = vand.u32 %v2808, 4294901760
    %v3408 = vsub.f32 %v2808, %v3407
    %v3409 = vand.u32 %v3408, 4294901760
    %3410 = vmatpush.msra.mxu0 %v3409
    %v3411 = vand.u32 %v2806, 4294901760
    %v3412 = vsub.f32 %v2806, %v3411
    %v3413 = vand.u32 %v3412, 4294901760
    %3414 = vmatpush.msra.mxu0 %v3413
    %v3415 = vand.u32 %v3256, 4294901760
    %3416 = vmatmul.f32.gmra.mxu0 %v3415
    %v3417 = vpop.f32.mrf.mxu0
    %v3418 = vadd.f32 %v3385, %v3417
    %v3419 = vand.u32 %v3259, 4294901760
    %3420 = vmatmul.f32.gmra.mxu0 %v3419
    %v3421 = vpop.f32.mrf.mxu0
    %v3422 = vadd.f32 %v3391, %v3421
    %3423 = vdwg.mxu0
    %3424 = vmatpush.msra.mxu0 0.0
    %3425 = vmatpush.msra.mxu0 0.0
    %3426 = vmatpush.msra.mxu0 0.0
    %3427 = vmatpush.msra.mxu0 0.0
    %3428 = vmatpush.msra.mxu0 0.0
    %3429 = vmatpush.msra.mxu0 0.0
    %3430 = vmatpush.msra.mxu0 0.0
    %3431 = vmatpush.msra.mxu0 0.0
    %3432 = vmatpush.msra.mxu0 0.0
    %3433 = vmatpush.msra.mxu0 0.0
    %3434 = vmatpush.msra.mxu0 0.0
    %3435 = vmatpush.msra.mxu0 0.0
    %3436 = vmatpush.msra.mxu0 0.0
    %3437 = vmatpush.msra.mxu0 0.0
    %v3438 = vand.u32 %v2808, 4294901760
    %3439 = vmatpush.msra.mxu0 %v3438
    %v3440 = vand.u32 %v2806, 4294901760
    %3441 = vmatpush.msra.mxu0 %v3440
    %v3442 = vand.u32 %v3256, 4294901760
    %3443 = vmatmul.f32.gmra.mxu0 %v3442
    %v3444 = vpop.f32.mrf.mxu0
    %v3445 = vadd.f32 %v3418, %v3444
    %v3446 = vand.u32 %v3259, 4294901760
    %3447 = vmatmul.f32.gmra.mxu0 %v3446
    %v3448 = vpop.f32.mrf.mxu0
    %v3449 = vadd.f32 %v3422, %v3448
    %3450 = vdwg.mxu0
    %3453 = vrot.lane.b32.xlu0 %v3445, 64
    %v3454 = vpop.permute.xlu0 %3453
    %3455 = vrot.lane.b32.xlu0 %v3449, 64
    %v3456 = vpop.permute.xlu0 %3455
    %3459 = vst.msk [vmem:[#allocation2 + $0x8] sm:$0xff] %vm2548, %v3454
    %3460 = vst.msk [vmem:[#allocation2 + $0x18] sm:$0xff] %vm2548, %v3456
    %v3461 = vld [vmem:[#allocation2] sm:$0xff]
    %v3462 = vld [vmem:[#allocation2 + $0x8] sm:$0xff]
    %v3463 = vld [vmem:[#allocation2 + $0x10] sm:$0xff]
    %v3464 = vld [vmem:[#allocation2 + $0x18] sm:$0xff]
    %v3465 = vld [vmem:[%s5] sm:$0xff]
    %v3466 = vld [vmem:[%s5 + $0x8] sm:$0xff]
    %v3467 = vld [vmem:[%s5 + $0x10] sm:$0xff]
    %v3468 = vld [vmem:[%s5 + $0x18] sm:$0xff]
    %v3469 = vld [vmem:[%s5 + $0x20] sm:$0xff]
    %v3470 = vld [vmem:[%s5 + $0x28] sm:$0xff]
    %v3471 = vld [vmem:[%s5 + $0x30] sm:$0xff]
    %v3472 = vld [vmem:[%s5 + $0x38] sm:$0xff]
    %v3473 = vld [vmem:[%s5 + $0x40] sm:$0xff]
    %v3474 = vld [vmem:[%s5 + $0x48] sm:$0xff]
    %v3475 = vld [vmem:[%s5 + $0x50] sm:$0xff]
    %v3476 = vld [vmem:[%s5 + $0x58] sm:$0xff]
    %v3477 = vld [vmem:[%s5 + $0x60] sm:$0xff]
    %v3478 = vld [vmem:[%s5 + $0x68] sm:$0xff]
    %v3479 = vld [vmem:[%s5 + $0x70] sm:$0xff]
    %v3480 = vld [vmem:[%s5 + $0x78] sm:$0xff]
    %v3481 = vld [vmem:[%s5 + $0x80] sm:$0xff]
    %v3482 = vld [vmem:[%s5 + $0x88] sm:$0xff]
    %v3483 = vld [vmem:[%s5 + $0x90] sm:$0xff]
    %v3484 = vld [vmem:[%s5 + $0x98] sm:$0xff]
    %v3485 = vld [vmem:[%s5 + $0xa0] sm:$0xff]
    %v3486 = vld [vmem:[%s5 + $0xa8] sm:$0xff]
    %v3487 = vld [vmem:[%s5 + $0xb0] sm:$0xff]
    %v3488 = vld [vmem:[%s5 + $0xb8] sm:$0xff]
    %v3489 = vld [vmem:[%s5 + $0xc0] sm:$0xff]
    %v3490 = vld [vmem:[%s5 + $0xc8] sm:$0xff]
    %v3491 = vld [vmem:[%s5 + $0xd0] sm:$0xff]
    %v3492 = vld [vmem:[%s5 + $0xd8] sm:$0xff]
    %v3493 = vld [vmem:[%s5 + $0xe0] sm:$0xff]
    %v3494 = vld [vmem:[%s5 + $0xe8] sm:$0xff]
    %v3495 = vld [vmem:[%s5 + $0xf0] sm:$0xff]
    %v3496 = vld [vmem:[%s5 + $0xf8] sm:$0xff]
    %v3497 = vand.u32 %v3480, 4294901760
    %3498 = vmatpush.msra.mxu0 %v3497
    %v3499 = vand.u32 %v3479, 4294901760
    %3500 = vmatpush.msra.mxu0 %v3499
    %v3501 = vand.u32 %v3478, 4294901760
    %3502 = vmatpush.msra.mxu0 %v3501
    %v3503 = vand.u32 %v3477, 4294901760
    %3504 = vmatpush.msra.mxu0 %v3503
    %v3505 = vand.u32 %v3476, 4294901760
    %3506 = vmatpush.msra.mxu0 %v3505
    %v3507 = vand.u32 %v3475, 4294901760
    %3508 = vmatpush.msra.mxu0 %v3507
    %v3509 = vand.u32 %v3474, 4294901760
    %3510 = vmatpush.msra.mxu0 %v3509
    %v3511 = vand.u32 %v3473, 4294901760
    %3512 = vmatpush.msra.mxu0 %v3511
    %v3513 = vand.u32 %v3472, 4294901760
    %3514 = vmatpush.msra.mxu0 %v3513
    %v3515 = vand.u32 %v3471, 4294901760
    %3516 = vmatpush.msra.mxu0 %v3515
    %v3517 = vand.u32 %v3470, 4294901760
    %3518 = vmatpush.msra.mxu0 %v3517
    %v3519 = vand.u32 %v3469, 4294901760
    %3520 = vmatpush.msra.mxu0 %v3519
    %v3521 = vand.u32 %v3468, 4294901760
    %3522 = vmatpush.msra.mxu0 %v3521
    %v3523 = vand.u32 %v3467, 4294901760
    %3524 = vmatpush.msra.mxu0 %v3523
    %v3525 = vand.u32 %v3466, 4294901760
    %3526 = vmatpush.msra.mxu0 %v3525
    %v3527 = vand.u32 %v3465, 4294901760
    %3528 = vmatpush.msra.mxu0 %v3527
    %v3529 = vand.u32 %v3461, 4294901760
    %v3530 = vsub.f32 %v3461, %v3529
    %v3531 = vand.u32 %v3530, 4294901760
    %v3532 = vsub.f32 %v3530, %v3531
    %v3533 = vand.u32 %v3532, 4294901760
    %3534 = vmatmul.f32.gmra.mxu0 %v3533
    %v3535 = vpop.f32.mrf.mxu0
    %v3536 = vadd.f32 0.0, %v3535
    %v3537 = vand.u32 %v3463, 4294901760
    %v3538 = vsub.f32 %v3463, %v3537
    %v3539 = vand.u32 %v3538, 4294901760
    %v3540 = vsub.f32 %v3538, %v3539
    %v3541 = vand.u32 %v3540, 4294901760
    %3542 = vmatmul.f32.gmra.mxu0 %v3541
    %v3543 = vpop.f32.mrf.mxu0
    %v3544 = vadd.f32 0.0, %v3543
    %3545 = vdwg.mxu0
    %v3546 = vand.u32 %v3480, 4294901760
    %v3547 = vsub.f32 %v3480, %v3546
    %v3548 = vand.u32 %v3547, 4294901760
    %v3549 = vsub.f32 %v3547, %v3548
    %v3550 = vand.u32 %v3549, 4294901760
    %3551 = vmatpush.msra.mxu0 %v3550
    %v3552 = vand.u32 %v3479, 4294901760
    %v3553 = vsub.f32 %v3479, %v3552
    %v3554 = vand.u32 %v3553, 4294901760
    %v3555 = vsub.f32 %v3553, %v3554
    %v3556 = vand.u32 %v3555, 4294901760
    %3557 = vmatpush.msra.mxu0 %v3556
    %v3558 = vand.u32 %v3478, 4294901760
    %v3559 = vsub.f32 %v3478, %v3558
    %v3560 = vand.u32 %v3559, 4294901760
    %v3561 = vsub.f32 %v3559, %v3560
    %v3562 = vand.u32 %v3561, 4294901760
    %3563 = vmatpush.msra.mxu0 %v3562
    %v3564 = vand.u32 %v3477, 4294901760
    %v3565 = vsub.f32 %v3477, %v3564
    %v3566 = vand.u32 %v3565, 4294901760
    %v3567 = vsub.f32 %v3565, %v3566
    %v3568 = vand.u32 %v3567, 4294901760
    %3569 = vmatpush.msra.mxu0 %v3568
    %v3570 = vand.u32 %v3476, 4294901760
    %v3571 = vsub.f32 %v3476, %v3570
    %v3572 = vand.u32 %v3571, 4294901760
    %v3573 = vsub.f32 %v3571, %v3572
    %v3574 = vand.u32 %v3573, 4294901760
    %3575 = vmatpush.msra.mxu0 %v3574
    %v3576 = vand.u32 %v3475, 4294901760
    %v3577 = vsub.f32 %v3475, %v3576
    %v3578 = vand.u32 %v3577, 4294901760
    %v3579 = vsub.f32 %v3577, %v3578
    %v3580 = vand.u32 %v3579, 4294901760
    %3581 = vmatpush.msra.mxu0 %v3580
    %v3582 = vand.u32 %v3474, 4294901760
    %v3583 = vsub.f32 %v3474, %v3582
    %v3584 = vand.u32 %v3583, 4294901760
    %v3585 = vsub.f32 %v3583, %v3584
    %v3586 = vand.u32 %v3585, 4294901760
    %3587 = vmatpush.msra.mxu0 %v3586
    %v3588 = vand.u32 %v3473, 4294901760
    %v3589 = vsub.f32 %v3473, %v3588
    %v3590 = vand.u32 %v3589, 4294901760
    %v3591 = vsub.f32 %v3589, %v3590
    %v3592 = vand.u32 %v3591, 4294901760
    %3593 = vmatpush.msra.mxu0 %v3592
    %v3594 = vand.u32 %v3472, 4294901760
    %v3595 = vsub.f32 %v3472, %v3594
    %v3596 = vand.u32 %v3595, 4294901760
    %v3597 = vsub.f32 %v3595, %v3596
    %v3598 = vand.u32 %v3597, 4294901760
    %3599 = vmatpush.msra.mxu0 %v3598
    %v3600 = vand.u32 %v3471, 4294901760
    %v3601 = vsub.f32 %v3471, %v3600
    %v3602 = vand.u32 %v3601, 4294901760
    %v3603 = vsub.f32 %v3601, %v3602
    %v3604 = vand.u32 %v3603, 4294901760
    %3605 = vmatpush.msra.mxu0 %v3604
    %v3606 = vand.u32 %v3470, 4294901760
    %v3607 = vsub.f32 %v3470, %v3606
    %v3608 = vand.u32 %v3607, 4294901760
    %v3609 = vsub.f32 %v3607, %v3608
    %v3610 = vand.u32 %v3609, 4294901760
    %3611 = vmatpush.msra.mxu0 %v3610
    %v3612 = vand.u32 %v3469, 4294901760
    %v3613 = vsub.f32 %v3469, %v3612
    %v3614 = vand.u32 %v3613, 4294901760
    %v3615 = vsub.f32 %v3613, %v3614
    %v3616 = vand.u32 %v3615, 4294901760
    %3617 = vmatpush.msra.mxu0 %v3616
    %v3618 = vand.u32 %v3468, 4294901760
    %v3619 = vsub.f32 %v3468, %v3618
    %v3620 = vand.u32 %v3619, 4294901760
    %v3621 = vsub.f32 %v3619, %v3620
    %v3622 = vand.u32 %v3621, 4294901760
    %3623 = vmatpush.msra.mxu0 %v3622
    %v3624 = vand.u32 %v3467, 4294901760
    %v3625 = vsub.f32 %v3467, %v3624
    %v3626 = vand.u32 %v3625, 4294901760
    %v3627 = vsub.f32 %v3625, %v3626
    %v3628 = vand.u32 %v3627, 4294901760
    %3629 = vmatpush.msra.mxu0 %v3628
    %v3630 = vand.u32 %v3466, 4294901760
    %v3631 = vsub.f32 %v3466, %v3630
    %v3632 = vand.u32 %v3631, 4294901760
    %v3633 = vsub.f32 %v3631, %v3632
    %v3634 = vand.u32 %v3633, 4294901760
    %3635 = vmatpush.msra.mxu0 %v3634
    %v3636 = vand.u32 %v3465, 4294901760
    %v3637 = vsub.f32 %v3465, %v3636
    %v3638 = vand.u32 %v3637, 4294901760
    %v3639 = vsub.f32 %v3637, %v3638
    %v3640 = vand.u32 %v3639, 4294901760
    %3641 = vmatpush.msra.mxu0 %v3640
    %v3642 = vand.u32 %v3461, 4294901760
    %3643 = vmatmul.f32.gmra.mxu0 %v3642
    %v3644 = vpop.f32.mrf.mxu0
    %v3645 = vadd.f32 %v3536, %v3644
    %v3646 = vand.u32 %v3463, 4294901760
    %3647 = vmatmul.f32.gmra.mxu0 %v3646
    %v3648 = vpop.f32.mrf.mxu0
    %v3649 = vadd.f32 %v3544, %v3648
    %3650 = vdwg.mxu0
    %v3651 = vand.u32 %v3480, 4294901760
    %v3652 = vsub.f32 %v3480, %v3651
    %3653 = vmatpush.msra.mxu0 %v3652
    %v3654 = vand.u32 %v3479, 4294901760
    %v3655 = vsub.f32 %v3479, %v3654
    %3656 = vmatpush.msra.mxu0 %v3655
    %v3657 = vand.u32 %v3478, 4294901760
    %v3658 = vsub.f32 %v3478, %v3657
    %3659 = vmatpush.msra.mxu0 %v3658
    %v3660 = vand.u32 %v3477, 4294901760
    %v3661 = vsub.f32 %v3477, %v3660
    %3662 = vmatpush.msra.mxu0 %v3661
    %v3663 = vand.u32 %v3476, 4294901760
    %v3664 = vsub.f32 %v3476, %v3663
    %3665 = vmatpush.msra.mxu0 %v3664
    %v3666 = vand.u32 %v3475, 4294901760
    %v3667 = vsub.f32 %v3475, %v3666
    %3668 = vmatpush.msra.mxu0 %v3667
    %v3669 = vand.u32 %v3474, 4294901760
    %v3670 = vsub.f32 %v3474, %v3669
    %3671 = vmatpush.msra.mxu0 %v3670
    %v3672 = vand.u32 %v3473, 4294901760
    %v3673 = vsub.f32 %v3473, %v3672
    %3674 = vmatpush.msra.mxu0 %v3673
    %v3675 = vand.u32 %v3472, 4294901760
    %v3676 = vsub.f32 %v3472, %v3675
    %3677 = vmatpush.msra.mxu0 %v3676
    %v3678 = vand.u32 %v3471, 4294901760
    %v3679 = vsub.f32 %v3471, %v3678
    %3680 = vmatpush.msra.mxu0 %v3679
    %v3681 = vand.u32 %v3470, 4294901760
    %v3682 = vsub.f32 %v3470, %v3681
    %3683 = vmatpush.msra.mxu0 %v3682
    %v3684 = vand.u32 %v3469, 4294901760
    %v3685 = vsub.f32 %v3469, %v3684
    %3686 = vmatpush.msra.mxu0 %v3685
    %v3687 = vand.u32 %v3468, 4294901760
    %v3688 = vsub.f32 %v3468, %v3687
    %3689 = vmatpush.msra.mxu0 %v3688
    %v3690 = vand.u32 %v3467, 4294901760
    %v3691 = vsub.f32 %v3467, %v3690
    %3692 = vmatpush.msra.mxu0 %v3691
    %v3693 = vand.u32 %v3466, 4294901760
    %v3694 = vsub.f32 %v3466, %v3693
    %3695 = vmatpush.msra.mxu0 %v3694
    %v3696 = vand.u32 %v3465, 4294901760
    %v3697 = vsub.f32 %v3465, %v3696
    %3698 = vmatpush.msra.mxu0 %v3697
    %v3699 = vand.u32 %v3461, 4294901760
    %v3700 = vsub.f32 %v3461, %v3699
    %3701 = vmatmul.f32.gmra.mxu0 %v3700
    %v3702 = vpop.f32.mrf.mxu0
    %v3703 = vadd.f32 %v3645, %v3702
    %v3704 = vand.u32 %v3463, 4294901760
    %v3705 = vsub.f32 %v3463, %v3704
    %3706 = vmatmul.f32.gmra.mxu0 %v3705
    %v3707 = vpop.f32.mrf.mxu0
    %v3708 = vadd.f32 %v3649, %v3707
    %3709 = vdwg.mxu0
    %v3710 = vand.u32 %v3480, 4294901760
    %3711 = vmatpush.msra.mxu0 %v3710
    %v3712 = vand.u32 %v3479, 4294901760
    %3713 = vmatpush.msra.mxu0 %v3712
    %v3714 = vand.u32 %v3478, 4294901760
    %3715 = vmatpush.msra.mxu0 %v3714
    %v3716 = vand.u32 %v3477, 4294901760
    %3717 = vmatpush.msra.mxu0 %v3716
    %v3718 = vand.u32 %v3476, 4294901760
    %3719 = vmatpush.msra.mxu0 %v3718
    %v3720 = vand.u32 %v3475, 4294901760
    %3721 = vmatpush.msra.mxu0 %v3720
    %v3722 = vand.u32 %v3474, 4294901760
    %3723 = vmatpush.msra.mxu0 %v3722
    %v3724 = vand.u32 %v3473, 4294901760
    %3725 = vmatpush.msra.mxu0 %v3724
    %v3726 = vand.u32 %v3472, 4294901760
    %3727 = vmatpush.msra.mxu0 %v3726
    %v3728 = vand.u32 %v3471, 4294901760
    %3729 = vmatpush.msra.mxu0 %v3728
    %v3730 = vand.u32 %v3470, 4294901760
    %3731 = vmatpush.msra.mxu0 %v3730
    %v3732 = vand.u32 %v3469, 4294901760
    %3733 = vmatpush.msra.mxu0 %v3732
    %v3734 = vand.u32 %v3468, 4294901760
    %3735 = vmatpush.msra.mxu0 %v3734
    %v3736 = vand.u32 %v3467, 4294901760
    %3737 = vmatpush.msra.mxu0 %v3736
    %v3738 = vand.u32 %v3466, 4294901760
    %3739 = vmatpush.msra.mxu0 %v3738
    %v3740 = vand.u32 %v3465, 4294901760
    %3741 = vmatpush.msra.mxu0 %v3740
    %v3742 = vand.u32 %v3461, 4294901760
    %v3743 = vsub.f32 %v3461, %v3742
    %v3744 = vand.u32 %v3743, 4294901760
    %3745 = vmatmul.f32.gmra.mxu0 %v3744
    %v3746 = vpop.f32.mrf.mxu0
    %v3747 = vadd.f32 %v3703, %v3746
    %v3748 = vand.u32 %v3463, 4294901760
    %v3749 = vsub.f32 %v3463, %v3748
    %v3750 = vand.u32 %v3749, 4294901760
    %3751 = vmatmul.f32.gmra.mxu0 %v3750
    %v3752 = vpop.f32.mrf.mxu0
    %v3753 = vadd.f32 %v3708, %v3752
    %3754 = vdwg.mxu0
    %v3755 = vand.u32 %v3480, 4294901760
    %v3756 = vsub.f32 %v3480, %v3755
    %v3757 = vand.u32 %v3756, 4294901760
    %3758 = vmatpush.msra.mxu0 %v3757
    %v3759 = vand.u32 %v3479, 4294901760
    %v3760 = vsub.f32 %v3479, %v3759
    %v3761 = vand.u32 %v3760, 4294901760
    %3762 = vmatpush.msra.mxu0 %v3761
    %v3763 = vand.u32 %v3478, 4294901760
    %v3764 = vsub.f32 %v3478, %v3763
    %v3765 = vand.u32 %v3764, 4294901760
    %3766 = vmatpush.msra.mxu0 %v3765
    %v3767 = vand.u32 %v3477, 4294901760
    %v3768 = vsub.f32 %v3477, %v3767
    %v3769 = vand.u32 %v3768, 4294901760
    %3770 = vmatpush.msra.mxu0 %v3769
    %v3771 = vand.u32 %v3476, 4294901760
    %v3772 = vsub.f32 %v3476, %v3771
    %v3773 = vand.u32 %v3772, 4294901760
    %3774 = vmatpush.msra.mxu0 %v3773
    %v3775 = vand.u32 %v3475, 4294901760
    %v3776 = vsub.f32 %v3475, %v3775
    %v3777 = vand.u32 %v3776, 4294901760
    %3778 = vmatpush.msra.mxu0 %v3777
    %v3779 = vand.u32 %v3474, 4294901760
    %v3780 = vsub.f32 %v3474, %v3779
    %v3781 = vand.u32 %v3780, 4294901760
    %3782 = vmatpush.msra.mxu0 %v3781
    %v3783 = vand.u32 %v3473, 4294901760
    %v3784 = vsub.f32 %v3473, %v3783
    %v3785 = vand.u32 %v3784, 4294901760
    %3786 = vmatpush.msra.mxu0 %v3785
    %v3787 = vand.u32 %v3472, 4294901760
    %v3788 = vsub.f32 %v3472, %v3787
    %v3789 = vand.u32 %v3788, 4294901760
    %3790 = vmatpush.msra.mxu0 %v3789
    %v3791 = vand.u32 %v3471, 4294901760
    %v3792 = vsub.f32 %v3471, %v3791
    %v3793 = vand.u32 %v3792, 4294901760
    %3794 = vmatpush.msra.mxu0 %v3793
    %v3795 = vand.u32 %v3470, 4294901760
    %v3796 = vsub.f32 %v3470, %v3795
    %v3797 = vand.u32 %v3796, 4294901760
    %3798 = vmatpush.msra.mxu0 %v3797
    %v3799 = vand.u32 %v3469, 4294901760
    %v3800 = vsub.f32 %v3469, %v3799
    %v3801 = vand.u32 %v3800, 4294901760
    %3802 = vmatpush.msra.mxu0 %v3801
    %v3803 = vand.u32 %v3468, 4294901760
    %v3804 = vsub.f32 %v3468, %v3803
    %v3805 = vand.u32 %v3804, 4294901760
    %3806 = vmatpush.msra.mxu0 %v3805
    %v3807 = vand.u32 %v3467, 4294901760
    %v3808 = vsub.f32 %v3467, %v3807
    %v3809 = vand.u32 %v3808, 4294901760
    %3810 = vmatpush.msra.mxu0 %v3809
    %v3811 = vand.u32 %v3466, 4294901760
    %v3812 = vsub.f32 %v3466, %v3811
    %v3813 = vand.u32 %v3812, 4294901760
    %3814 = vmatpush.msra.mxu0 %v3813
    %v3815 = vand.u32 %v3465, 4294901760
    %v3816 = vsub.f32 %v3465, %v3815
    %v3817 = vand.u32 %v3816, 4294901760
    %3818 = vmatpush.msra.mxu0 %v3817
    %v3819 = vand.u32 %v3461, 4294901760
    %3820 = vmatmul.f32.gmra.mxu0 %v3819
    %v3821 = vpop.f32.mrf.mxu0
    %v3822 = vadd.f32 %v3747, %v3821
    %v3823 = vand.u32 %v3463, 4294901760
    %3824 = vmatmul.f32.gmra.mxu0 %v3823
    %v3825 = vpop.f32.mrf.mxu0
    %v3826 = vadd.f32 %v3753, %v3825
    %3827 = vdwg.mxu0
    %v3828 = vand.u32 %v3480, 4294901760
    %3829 = vmatpush.msra.mxu0 %v3828
    %v3830 = vand.u32 %v3479, 4294901760
    %3831 = vmatpush.msra.mxu0 %v3830
    %v3832 = vand.u32 %v3478, 4294901760
    %3833 = vmatpush.msra.mxu0 %v3832
    %v3834 = vand.u32 %v3477, 4294901760
    %3835 = vmatpush.msra.mxu0 %v3834
    %v3836 = vand.u32 %v3476, 4294901760
    %3837 = vmatpush.msra.mxu0 %v3836
    %v3838 = vand.u32 %v3475, 4294901760
    %3839 = vmatpush.msra.mxu0 %v3838
    %v3840 = vand.u32 %v3474, 4294901760
    %3841 = vmatpush.msra.mxu0 %v3840
    %v3842 = vand.u32 %v3473, 4294901760
    %3843 = vmatpush.msra.mxu0 %v3842
    %v3844 = vand.u32 %v3472, 4294901760
    %3845 = vmatpush.msra.mxu0 %v3844
    %v3846 = vand.u32 %v3471, 4294901760
    %3847 = vmatpush.msra.mxu0 %v3846
    %v3848 = vand.u32 %v3470, 4294901760
    %3849 = vmatpush.msra.mxu0 %v3848
    %v3850 = vand.u32 %v3469, 4294901760
    %3851 = vmatpush.msra.mxu0 %v3850
    %v3852 = vand.u32 %v3468, 4294901760
    %3853 = vmatpush.msra.mxu0 %v3852
    %v3854 = vand.u32 %v3467, 4294901760
    %3855 = vmatpush.msra.mxu0 %v3854
    %v3856 = vand.u32 %v3466, 4294901760
    %3857 = vmatpush.msra.mxu0 %v3856
    %v3858 = vand.u32 %v3465, 4294901760
    %3859 = vmatpush.msra.mxu0 %v3858
    %v3860 = vand.u32 %v3461, 4294901760
    %3861 = vmatmul.f32.gmra.mxu0 %v3860
    %v3862 = vpop.f32.mrf.mxu0
    %v3863 = vadd.f32 %v3822, %v3862
    %v3864 = vand.u32 %v3463, 4294901760
    %3865 = vmatmul.f32.gmra.mxu0 %v3864
    %v3866 = vpop.f32.mrf.mxu0
    %v3867 = vadd.f32 %v3826, %v3866
    %3868 = vdwg.mxu0
    %v3869 = vand.u32 %v3496, 4294901760
    %3870 = vmatpush.msra.mxu0 %v3869
    %v3871 = vand.u32 %v3495, 4294901760
    %3872 = vmatpush.msra.mxu0 %v3871
    %v3873 = vand.u32 %v3494, 4294901760
    %3874 = vmatpush.msra.mxu0 %v3873
    %v3875 = vand.u32 %v3493, 4294901760
    %3876 = vmatpush.msra.mxu0 %v3875
    %v3877 = vand.u32 %v3492, 4294901760
    %3878 = vmatpush.msra.mxu0 %v3877
    %v3879 = vand.u32 %v3491, 4294901760
    %3880 = vmatpush.msra.mxu0 %v3879
    %v3881 = vand.u32 %v3490, 4294901760
    %3882 = vmatpush.msra.mxu0 %v3881
    %v3883 = vand.u32 %v3489, 4294901760
    %3884 = vmatpush.msra.mxu0 %v3883
    %v3885 = vand.u32 %v3488, 4294901760
    %3886 = vmatpush.msra.mxu0 %v3885
    %v3887 = vand.u32 %v3487, 4294901760
    %3888 = vmatpush.msra.mxu0 %v3887
    %v3889 = vand.u32 %v3486, 4294901760
    %3890 = vmatpush.msra.mxu0 %v3889
    %v3891 = vand.u32 %v3485, 4294901760
    %3892 = vmatpush.msra.mxu0 %v3891
    %v3893 = vand.u32 %v3484, 4294901760
    %3894 = vmatpush.msra.mxu0 %v3893
    %v3895 = vand.u32 %v3483, 4294901760
    %3896 = vmatpush.msra.mxu0 %v3895
    %v3897 = vand.u32 %v3482, 4294901760
    %3898 = vmatpush.msra.mxu0 %v3897
    %v3899 = vand.u32 %v3481, 4294901760
    %3900 = vmatpush.msra.mxu0 %v3899
    %v3901 = vand.u32 %v3462, 4294901760
    %v3902 = vsub.f32 %v3462, %v3901
    %v3903 = vand.u32 %v3902, 4294901760
    %v3904 = vsub.f32 %v3902, %v3903
    %v3905 = vand.u32 %v3904, 4294901760
    %3906 = vmatmul.f32.gmra.mxu0 %v3905
    %v3907 = vpop.f32.mrf.mxu0
    %v3908 = vadd.f32 %v3863, %v3907
    %v3909 = vand.u32 %v3464, 4294901760
    %v3910 = vsub.f32 %v3464, %v3909
    %v3911 = vand.u32 %v3910, 4294901760
    %v3912 = vsub.f32 %v3910, %v3911
    %v3913 = vand.u32 %v3912, 4294901760
    %3914 = vmatmul.f32.gmra.mxu0 %v3913
    %v3915 = vpop.f32.mrf.mxu0
    %v3916 = vadd.f32 %v3867, %v3915
    %3917 = vdwg.mxu0
    %v3918 = vand.u32 %v3496, 4294901760
    %v3919 = vsub.f32 %v3496, %v3918
    %v3920 = vand.u32 %v3919, 4294901760
    %v3921 = vsub.f32 %v3919, %v3920
    %v3922 = vand.u32 %v3921, 4294901760
    %3923 = vmatpush.msra.mxu0 %v3922
    %v3924 = vand.u32 %v3495, 4294901760
    %v3925 = vsub.f32 %v3495, %v3924
    %v3926 = vand.u32 %v3925, 4294901760
    %v3927 = vsub.f32 %v3925, %v3926
    %v3928 = vand.u32 %v3927, 4294901760
    %3929 = vmatpush.msra.mxu0 %v3928
    %v3930 = vand.u32 %v3494, 4294901760
    %v3931 = vsub.f32 %v3494, %v3930
    %v3932 = vand.u32 %v3931, 4294901760
    %v3933 = vsub.f32 %v3931, %v3932
    %v3934 = vand.u32 %v3933, 4294901760
    %3935 = vmatpush.msra.mxu0 %v3934
    %v3936 = vand.u32 %v3493, 4294901760
    %v3937 = vsub.f32 %v3493, %v3936
    %v3938 = vand.u32 %v3937, 4294901760
    %v3939 = vsub.f32 %v3937, %v3938
    %v3940 = vand.u32 %v3939, 4294901760
    %3941 = vmatpush.msra.mxu0 %v3940
    %v3942 = vand.u32 %v3492, 4294901760
    %v3943 = vsub.f32 %v3492, %v3942
    %v3944 = vand.u32 %v3943, 4294901760
    %v3945 = vsub.f32 %v3943, %v3944
    %v3946 = vand.u32 %v3945, 4294901760
    %3947 = vmatpush.msra.mxu0 %v3946
    %v3948 = vand.u32 %v3491, 4294901760
    %v3949 = vsub.f32 %v3491, %v3948
    %v3950 = vand.u32 %v3949, 4294901760
    %v3951 = vsub.f32 %v3949, %v3950
    %v3952 = vand.u32 %v3951, 4294901760
    %3953 = vmatpush.msra.mxu0 %v3952
    %v3954 = vand.u32 %v3490, 4294901760
    %v3955 = vsub.f32 %v3490, %v3954
    %v3956 = vand.u32 %v3955, 4294901760
    %v3957 = vsub.f32 %v3955, %v3956
    %v3958 = vand.u32 %v3957, 4294901760
    %3959 = vmatpush.msra.mxu0 %v3958
    %v3960 = vand.u32 %v3489, 4294901760
    %v3961 = vsub.f32 %v3489, %v3960
    %v3962 = vand.u32 %v3961, 4294901760
    %v3963 = vsub.f32 %v3961, %v3962
    %v3964 = vand.u32 %v3963, 4294901760
    %3965 = vmatpush.msra.mxu0 %v3964
    %v3966 = vand.u32 %v3488, 4294901760
    %v3967 = vsub.f32 %v3488, %v3966
    %v3968 = vand.u32 %v3967, 4294901760
    %v3969 = vsub.f32 %v3967, %v3968
    %v3970 = vand.u32 %v3969, 4294901760
    %3971 = vmatpush.msra.mxu0 %v3970
    %v3972 = vand.u32 %v3487, 4294901760
    %v3973 = vsub.f32 %v3487, %v3972
    %v3974 = vand.u32 %v3973, 4294901760
    %v3975 = vsub.f32 %v3973, %v3974
    %v3976 = vand.u32 %v3975, 4294901760
    %3977 = vmatpush.msra.mxu0 %v3976
    %v3978 = vand.u32 %v3486, 4294901760
    %v3979 = vsub.f32 %v3486, %v3978
    %v3980 = vand.u32 %v3979, 4294901760
    %v3981 = vsub.f32 %v3979, %v3980
    %v3982 = vand.u32 %v3981, 4294901760
    %3983 = vmatpush.msra.mxu0 %v3982
    %v3984 = vand.u32 %v3485, 4294901760
    %v3985 = vsub.f32 %v3485, %v3984
    %v3986 = vand.u32 %v3985, 4294901760
    %v3987 = vsub.f32 %v3985, %v3986
    %v3988 = vand.u32 %v3987, 4294901760
    %3989 = vmatpush.msra.mxu0 %v3988
    %v3990 = vand.u32 %v3484, 4294901760
    %v3991 = vsub.f32 %v3484, %v3990
    %v3992 = vand.u32 %v3991, 4294901760
    %v3993 = vsub.f32 %v3991, %v3992
    %v3994 = vand.u32 %v3993, 4294901760
    %3995 = vmatpush.msra.mxu0 %v3994
    %v3996 = vand.u32 %v3483, 4294901760
    %v3997 = vsub.f32 %v3483, %v3996
    %v3998 = vand.u32 %v3997, 4294901760
    %v3999 = vsub.f32 %v3997, %v3998
    %v4000 = vand.u32 %v3999, 4294901760
    %4001 = vmatpush.msra.mxu0 %v4000
    %v4002 = vand.u32 %v3482, 4294901760
    %v4003 = vsub.f32 %v3482, %v4002
    %v4004 = vand.u32 %v4003, 4294901760
    %v4005 = vsub.f32 %v4003, %v4004
    %v4006 = vand.u32 %v4005, 4294901760
    %4007 = vmatpush.msra.mxu0 %v4006
    %v4008 = vand.u32 %v3481, 4294901760
    %v4009 = vsub.f32 %v3481, %v4008
    %v4010 = vand.u32 %v4009, 4294901760
    %v4011 = vsub.f32 %v4009, %v4010
    %v4012 = vand.u32 %v4011, 4294901760
    %4013 = vmatpush.msra.mxu0 %v4012
    %v4014 = vand.u32 %v3462, 4294901760
    %4015 = vmatmul.f32.gmra.mxu0 %v4014
    %v4016 = vpop.f32.mrf.mxu0
    %v4017 = vadd.f32 %v3908, %v4016
    %v4018 = vand.u32 %v3464, 4294901760
    %4019 = vmatmul.f32.gmra.mxu0 %v4018
    %v4020 = vpop.f32.mrf.mxu0
    %v4021 = vadd.f32 %v3916, %v4020
    %4022 = vdwg.mxu0
    %v4023 = vand.u32 %v3496, 4294901760
    %v4024 = vsub.f32 %v3496, %v4023
    %4025 = vmatpush.msra.mxu0 %v4024
    %v4026 = vand.u32 %v3495, 4294901760
    %v4027 = vsub.f32 %v3495, %v4026
    %4028 = vmatpush.msra.mxu0 %v4027
    %v4029 = vand.u32 %v3494, 4294901760
    %v4030 = vsub.f32 %v3494, %v4029
    %4031 = vmatpush.msra.mxu0 %v4030
    %v4032 = vand.u32 %v3493, 4294901760
    %v4033 = vsub.f32 %v3493, %v4032
    %4034 = vmatpush.msra.mxu0 %v4033
    %v4035 = vand.u32 %v3492, 4294901760
    %v4036 = vsub.f32 %v3492, %v4035
    %4037 = vmatpush.msra.mxu0 %v4036
    %v4038 = vand.u32 %v3491, 4294901760
    %v4039 = vsub.f32 %v3491, %v4038
    %4040 = vmatpush.msra.mxu0 %v4039
    %v4041 = vand.u32 %v3490, 4294901760
    %v4042 = vsub.f32 %v3490, %v4041
    %4043 = vmatpush.msra.mxu0 %v4042
    %v4044 = vand.u32 %v3489, 4294901760
    %v4045 = vsub.f32 %v3489, %v4044
    %4046 = vmatpush.msra.mxu0 %v4045
    %v4047 = vand.u32 %v3488, 4294901760
    %v4048 = vsub.f32 %v3488, %v4047
    %4049 = vmatpush.msra.mxu0 %v4048
    %v4050 = vand.u32 %v3487, 4294901760
    %v4051 = vsub.f32 %v3487, %v4050
    %4052 = vmatpush.msra.mxu0 %v4051
    %v4053 = vand.u32 %v3486, 4294901760
    %v4054 = vsub.f32 %v3486, %v4053
    %4055 = vmatpush.msra.mxu0 %v4054
    %v4056 = vand.u32 %v3485, 4294901760
    %v4057 = vsub.f32 %v3485, %v4056
    %4058 = vmatpush.msra.mxu0 %v4057
    %v4059 = vand.u32 %v3484, 4294901760
    %v4060 = vsub.f32 %v3484, %v4059
    %4061 = vmatpush.msra.mxu0 %v4060
    %v4062 = vand.u32 %v3483, 4294901760
    %v4063 = vsub.f32 %v3483, %v4062
    %4064 = vmatpush.msra.mxu0 %v4063
    %v4065 = vand.u32 %v3482, 4294901760
    %v4066 = vsub.f32 %v3482, %v4065
    %4067 = vmatpush.msra.mxu0 %v4066
    %v4068 = vand.u32 %v3481, 4294901760
    %v4069 = vsub.f32 %v3481, %v4068
    %4070 = vmatpush.msra.mxu0 %v4069
    %v4071 = vand.u32 %v3462, 4294901760
    %v4072 = vsub.f32 %v3462, %v4071
    %4073 = vmatmul.f32.gmra.mxu0 %v4072
    %v4074 = vpop.f32.mrf.mxu0
    %v4075 = vadd.f32 %v4017, %v4074
    %v4076 = vand.u32 %v3464, 4294901760
    %v4077 = vsub.f32 %v3464, %v4076
    %4078 = vmatmul.f32.gmra.mxu0 %v4077
    %v4079 = vpop.f32.mrf.mxu0
    %v4080 = vadd.f32 %v4021, %v4079
    %4081 = vdwg.mxu0
    %v4082 = vand.u32 %v3496, 4294901760
    %4083 = vmatpush.msra.mxu0 %v4082
    %v4084 = vand.u32 %v3495, 4294901760
    %4085 = vmatpush.msra.mxu0 %v4084
    %v4086 = vand.u32 %v3494, 4294901760
    %4087 = vmatpush.msra.mxu0 %v4086
    %v4088 = vand.u32 %v3493, 4294901760
    %4089 = vmatpush.msra.mxu0 %v4088
    %v4090 = vand.u32 %v3492, 4294901760
    %4091 = vmatpush.msra.mxu0 %v4090
    %v4092 = vand.u32 %v3491, 4294901760
    %4093 = vmatpush.msra.mxu0 %v4092
    %v4094 = vand.u32 %v3490, 4294901760
    %4095 = vmatpush.msra.mxu0 %v4094
    %v4096 = vand.u32 %v3489, 4294901760
    %4097 = vmatpush.msra.mxu0 %v4096
    %v4098 = vand.u32 %v3488, 4294901760
    %4099 = vmatpush.msra.mxu0 %v4098
    %v4100 = vand.u32 %v3487, 4294901760
    %4101 = vmatpush.msra.mxu0 %v4100
    %v4102 = vand.u32 %v3486, 4294901760
    %4103 = vmatpush.msra.mxu0 %v4102
    %v4104 = vand.u32 %v3485, 4294901760
    %4105 = vmatpush.msra.mxu0 %v4104
    %v4106 = vand.u32 %v3484, 4294901760
    %4107 = vmatpush.msra.mxu0 %v4106
    %v4108 = vand.u32 %v3483, 4294901760
    %4109 = vmatpush.msra.mxu0 %v4108
    %v4110 = vand.u32 %v3482, 4294901760
    %4111 = vmatpush.msra.mxu0 %v4110
    %v4112 = vand.u32 %v3481, 4294901760
    %4113 = vmatpush.msra.mxu0 %v4112
    %v4114 = vand.u32 %v3462, 4294901760
    %v4115 = vsub.f32 %v3462, %v4114
    %v4116 = vand.u32 %v4115, 4294901760
    %4117 = vmatmul.f32.gmra.mxu0 %v4116
    %v4118 = vpop.f32.mrf.mxu0
    %v4119 = vadd.f32 %v4075, %v4118
    %v4120 = vand.u32 %v3464, 4294901760
    %v4121 = vsub.f32 %v3464, %v4120
    %v4122 = vand.u32 %v4121, 4294901760
    %4123 = vmatmul.f32.gmra.mxu0 %v4122
    %v4124 = vpop.f32.mrf.mxu0
    %v4125 = vadd.f32 %v4080, %v4124
    %4126 = vdwg.mxu0
    %v4127 = vand.u32 %v3496, 4294901760
    %v4128 = vsub.f32 %v3496, %v4127
    %v4129 = vand.u32 %v4128, 4294901760
    %4130 = vmatpush.msra.mxu0 %v4129
    %v4131 = vand.u32 %v3495, 4294901760
    %v4132 = vsub.f32 %v3495, %v4131
    %v4133 = vand.u32 %v4132, 4294901760
    %4134 = vmatpush.msra.mxu0 %v4133
    %v4135 = vand.u32 %v3494, 4294901760
    %v4136 = vsub.f32 %v3494, %v4135
    %v4137 = vand.u32 %v4136, 4294901760
    %4138 = vmatpush.msra.mxu0 %v4137
    %v4139 = vand.u32 %v3493, 4294901760
    %v4140 = vsub.f32 %v3493, %v4139
    %v4141 = vand.u32 %v4140, 4294901760
    %4142 = vmatpush.msra.mxu0 %v4141
    %v4143 = vand.u32 %v3492, 4294901760
    %v4144 = vsub.f32 %v3492, %v4143
    %v4145 = vand.u32 %v4144, 4294901760
    %4146 = vmatpush.msra.mxu0 %v4145
    %v4147 = vand.u32 %v3491, 4294901760
    %v4148 = vsub.f32 %v3491, %v4147
    %v4149 = vand.u32 %v4148, 4294901760
    %4150 = vmatpush.msra.mxu0 %v4149
    %v4151 = vand.u32 %v3490, 4294901760
    %v4152 = vsub.f32 %v3490, %v4151
    %v4153 = vand.u32 %v4152, 4294901760
    %4154 = vmatpush.msra.mxu0 %v4153
    %v4155 = vand.u32 %v3489, 4294901760
    %v4156 = vsub.f32 %v3489, %v4155
    %v4157 = vand.u32 %v4156, 4294901760
    %4158 = vmatpush.msra.mxu0 %v4157
    %v4159 = vand.u32 %v3488, 4294901760
    %v4160 = vsub.f32 %v3488, %v4159
    %v4161 = vand.u32 %v4160, 4294901760
    %4162 = vmatpush.msra.mxu0 %v4161
    %v4163 = vand.u32 %v3487, 4294901760
    %v4164 = vsub.f32 %v3487, %v4163
    %v4165 = vand.u32 %v4164, 4294901760
    %4166 = vmatpush.msra.mxu0 %v4165
    %v4167 = vand.u32 %v3486, 4294901760
    %v4168 = vsub.f32 %v3486, %v4167
    %v4169 = vand.u32 %v4168, 4294901760
    %4170 = vmatpush.msra.mxu0 %v4169
    %v4171 = vand.u32 %v3485, 4294901760
    %v4172 = vsub.f32 %v3485, %v4171
    %v4173 = vand.u32 %v4172, 4294901760
    %4174 = vmatpush.msra.mxu0 %v4173
    %v4175 = vand.u32 %v3484, 4294901760
    %v4176 = vsub.f32 %v3484, %v4175
    %v4177 = vand.u32 %v4176, 4294901760
    %4178 = vmatpush.msra.mxu0 %v4177
    %v4179 = vand.u32 %v3483, 4294901760
    %v4180 = vsub.f32 %v3483, %v4179
    %v4181 = vand.u32 %v4180, 4294901760
    %4182 = vmatpush.msra.mxu0 %v4181
    %v4183 = vand.u32 %v3482, 4294901760
    %v4184 = vsub.f32 %v3482, %v4183
    %v4185 = vand.u32 %v4184, 4294901760
    %4186 = vmatpush.msra.mxu0 %v4185
    %v4187 = vand.u32 %v3481, 4294901760
    %v4188 = vsub.f32 %v3481, %v4187
    %v4189 = vand.u32 %v4188, 4294901760
    %4190 = vmatpush.msra.mxu0 %v4189
    %v4191 = vand.u32 %v3462, 4294901760
    %4192 = vmatmul.f32.gmra.mxu0 %v4191
    %v4193 = vpop.f32.mrf.mxu0
    %v4194 = vadd.f32 %v4119, %v4193
    %v4195 = vand.u32 %v3464, 4294901760
    %4196 = vmatmul.f32.gmra.mxu0 %v4195
    %v4197 = vpop.f32.mrf.mxu0
    %v4198 = vadd.f32 %v4125, %v4197
    %4199 = vdwg.mxu0
    %v4200 = vand.u32 %v3496, 4294901760
    %4201 = vmatpush.msra.mxu0 %v4200
    %v4202 = vand.u32 %v3495, 4294901760
    %4203 = vmatpush.msra.mxu0 %v4202
    %v4204 = vand.u32 %v3494, 4294901760
    %4205 = vmatpush.msra.mxu0 %v4204
    %v4206 = vand.u32 %v3493, 4294901760
    %4207 = vmatpush.msra.mxu0 %v4206
    %v4208 = vand.u32 %v3492, 4294901760
    %4209 = vmatpush.msra.mxu0 %v4208
    %v4210 = vand.u32 %v3491, 4294901760
    %4211 = vmatpush.msra.mxu0 %v4210
    %v4212 = vand.u32 %v3490, 4294901760
    %4213 = vmatpush.msra.mxu0 %v4212
    %v4214 = vand.u32 %v3489, 4294901760
    %4215 = vmatpush.msra.mxu0 %v4214
    %v4216 = vand.u32 %v3488, 4294901760
    %4217 = vmatpush.msra.mxu0 %v4216
    %v4218 = vand.u32 %v3487, 4294901760
    %4219 = vmatpush.msra.mxu0 %v4218
    %v4220 = vand.u32 %v3486, 4294901760
    %4221 = vmatpush.msra.mxu0 %v4220
    %v4222 = vand.u32 %v3485, 4294901760
    %4223 = vmatpush.msra.mxu0 %v4222
    %v4224 = vand.u32 %v3484, 4294901760
    %4225 = vmatpush.msra.mxu0 %v4224
    %v4226 = vand.u32 %v3483, 4294901760
    %4227 = vmatpush.msra.mxu0 %v4226
    %v4228 = vand.u32 %v3482, 4294901760
    %4229 = vmatpush.msra.mxu0 %v4228
    %v4230 = vand.u32 %v3481, 4294901760
    %4231 = vmatpush.msra.mxu0 %v4230
    %v4232 = vand.u32 %v3462, 4294901760
    %4233 = vmatmul.f32.gmra.mxu0 %v4232
    %v4234 = vpop.f32.mrf.mxu0
    %v4235 = vadd.f32 %v4194, %v4234
    %v4236 = vand.u32 %v3464, 4294901760
    %4237 = vmatmul.f32.gmra.mxu0 %v4236
    %v4238 = vpop.f32.mrf.mxu0
    %v4239 = vadd.f32 %v4198, %v4238
    %4240 = vdwg.mxu0
    %v4241 = vadd.f32 %v30, %v4235
    %v4242 = vadd.f32 %v31, %v4239
    %v4243 = vmul.f32 %v4241, %v4241
    %v4244 = vmul.f32 %v4242, %v4242
    %v4245 = vsel %vm34, %v4243, 0.0
    %4246 = vadd.xlane.f32.xlu0 %v4245
    %v4247 = vpop.xlane.xlu0 %4246
    %v4248 = vsel %vm34, %v4244, 0.0
    %4249 = vadd.xlane.f32.xlu0 %v4248
    %v4250 = vpop.xlane.xlu0 %4249
    %v4251 = vmul.f32 %v4247, %v47
    %v4252 = vmul.f32 %v4250, %v47
    %v4253 = vadd.f32 %v4251, 1e-06
    %v4254 = vadd.f32 %v4252, 1e-06
    %v4255 = vrsqrt.pop %v4253
    %v4256 = vmul.f32 %v4255, %v4253
    %v4257 = vmul.f32 %v4256, %v4255
    %v4258 = vmul.f32 0.5, %v4257
    %v4259 = vsub.f32 1.5, %v4258
    %v4260 = vmul.f32 %v4255, %v4259
    %vm4261 = vweird.f32 %v4253
    %vm4262 = vweird.f32 %v4255
    %vm4263 = vmor %vm4261, %vm4262
    %v4264 = vsel %vm4263, %v4255, %v4260
    %v4265 = vrsqrt.pop %v4254
    %v4266 = vmul.f32 %v4265, %v4254
    %v4267 = vmul.f32 %v4266, %v4265
    %v4268 = vmul.f32 0.5, %v4267
    %v4269 = vsub.f32 1.5, %v4268
    %v4270 = vmul.f32 %v4265, %v4269
    %vm4271 = vweird.f32 %v4254
    %vm4272 = vweird.f32 %v4265
    %vm4273 = vmor %vm4271, %vm4272
    %v4274 = vsel %vm4273, %v4265, %v4270
    %v4275 = vmul.f32 %v4241, %v4264
    %v4276 = vmul.f32 %v4242, %v4274
    %v4277 = vld [vmem:[%s6] sm:$0xff]
    %v4278 = vld [vmem:[%s6 + $0x8] sm:$0xff]
    %v4279 = vld [vmem:[%s6 + $0x10] sm:$0xff]
    %v4280 = vld [vmem:[%s6 + $0x18] sm:$0xff]
    %v4282 = vsel %vm34, %v4275, 0
    %v4285 = vsel %vm34, %v4276, 0
    %4287 = vmatpush.msra.mxu0 0.0
    %4288 = vmatpush.msra.mxu0 0.0
    %4289 = vmatpush.msra.mxu0 0.0
    %4290 = vmatpush.msra.mxu0 0.0
    %4291 = vmatpush.msra.mxu0 0.0
    %4292 = vmatpush.msra.mxu0 0.0
    %4293 = vmatpush.msra.mxu0 0.0
    %4294 = vmatpush.msra.mxu0 0.0
    %4295 = vmatpush.msra.mxu0 0.0
    %4296 = vmatpush.msra.mxu0 0.0
    %4297 = vmatpush.msra.mxu0 0.0
    %4298 = vmatpush.msra.mxu0 0.0
    %v4299 = vand.u32 %v4280, 4294901760
    %4300 = vmatpush.msra.mxu0 %v4299
    %v4301 = vand.u32 %v4279, 4294901760
    %4302 = vmatpush.msra.mxu0 %v4301
    %v4303 = vand.u32 %v4278, 4294901760
    %4304 = vmatpush.msra.mxu0 %v4303
    %v4305 = vand.u32 %v4277, 4294901760
    %4306 = vmatpush.msra.mxu0 %v4305
    %v4307 = vand.u32 %v4282, 4294901760
    %v4308 = vsub.f32 %v4282, %v4307
    %v4309 = vand.u32 %v4308, 4294901760
    %v4310 = vsub.f32 %v4308, %v4309
    %v4311 = vand.u32 %v4310, 4294901760
    %4312 = vmatmul.f32.gmra.mxu0 %v4311
    %v4313 = vpop.f32.mrf.mxu0
    %v4314 = vadd.f32 0.0, %v4313
    %v4315 = vand.u32 %v4285, 4294901760
    %v4316 = vsub.f32 %v4285, %v4315
    %v4317 = vand.u32 %v4316, 4294901760
    %v4318 = vsub.f32 %v4316, %v4317
    %v4319 = vand.u32 %v4318, 4294901760
    %4320 = vmatmul.f32.gmra.mxu0 %v4319
    %v4321 = vpop.f32.mrf.mxu0
    %v4322 = vadd.f32 0.0, %v4321
    %4323 = vdwg.mxu0
    %4324 = vmatpush.msra.mxu0 0.0
    %4325 = vmatpush.msra.mxu0 0.0
    %4326 = vmatpush.msra.mxu0 0.0
    %4327 = vmatpush.msra.mxu0 0.0
    %4328 = vmatpush.msra.mxu0 0.0
    %4329 = vmatpush.msra.mxu0 0.0
    %4330 = vmatpush.msra.mxu0 0.0
    %4331 = vmatpush.msra.mxu0 0.0
    %4332 = vmatpush.msra.mxu0 0.0
    %4333 = vmatpush.msra.mxu0 0.0
    %4334 = vmatpush.msra.mxu0 0.0
    %4335 = vmatpush.msra.mxu0 0.0
    %v4336 = vand.u32 %v4280, 4294901760
    %v4337 = vsub.f32 %v4280, %v4336
    %v4338 = vand.u32 %v4337, 4294901760
    %v4339 = vsub.f32 %v4337, %v4338
    %v4340 = vand.u32 %v4339, 4294901760
    %4341 = vmatpush.msra.mxu0 %v4340
    %v4342 = vand.u32 %v4279, 4294901760
    %v4343 = vsub.f32 %v4279, %v4342
    %v4344 = vand.u32 %v4343, 4294901760
    %v4345 = vsub.f32 %v4343, %v4344
    %v4346 = vand.u32 %v4345, 4294901760
    %4347 = vmatpush.msra.mxu0 %v4346
    %v4348 = vand.u32 %v4278, 4294901760
    %v4349 = vsub.f32 %v4278, %v4348
    %v4350 = vand.u32 %v4349, 4294901760
    %v4351 = vsub.f32 %v4349, %v4350
    %v4352 = vand.u32 %v4351, 4294901760
    %4353 = vmatpush.msra.mxu0 %v4352
    %v4354 = vand.u32 %v4277, 4294901760
    %v4355 = vsub.f32 %v4277, %v4354
    %v4356 = vand.u32 %v4355, 4294901760
    %v4357 = vsub.f32 %v4355, %v4356
    %v4358 = vand.u32 %v4357, 4294901760
    %4359 = vmatpush.msra.mxu0 %v4358
    %v4360 = vand.u32 %v4282, 4294901760
    %4361 = vmatmul.f32.gmra.mxu0 %v4360
    %v4362 = vpop.f32.mrf.mxu0
    %v4363 = vadd.f32 %v4314, %v4362
    %v4364 = vand.u32 %v4285, 4294901760
    %4365 = vmatmul.f32.gmra.mxu0 %v4364
    %v4366 = vpop.f32.mrf.mxu0
    %v4367 = vadd.f32 %v4322, %v4366
    %4368 = vdwg.mxu0
    %4369 = vmatpush.msra.mxu0 0.0
    %4370 = vmatpush.msra.mxu0 0.0
    %4371 = vmatpush.msra.mxu0 0.0
    %4372 = vmatpush.msra.mxu0 0.0
    %4373 = vmatpush.msra.mxu0 0.0
    %4374 = vmatpush.msra.mxu0 0.0
    %4375 = vmatpush.msra.mxu0 0.0
    %4376 = vmatpush.msra.mxu0 0.0
    %4377 = vmatpush.msra.mxu0 0.0
    %4378 = vmatpush.msra.mxu0 0.0
    %4379 = vmatpush.msra.mxu0 0.0
    %4380 = vmatpush.msra.mxu0 0.0
    %v4381 = vand.u32 %v4280, 4294901760
    %v4382 = vsub.f32 %v4280, %v4381
    %4383 = vmatpush.msra.mxu0 %v4382
    %v4384 = vand.u32 %v4279, 4294901760
    %v4385 = vsub.f32 %v4279, %v4384
    %4386 = vmatpush.msra.mxu0 %v4385
    %v4387 = vand.u32 %v4278, 4294901760
    %v4388 = vsub.f32 %v4278, %v4387
    %4389 = vmatpush.msra.mxu0 %v4388
    %v4390 = vand.u32 %v4277, 4294901760
    %v4391 = vsub.f32 %v4277, %v4390
    %4392 = vmatpush.msra.mxu0 %v4391
    %v4393 = vand.u32 %v4282, 4294901760
    %v4394 = vsub.f32 %v4282, %v4393
    %4395 = vmatmul.f32.gmra.mxu0 %v4394
    %v4396 = vpop.f32.mrf.mxu0
    %v4397 = vadd.f32 %v4363, %v4396
    %v4398 = vand.u32 %v4285, 4294901760
    %v4399 = vsub.f32 %v4285, %v4398
    %4400 = vmatmul.f32.gmra.mxu0 %v4399
    %v4401 = vpop.f32.mrf.mxu0
    %v4402 = vadd.f32 %v4367, %v4401
    %4403 = vdwg.mxu0
    %4404 = vmatpush.msra.mxu0 0.0
    %4405 = vmatpush.msra.mxu0 0.0
    %4406 = vmatpush.msra.mxu0 0.0
    %4407 = vmatpush.msra.mxu0 0.0
    %4408 = vmatpush.msra.mxu0 0.0
    %4409 = vmatpush.msra.mxu0 0.0
    %4410 = vmatpush.msra.mxu0 0.0
    %4411 = vmatpush.msra.mxu0 0.0
    %4412 = vmatpush.msra.mxu0 0.0
    %4413 = vmatpush.msra.mxu0 0.0
    %4414 = vmatpush.msra.mxu0 0.0
    %4415 = vmatpush.msra.mxu0 0.0
    %v4416 = vand.u32 %v4280, 4294901760
    %4417 = vmatpush.msra.mxu0 %v4416
    %v4418 = vand.u32 %v4279, 4294901760
    %4419 = vmatpush.msra.mxu0 %v4418
    %v4420 = vand.u32 %v4278, 4294901760
    %4421 = vmatpush.msra.mxu0 %v4420
    %v4422 = vand.u32 %v4277, 4294901760
    %4423 = vmatpush.msra.mxu0 %v4422
    %v4424 = vand.u32 %v4282, 4294901760
    %v4425 = vsub.f32 %v4282, %v4424
    %v4426 = vand.u32 %v4425, 4294901760
    %4427 = vmatmul.f32.gmra.mxu0 %v4426
    %v4428 = vpop.f32.mrf.mxu0
    %v4429 = vadd.f32 %v4397, %v4428
    %v4430 = vand.u32 %v4285, 4294901760
    %v4431 = vsub.f32 %v4285, %v4430
    %v4432 = vand.u32 %v4431, 4294901760
    %4433 = vmatmul.f32.gmra.mxu0 %v4432
    %v4434 = vpop.f32.mrf.mxu0
    %v4435 = vadd.f32 %v4402, %v4434
    %4436 = vdwg.mxu0
    %4437 = vmatpush.msra.mxu0 0.0
    %4438 = vmatpush.msra.mxu0 0.0
    %4439 = vmatpush.msra.mxu0 0.0
    %4440 = vmatpush.msra.mxu0 0.0
    %4441 = vmatpush.msra.mxu0 0.0
    %4442 = vmatpush.msra.mxu0 0.0
    %4443 = vmatpush.msra.mxu0 0.0
    %4444 = vmatpush.msra.mxu0 0.0
    %4445 = vmatpush.msra.mxu0 0.0
    %4446 = vmatpush.msra.mxu0 0.0
    %4447 = vmatpush.msra.mxu0 0.0
    %4448 = vmatpush.msra.mxu0 0.0
    %v4449 = vand.u32 %v4280, 4294901760
    %v4450 = vsub.f32 %v4280, %v4449
    %v4451 = vand.u32 %v4450, 4294901760
    %4452 = vmatpush.msra.mxu0 %v4451
    %v4453 = vand.u32 %v4279, 4294901760
    %v4454 = vsub.f32 %v4279, %v4453
    %v4455 = vand.u32 %v4454, 4294901760
    %4456 = vmatpush.msra.mxu0 %v4455
    %v4457 = vand.u32 %v4278, 4294901760
    %v4458 = vsub.f32 %v4278, %v4457
    %v4459 = vand.u32 %v4458, 4294901760
    %4460 = vmatpush.msra.mxu0 %v4459
    %v4461 = vand.u32 %v4277, 4294901760
    %v4462 = vsub.f32 %v4277, %v4461
    %v4463 = vand.u32 %v4462, 4294901760
    %4464 = vmatpush.msra.mxu0 %v4463
    %v4465 = vand.u32 %v4282, 4294901760
    %4466 = vmatmul.f32.gmra.mxu0 %v4465
    %v4467 = vpop.f32.mrf.mxu0
    %v4468 = vadd.f32 %v4429, %v4467
    %v4469 = vand.u32 %v4285, 4294901760
    %4470 = vmatmul.f32.gmra.mxu0 %v4469
    %v4471 = vpop.f32.mrf.mxu0
    %v4472 = vadd.f32 %v4435, %v4471
    %4473 = vdwg.mxu0
    %4474 = vmatpush.msra.mxu0 0.0
    %4475 = vmatpush.msra.mxu0 0.0
    %4476 = vmatpush.msra.mxu0 0.0
    %4477 = vmatpush.msra.mxu0 0.0
    %4478 = vmatpush.msra.mxu0 0.0
    %4479 = vmatpush.msra.mxu0 0.0
    %4480 = vmatpush.msra.mxu0 0.0
    %4481 = vmatpush.msra.mxu0 0.0
    %4482 = vmatpush.msra.mxu0 0.0
    %4483 = vmatpush.msra.mxu0 0.0
    %4484 = vmatpush.msra.mxu0 0.0
    %4485 = vmatpush.msra.mxu0 0.0
    %v4486 = vand.u32 %v4280, 4294901760
    %4487 = vmatpush.msra.mxu0 %v4486
    %v4488 = vand.u32 %v4279, 4294901760
    %4489 = vmatpush.msra.mxu0 %v4488
    %v4490 = vand.u32 %v4278, 4294901760
    %4491 = vmatpush.msra.mxu0 %v4490
    %v4492 = vand.u32 %v4277, 4294901760
    %4493 = vmatpush.msra.mxu0 %v4492
    %v4494 = vand.u32 %v4282, 4294901760
    %4495 = vmatmul.f32.gmra.mxu0 %v4494
    %v4496 = vpop.f32.mrf.mxu0
    %v4497 = vadd.f32 %v4468, %v4496
    %v4498 = vand.u32 %v4285, 4294901760
    %4499 = vmatmul.f32.gmra.mxu0 %v4498
    %v4500 = vpop.f32.mrf.mxu0
    %v4501 = vadd.f32 %v4472, %v4500
    %4502 = vdwg.mxu0
    %v4503 = vxor.u32 %v4497, 2147483648
    %v4504 = vxor.u32 %v4501, 2147483648
    %v4505 = vmul.f32 %v4503, 1.442695
    %v4506 = vpow.pop %v4505
    %v4507 = vmul.f32 %v4504, 1.442695
    %v4508 = vpow.pop %v4507
    %v4509 = vadd.f32 %v4506, 1.0
    %v4510 = vadd.f32 %v4508, 1.0
    %v4511 = vrcp.pop %v4509
    %v4512 = vmul.f32 %v4509, %v4511
    %v4513 = vsub.f32 1.0, %v4512
    %v4514 = vmul.f32 %v4511, %v4513
    %v4515 = vadd.f32 %v4511, %v4514
    %vm4516 = vweird.f32 %v4509
    %vm4517 = vweird.f32 %v4511
    %vm4518 = vmor %vm4516, %vm4517
    %v4519 = vsel %vm4518, %v4511, %v4515
    %v4520 = vand.u32 2147483647, %v4509
    %vm4521 = vcmp.eq.f32.partialorder %v4520, 8.507059e+37
    %v4522 = vand.u32 %v4509, 2147483648
    %v4523 = vor.u32 1.1754944e-38, %v4522
    %v4524 = vsel %vm4521, %v4523, %v4519
    %v4525 = vmul.f32 1.0, %v4524
    %v4526 = vrcp.pop %v4510
    %v4527 = vmul.f32 %v4510, %v4526
    %v4528 = vsub.f32 1.0, %v4527
    %v4529 = vmul.f32 %v4526, %v4528
    %v4530 = vadd.f32 %v4526, %v4529
    %vm4531 = vweird.f32 %v4510
    %vm4532 = vweird.f32 %v4526
    %vm4533 = vmor %vm4531, %vm4532
    %v4534 = vsel %vm4533, %v4526, %v4530
    %v4535 = vand.u32 2147483647, %v4510
    %vm4536 = vcmp.eq.f32.partialorder %v4535, 8.507059e+37
    %v4537 = vand.u32 %v4510, 2147483648
    %v4538 = vor.u32 1.1754944e-38, %v4537
    %v4539 = vsel %vm4536, %v4538, %v4534
    %v4540 = vmul.f32 1.0, %v4539
    %v4541 = vmul.f32 %v4497, %v4525
    %v4542 = vmul.f32 %v4501, %v4540
    %4545 = vrot.lane.b32.xlu0 %v4497, 64
    %v4546 = vpop.permute.xlu0 %4545
    %4547 = vrot.lane.b32.xlu0 %v4501, 64
    %v4548 = vpop.permute.xlu0 %4547
    %v4551 = vmul.f32 %v4541, %v4546
    %v4552 = vmul.f32 %v4542, %v4548
    %v4553 = vld [vmem:[%s7] sm:$0xff]
    %v4554 = vld [vmem:[%s7 + $0x8] sm:$0xff]
    %v4555 = vld [vmem:[%s7 + $0x10] sm:$0xff]
    %v4556 = vld [vmem:[%s7 + $0x18] sm:$0xff]
    %v4557 = vld [vmem:[%s7 + $0x20] sm:$0xff]
    %v4558 = vld [vmem:[%s7 + $0x28] sm:$0xff]
    %v4559 = vld [vmem:[%s7 + $0x30] sm:$0xff]
    %v4560 = vld [vmem:[%s7 + $0x38] sm:$0xff]
    %v4562 = vsel %vm1648, %v4551, 0
    %v4565 = vsel %vm1648, %v4552, 0
    %4567 = vmatpush.msra.mxu0 0.0
    %4568 = vmatpush.msra.mxu0 0.0
    %4569 = vmatpush.msra.mxu0 0.0
    %4570 = vmatpush.msra.mxu0 0.0
    %4571 = vmatpush.msra.mxu0 0.0
    %4572 = vmatpush.msra.mxu0 0.0
    %4573 = vmatpush.msra.mxu0 0.0
    %4574 = vmatpush.msra.mxu0 0.0
    %v4575 = vand.u32 %v4560, 4294901760
    %4576 = vmatpush.msra.mxu0 %v4575
    %v4577 = vand.u32 %v4559, 4294901760
    %4578 = vmatpush.msra.mxu0 %v4577
    %v4579 = vand.u32 %v4558, 4294901760
    %4580 = vmatpush.msra.mxu0 %v4579
    %v4581 = vand.u32 %v4557, 4294901760
    %4582 = vmatpush.msra.mxu0 %v4581
    %v4583 = vand.u32 %v4556, 4294901760
    %4584 = vmatpush.msra.mxu0 %v4583
    %v4585 = vand.u32 %v4555, 4294901760
    %4586 = vmatpush.msra.mxu0 %v4585
    %v4587 = vand.u32 %v4554, 4294901760
    %4588 = vmatpush.msra.mxu0 %v4587
    %v4589 = vand.u32 %v4553, 4294901760
    %4590 = vmatpush.msra.mxu0 %v4589
    %v4591 = vand.u32 %v4562, 4294901760
    %v4592 = vsub.f32 %v4562, %v4591
    %v4593 = vand.u32 %v4592, 4294901760
    %v4594 = vsub.f32 %v4592, %v4593
    %v4595 = vand.u32 %v4594, 4294901760
    %4596 = vmatmul.f32.gmra.mxu0 %v4595
    %v4597 = vpop.f32.mrf.mxu0
    %v4598 = vadd.f32 0.0, %v4597
    %v4599 = vand.u32 %v4565, 4294901760
    %v4600 = vsub.f32 %v4565, %v4599
    %v4601 = vand.u32 %v4600, 4294901760
    %v4602 = vsub.f32 %v4600, %v4601
    %v4603 = vand.u32 %v4602, 4294901760
    %4604 = vmatmul.f32.gmra.mxu0 %v4603
    %v4605 = vpop.f32.mrf.mxu0
    %v4606 = vadd.f32 0.0, %v4605
    %4607 = vdwg.mxu0
    %4608 = vmatpush.msra.mxu0 0.0
    %4609 = vmatpush.msra.mxu0 0.0
    %4610 = vmatpush.msra.mxu0 0.0
    %4611 = vmatpush.msra.mxu0 0.0
    %4612 = vmatpush.msra.mxu0 0.0
    %4613 = vmatpush.msra.mxu0 0.0
    %4614 = vmatpush.msra.mxu0 0.0
    %4615 = vmatpush.msra.mxu0 0.0
    %v4616 = vand.u32 %v4560, 4294901760
    %v4617 = vsub.f32 %v4560, %v4616
    %v4618 = vand.u32 %v4617, 4294901760
    %v4619 = vsub.f32 %v4617, %v4618
    %v4620 = vand.u32 %v4619, 4294901760
    %4621 = vmatpush.msra.mxu0 %v4620
    %v4622 = vand.u32 %v4559, 4294901760
    %v4623 = vsub.f32 %v4559, %v4622
    %v4624 = vand.u32 %v4623, 4294901760
    %v4625 = vsub.f32 %v4623, %v4624
    %v4626 = vand.u32 %v4625, 4294901760
    %4627 = vmatpush.msra.mxu0 %v4626
    %v4628 = vand.u32 %v4558, 4294901760
    %v4629 = vsub.f32 %v4558, %v4628
    %v4630 = vand.u32 %v4629, 4294901760
    %v4631 = vsub.f32 %v4629, %v4630
    %v4632 = vand.u32 %v4631, 4294901760
    %4633 = vmatpush.msra.mxu0 %v4632
    %v4634 = vand.u32 %v4557, 4294901760
    %v4635 = vsub.f32 %v4557, %v4634
    %v4636 = vand.u32 %v4635, 4294901760
    %v4637 = vsub.f32 %v4635, %v4636
    %v4638 = vand.u32 %v4637, 4294901760
    %4639 = vmatpush.msra.mxu0 %v4638
    %v4640 = vand.u32 %v4556, 4294901760
    %v4641 = vsub.f32 %v4556, %v4640
    %v4642 = vand.u32 %v4641, 4294901760
    %v4643 = vsub.f32 %v4641, %v4642
    %v4644 = vand.u32 %v4643, 4294901760
    %4645 = vmatpush.msra.mxu0 %v4644
    %v4646 = vand.u32 %v4555, 4294901760
    %v4647 = vsub.f32 %v4555, %v4646
    %v4648 = vand.u32 %v4647, 4294901760
    %v4649 = vsub.f32 %v4647, %v4648
    %v4650 = vand.u32 %v4649, 4294901760
    %4651 = vmatpush.msra.mxu0 %v4650
    %v4652 = vand.u32 %v4554, 4294901760
    %v4653 = vsub.f32 %v4554, %v4652
    %v4654 = vand.u32 %v4653, 4294901760
    %v4655 = vsub.f32 %v4653, %v4654
    %v4656 = vand.u32 %v4655, 4294901760
    %4657 = vmatpush.msra.mxu0 %v4656
    %v4658 = vand.u32 %v4553, 4294901760
    %v4659 = vsub.f32 %v4553, %v4658
    %v4660 = vand.u32 %v4659, 4294901760
    %v4661 = vsub.f32 %v4659, %v4660
    %v4662 = vand.u32 %v4661, 4294901760
    %4663 = vmatpush.msra.mxu0 %v4662
    %v4664 = vand.u32 %v4562, 4294901760
    %4665 = vmatmul.f32.gmra.mxu0 %v4664
    %v4666 = vpop.f32.mrf.mxu0
    %v4667 = vadd.f32 %v4598, %v4666
    %v4668 = vand.u32 %v4565, 4294901760
    %4669 = vmatmul.f32.gmra.mxu0 %v4668
    %v4670 = vpop.f32.mrf.mxu0
    %v4671 = vadd.f32 %v4606, %v4670
    %4672 = vdwg.mxu0
    %4673 = vmatpush.msra.mxu0 0.0
    %4674 = vmatpush.msra.mxu0 0.0
    %4675 = vmatpush.msra.mxu0 0.0
    %4676 = vmatpush.msra.mxu0 0.0
    %4677 = vmatpush.msra.mxu0 0.0
    %4678 = vmatpush.msra.mxu0 0.0
    %4679 = vmatpush.msra.mxu0 0.0
    %4680 = vmatpush.msra.mxu0 0.0
    %v4681 = vand.u32 %v4560, 4294901760
    %v4682 = vsub.f32 %v4560, %v4681
    %4683 = vmatpush.msra.mxu0 %v4682
    %v4684 = vand.u32 %v4559, 4294901760
    %v4685 = vsub.f32 %v4559, %v4684
    %4686 = vmatpush.msra.mxu0 %v4685
    %v4687 = vand.u32 %v4558, 4294901760
    %v4688 = vsub.f32 %v4558, %v4687
    %4689 = vmatpush.msra.mxu0 %v4688
    %v4690 = vand.u32 %v4557, 4294901760
    %v4691 = vsub.f32 %v4557, %v4690
    %4692 = vmatpush.msra.mxu0 %v4691
    %v4693 = vand.u32 %v4556, 4294901760
    %v4694 = vsub.f32 %v4556, %v4693
    %4695 = vmatpush.msra.mxu0 %v4694
    %v4696 = vand.u32 %v4555, 4294901760
    %v4697 = vsub.f32 %v4555, %v4696
    %4698 = vmatpush.msra.mxu0 %v4697
    %v4699 = vand.u32 %v4554, 4294901760
    %v4700 = vsub.f32 %v4554, %v4699
    %4701 = vmatpush.msra.mxu0 %v4700
    %v4702 = vand.u32 %v4553, 4294901760
    %v4703 = vsub.f32 %v4553, %v4702
    %4704 = vmatpush.msra.mxu0 %v4703
    %v4705 = vand.u32 %v4562, 4294901760
    %v4706 = vsub.f32 %v4562, %v4705
    %4707 = vmatmul.f32.gmra.mxu0 %v4706
    %v4708 = vpop.f32.mrf.mxu0
    %v4709 = vadd.f32 %v4667, %v4708
    %v4710 = vand.u32 %v4565, 4294901760
    %v4711 = vsub.f32 %v4565, %v4710
    %4712 = vmatmul.f32.gmra.mxu0 %v4711
    %v4713 = vpop.f32.mrf.mxu0
    %v4714 = vadd.f32 %v4671, %v4713
    %4715 = vdwg.mxu0
    %4716 = vmatpush.msra.mxu0 0.0
    %4717 = vmatpush.msra.mxu0 0.0
    %4718 = vmatpush.msra.mxu0 0.0
    %4719 = vmatpush.msra.mxu0 0.0
    %4720 = vmatpush.msra.mxu0 0.0
    %4721 = vmatpush.msra.mxu0 0.0
    %4722 = vmatpush.msra.mxu0 0.0
    %4723 = vmatpush.msra.mxu0 0.0
    %v4724 = vand.u32 %v4560, 4294901760
    %4725 = vmatpush.msra.mxu0 %v4724
    %v4726 = vand.u32 %v4559, 4294901760
    %4727 = vmatpush.msra.mxu0 %v4726
    %v4728 = vand.u32 %v4558, 4294901760
    %4729 = vmatpush.msra.mxu0 %v4728
    %v4730 = vand.u32 %v4557, 4294901760
    %4731 = vmatpush.msra.mxu0 %v4730
    %v4732 = vand.u32 %v4556, 4294901760
    %4733 = vmatpush.msra.mxu0 %v4732
    %v4734 = vand.u32 %v4555, 4294901760
    %4735 = vmatpush.msra.mxu0 %v4734
    %v4736 = vand.u32 %v4554, 4294901760
    %4737 = vmatpush.msra.mxu0 %v4736
    %v4738 = vand.u32 %v4553, 4294901760
    %4739 = vmatpush.msra.mxu0 %v4738
    %v4740 = vand.u32 %v4562, 4294901760
    %v4741 = vsub.f32 %v4562, %v4740
    %v4742 = vand.u32 %v4741, 4294901760
    %4743 = vmatmul.f32.gmra.mxu0 %v4742
    %v4744 = vpop.f32.mrf.mxu0
    %v4745 = vadd.f32 %v4709, %v4744
    %v4746 = vand.u32 %v4565, 4294901760
    %v4747 = vsub.f32 %v4565, %v4746
    %v4748 = vand.u32 %v4747, 4294901760
    %4749 = vmatmul.f32.gmra.mxu0 %v4748
    %v4750 = vpop.f32.mrf.mxu0
    %v4751 = vadd.f32 %v4714, %v4750
    %4752 = vdwg.mxu0
    %4753 = vmatpush.msra.mxu0 0.0
    %4754 = vmatpush.msra.mxu0 0.0
    %4755 = vmatpush.msra.mxu0 0.0
    %4756 = vmatpush.msra.mxu0 0.0
    %4757 = vmatpush.msra.mxu0 0.0
    %4758 = vmatpush.msra.mxu0 0.0
    %4759 = vmatpush.msra.mxu0 0.0
    %4760 = vmatpush.msra.mxu0 0.0
    %v4761 = vand.u32 %v4560, 4294901760
    %v4762 = vsub.f32 %v4560, %v4761
    %v4763 = vand.u32 %v4762, 4294901760
    %4764 = vmatpush.msra.mxu0 %v4763
    %v4765 = vand.u32 %v4559, 4294901760
    %v4766 = vsub.f32 %v4559, %v4765
    %v4767 = vand.u32 %v4766, 4294901760
    %4768 = vmatpush.msra.mxu0 %v4767
    %v4769 = vand.u32 %v4558, 4294901760
    %v4770 = vsub.f32 %v4558, %v4769
    %v4771 = vand.u32 %v4770, 4294901760
    %4772 = vmatpush.msra.mxu0 %v4771
    %v4773 = vand.u32 %v4557, 4294901760
    %v4774 = vsub.f32 %v4557, %v4773
    %v4775 = vand.u32 %v4774, 4294901760
    %4776 = vmatpush.msra.mxu0 %v4775
    %v4777 = vand.u32 %v4556, 4294901760
    %v4778 = vsub.f32 %v4556, %v4777
    %v4779 = vand.u32 %v4778, 4294901760
    %4780 = vmatpush.msra.mxu0 %v4779
    %v4781 = vand.u32 %v4555, 4294901760
    %v4782 = vsub.f32 %v4555, %v4781
    %v4783 = vand.u32 %v4782, 4294901760
    %4784 = vmatpush.msra.mxu0 %v4783
    %v4785 = vand.u32 %v4554, 4294901760
    %v4786 = vsub.f32 %v4554, %v4785
    %v4787 = vand.u32 %v4786, 4294901760
    %4788 = vmatpush.msra.mxu0 %v4787
    %v4789 = vand.u32 %v4553, 4294901760
    %v4790 = vsub.f32 %v4553, %v4789
    %v4791 = vand.u32 %v4790, 4294901760
    %4792 = vmatpush.msra.mxu0 %v4791
    %v4793 = vand.u32 %v4562, 4294901760
    %4794 = vmatmul.f32.gmra.mxu0 %v4793
    %v4795 = vpop.f32.mrf.mxu0
    %v4796 = vadd.f32 %v4745, %v4795
    %v4797 = vand.u32 %v4565, 4294901760
    %4798 = vmatmul.f32.gmra.mxu0 %v4797
    %v4799 = vpop.f32.mrf.mxu0
    %v4800 = vadd.f32 %v4751, %v4799
    %4801 = vdwg.mxu0
    %4802 = vmatpush.msra.mxu0 0.0
    %4803 = vmatpush.msra.mxu0 0.0
    %4804 = vmatpush.msra.mxu0 0.0
    %4805 = vmatpush.msra.mxu0 0.0
    %4806 = vmatpush.msra.mxu0 0.0
    %4807 = vmatpush.msra.mxu0 0.0
    %4808 = vmatpush.msra.mxu0 0.0
    %4809 = vmatpush.msra.mxu0 0.0
    %v4810 = vand.u32 %v4560, 4294901760
    %4811 = vmatpush.msra.mxu0 %v4810
    %v4812 = vand.u32 %v4559, 4294901760
    %4813 = vmatpush.msra.mxu0 %v4812
    %v4814 = vand.u32 %v4558, 4294901760
    %4815 = vmatpush.msra.mxu0 %v4814
    %v4816 = vand.u32 %v4557, 4294901760
    %4817 = vmatpush.msra.mxu0 %v4816
    %v4818 = vand.u32 %v4556, 4294901760
    %4819 = vmatpush.msra.mxu0 %v4818
    %v4820 = vand.u32 %v4555, 4294901760
    %4821 = vmatpush.msra.mxu0 %v4820
    %v4822 = vand.u32 %v4554, 4294901760
    %4823 = vmatpush.msra.mxu0 %v4822
    %v4824 = vand.u32 %v4553, 4294901760
    %4825 = vmatpush.msra.mxu0 %v4824
    %v4826 = vand.u32 %v4562, 4294901760
    %4827 = vmatmul.f32.gmra.mxu0 %v4826
    %v4828 = vpop.f32.mrf.mxu0
    %v4829 = vadd.f32 %v4796, %v4828
    %v4830 = vand.u32 %v4565, 4294901760
    %4831 = vmatmul.f32.gmra.mxu0 %v4830
    %v4832 = vpop.f32.mrf.mxu0
    %v4833 = vadd.f32 %v4800, %v4832
    %4834 = vdwg.mxu0
    %v4835 = vadd.f32 %v4241, %v4829
    %v4836 = vadd.f32 %v4242, %v4833
    %4837 = vst.msk [vmem:[#allocation3] sm:$0xff] %vm34, %v4835
    %4838 = vst.msk [vmem:[#allocation3 + $0x8] sm:$0xff] %vm34, %v4836
    // Predicated region
    $region34: #{tpu_custom_call.1} parent=1 // pred_check
      _
    $region35: #{tpu_custom_call.1} parent=1 // pred_check_branch
      %4840 = sbr.rel (0) target = $region37
    $region36: #{tpu_custom_call.1} parent=1 // pred_region
      %4842 = vsyncadd [#allocation4], 0
      %s4843 = sshll.u32 [#allocation3], 4
      %s4844 = int_to_ptr.vmem [resolvable:$true] %s4843
      %s4845 = sshll.u32 %s8, 4
      %s4846 = int_to_ptr.hbm [resolvable:$true] %s4845
      %4851 = dma.vmem_to_hbm [thread:$0]  %s4844, 256, %s4846, [#allocation4], 128, 128, 8
    $region37: #{tpu_custom_call.1} parent=1 // pred_fallthru
      _
    // Predicated region
    $region38: #{tpu_custom_call.1} parent=1 // pred_check
      _
    $region39: #{tpu_custom_call.1} parent=1 // pred_check_branch
      %4853 = sbr.rel (0) target = $region41
    $region40: #{tpu_custom_call.1} parent=1 // pred_region
      %4855 = dma.done [#allocation4], 256
    $region41: #{tpu_custom_call.1} parent=1 // pred_fallthru
      _
    %4856 = vsyncpa [#allocation4], 1

</llo_original>
